<compile_context>
chip_gen: v7x
topology: tpu7x:2x2x1
jax: 0.10.0
libtpu: 0.0.40
codegen_flags: <defaults>
</compile_context>

<pallas_src>
import functools
import math

import jax
import jax.numpy as jnp
import numpy as np
from jax.experimental import pallas as pl
from jax.experimental.pallas import tpu as pltpu


def fpnn_v4_kernel(adj_ref, xes_ref, xed_ref, pool_ref, wpack_ref, wd_ref, bd_ref,
                   out_ref, he_ref, *, cin):
    k = pl.program_id(1)

    # ---- init the (h | deg) accumulator for this destination tile ----
    @pl.when(k == 0)
    def _():
        he_ref[...] = jnp.zeros_like(he_ref)

    # ---- MFConv aggregation: neighbor sum AND in-degree in one bf16 MXU push ----
    # adj block [TM, TK] (bf16) @ xe block [TK, Cin+1] (bf16, = x | 1) -> f32 accumulate.
    he_ref[...] += jnp.dot(adj_ref[...], xes_ref[...],
                           preferred_element_type=jnp.float32)

    # ---- finalize this destination tile ----
    @pl.when(k == pl.num_programs(1) - 1)
    def _():
        he = he_ref[...]                          # [TM, Cin+1] f32, = (h | deg)
        xe = xed_ref[...]                         # [TM, Cin+1] bf16, = (x | 1)
        deg = he[:, cin:cin + 1]                  # [TM, 1], exact small integers
        d = jnp.minimum(deg, 1.0)                 # clamp to max_degree=1 -> {0., 1.}

        # wpack = [wl1_ext, wr0_ext, (wr1-wr0)_ext], each with a zero row for the
        # ones/deg column.  Degree select is multiplicative -> no where, no slicing.
        hl = jnp.dot(he.astype(jnp.bfloat16), wpack_ref[0],
                     preferred_element_type=jnp.float32)          # h @ wl1
        r0 = jnp.dot(xe, wpack_ref[1],
                     preferred_element_type=jnp.float32)          # x @ wr0
        rd = jnp.dot(xe, wpack_ref[2],
                     preferred_element_type=jnp.float32)          # x @ (wr1 - wr0)
        mf = jnp.maximum(hl + r0 + d * rd, 0.0)                   # [TM, Cout], ReLU

        # dense Linear (bf16 weight, f32 bias added in f32)
        z = jnp.dot(mf.astype(jnp.bfloat16), wd_ref[...],
                    preferred_element_type=jnp.float32) + bd_ref[...]   # [TM, D]

        # softmax(dim=-1): exp + approx reciprocal both land on the EUP
        z = z - jnp.max(z, axis=-1, keepdims=True)
        e = jnp.exp(z)
        p = e * pl.reciprocal(jnp.sum(e, axis=-1, keepdims=True), approx=True)

        # global_add_pool restricted to this destination tile: one-hot pool block
        # [G, TM] @ p [TM, D] -> partial pooled sums for this tile.
        out_ref[0] = jnp.dot(pool_ref[...], p.astype(jnp.bfloat16),
                             preferred_element_type=jnp.float32)  # [G, D]


def pack_fpnn_params(params):
    """One-time parameter packing (hoisted out of the per-call path)."""
    cout = params["wl1"].shape[1]
    zrow = jnp.zeros((1, cout), jnp.float32)
    ext = lambda w: jnp.concatenate([w, zrow], axis=0)   # zero row for the ones/deg col
    wpack = jnp.stack([ext(params["wl1"]),
                       ext(params["wr0"]),
                       ext(params["wr1"] - params["wr0"])], axis=0)   # [3, Cin+1, Cout]
    return {
        "wpack": wpack.astype(jnp.bfloat16),
        "wd": params["wd"].astype(jnp.bfloat16),                      # [Cout, D]
        "bd": params["bd"].reshape(1, -1).astype(jnp.float32),        # [1, D]
    }


def build_graph_operands(x, edge_index, batch, num_graphs, n_pad):
    """Per-graph operands, built directly in bf16 (exact for small integer counts).
    Padding nodes have zero features, zero degree and zero pool weight -> no effect."""
    n, cin = x.shape
    src, dst = edge_index[0], edge_index[1]
    # adj[i, j] = number of edges j -> i (PyG 'source_to_target' flow).
    adj = jnp.zeros((n_pad, n_pad), jnp.bfloat16)
    adj = adj.at[dst, src].add(jnp.ones((src.shape[0],), jnp.bfloat16))
    # Node features with a ones column so adj @ xe also yields the in-degree.
    xe = jnp.zeros((n_pad, cin + 1), jnp.bfloat16)
    xe = xe.at[:n, :cin].set(x.astype(jnp.bfloat16))
    xe = xe.at[:n, cin].set(jnp.bfloat16(1.0))
    # One-hot graph-membership matrix [G, N_pad]: global_add_pool as a matmul.
    pool = jnp.zeros((num_graphs, n_pad), jnp.bfloat16)
    pool = pool.at[:, :n].set(
        (batch[None, :] == jnp.arange(num_graphs)[:, None]).astype(jnp.bfloat16))
    return xe, adj, pool


def fpnn_v4_forward(xe, adj, pool, packed, *, tm=256, tk=512):
    n_pad = adj.shape[0]
    ce = xe.shape[1]          # Cin + 1
    cin = ce - 1
    g = pool.shape[0]
    cout, dense = packed["wd"].shape
    assert n_pad % tm == 0 and n_pad % tk == 0, "pad N to a multiple of lcm(tm, tk)"
    num_i, num_k = n_pad // tm, n_pad // tk

    grid_spec = pltpu.PrefetchScalarGridSpec(
        num_scalar_prefetch=0,
        grid=(num_i, num_k),                 # reduction (source) axis last
        in_specs=[
            pl.BlockSpec((tm, tk), lambda i, k: (i, k)),          # adj tile
            pl.BlockSpec((tk, ce), lambda i, k: (k, 0)),          # xe, source rows
            pl.BlockSpec((tm, ce), lambda i, k: (i, 0)),          # xe, destination rows
            pl.BlockSpec((g, tm), lambda i, k: (0, i)),           # pool columns
            pl.BlockSpec((3, ce, cout), lambda i, k: (0, 0, 0)),  # packed conv weights
            pl.BlockSpec((cout, dense), lambda i, k: (0, 0)),     # dense weight
            pl.BlockSpec((1, dense), lambda i, k: (0, 0)),        # dense bias (f32)
        ],
        out_specs=pl.BlockSpec((1, g, dense), lambda i, k: (i, 0, 0)),
        scratch_shapes=[pltpu.VMEM((tm, ce), jnp.float32)],       # (h | deg) accumulator
    )
    partials = pl.pallas_call(
        functools.partial(fpnn_v4_kernel, cin=cin),
        out_shape=jax.ShapeDtypeStruct((num_i, g, dense), jnp.float32),
        grid_spec=grid_spec,
        compiler_params=pltpu.CompilerParams(
            dimension_semantics=("parallel", "arbitrary"),
            vmem_limit_bytes=32 * 1024 * 1024),
    )(adj, xe, xe, pool, packed["wpack"], packed["wd"], packed["bd"])
    # Reduce the per-destination-tile pooled partials outside the kernel (keeps the
    # i axis free of an output accumulator so it can be "parallel").
    return jnp.sum(partials, axis=0)


def fpnn_v4_reference(x, edge_index, batch, params, num_graphs):
    """Pure-JAX f32 reference matching the PyTorch/PyG semantics (uses wl0 too,
    which guards the kernel's dead-code elimination of h @ wl0)."""
    n = x.shape[0]
    src, dst = edge_index[0], edge_index[1]
    h = jnp.zeros_like(x).at[dst].add(x[src])
    deg = jnp.zeros((n,), jnp.int32).at[dst].add(1)
    deg = jnp.minimum(deg, 1)   # clamp to max_degree=1
    out0 = h @ params["wl0"] + x @ params["wr0"]
    out1 = h @ params["wl1"] + x @ params["wr1"]
    mf = jnp.where((deg == 0)[:, None], out0, out1)
    mf = jnp.maximum(mf, 0.0)
    z = mf @ params["wd"] + params["bd"]
    p = jax.nn.softmax(z, axis=-1)
    return jax.ops.segment_sum(p, batch, num_segments=num_graphs)


if __name__ == "__main__":
    # Shapes chosen so the grid is exercised: 8 graphs x 128 nodes = 1024 nodes,
    # TM=256 / TK=512 -> grid (4, 2); output [G, D] = [8, 128] is a full (8,128) tile.
    NODES_PER_GRAPH = 128
    G = 8
    N = G * NODES_PER_GRAPH     # 1024 total nodes
    IN_CH = 8                   # in_channels
    OUT_CH = 32                 # out_channels
    DENSE = 128                 # dense_size
    TM, TK = 256, 512

    key = jax.random.PRNGKey(0)
    ks = jax.random.split(key, 8)

    # Parameters (stored [in, out], i.e. transposed torch Linear weights).
    params = {
        "wl0": 0.1 * jax.random.normal(ks[0], (IN_CH, OUT_CH), jnp.float32),
        "wl1": 0.1 * jax.random.normal(ks[1], (IN_CH, OUT_CH), jnp.float32),
        "wr0": 0.1 * jax.random.normal(ks[2], (IN_CH, OUT_CH), jnp.float32),
        "wr1": 0.1 * jax.random.normal(ks[3], (IN_CH, OUT_CH), jnp.float32),
        "wd":  0.1 * jax.random.normal(ks[4], (OUT_CH, DENSE), jnp.float32),
        "bd":  0.1 * jax.random.normal(ks[5], (1, DENSE), jnp.float32),
    }

    # Node features and graph structure: per graph, a bidirectional chain over the
    # first 127 nodes and an isolated last node (in-degree 0 -> exercises the deg==0 path).
    x = jax.random.normal(ks[6], (N, IN_CH), jnp.float32)
    src_list, dst_list = [], []
    for g in range(G):
        base = g * NODES_PER_GRAPH
        for i in range(NODES_PER_GRAPH - 2):
            src_list += [base + i, base + i + 1]
            dst_list += [base + i + 1, base + i]
    edge_index = jnp.array([src_list, dst_list], dtype=jnp.int32)
    batch = jnp.repeat(jnp.arange(G, dtype=jnp.int32), NODES_PER_GRAPH)

    # One-time weight packing; per-call graph operand construction (bf16, padded).
    n_pad = ((N + math.lcm(TM, TK) - 1) // math.lcm(TM, TK)) * math.lcm(TM, TK)
    packed = pack_fpnn_params(params)
    xe, adj, pool = build_graph_operands(x, edge_index, batch, G, n_pad)

    fwd = jax.jit(functools.partial(fpnn_v4_forward, tm=TM, tk=TK))
    out = jax.block_until_ready(fwd(xe, adj, pool, packed))

    ref = fpnn_v4_reference(x, edge_index, batch, params, G)
    # Tolerance accounts for bf16 MXU operands (f32 accumulation) and the EUP
    # approximate reciprocal in the softmax denominator.
    np.testing.assert_allclose(np.asarray(out), np.asarray(ref),
                               rtol=3e-2, atol=3e-3)

    print("KERNEL_OK")
</pallas_src>

<mosaic_0001>
module attributes {stable_mosaic.version = 11 : i64} {
  func.func @fpnn_v4_kernel(%arg0: i32, %arg1: i32, %arg2: memref<256x512xbf16, #tpu.memory_space<vmem>>, %arg3: memref<512x9xbf16, #tpu.memory_space<vmem>>, %arg4: memref<256x9xbf16, #tpu.memory_space<vmem>>, %arg5: memref<8x256xbf16, #tpu.memory_space<vmem>>, %arg6: memref<3x9x32xbf16, #tpu.memory_space<vmem>>, %arg7: memref<32x128xbf16, #tpu.memory_space<vmem>>, %arg8: memref<1x128xf32, #tpu.memory_space<vmem>>, %arg9: memref<1x8x128xf32, #tpu.memory_space<vmem>>, %arg10: memref<256x9xf32, #tpu.memory_space<vmem>>) attributes {dimension_semantics = [#tpu.dimension_semantics<parallel>, #tpu.dimension_semantics<arbitrary>], iteration_bounds = array<i64: 4, 2>, scalar_prefetch = 0 : i64, scratch_operands = 1 : i64, tpu.core_type = #tpu.core_type<tc>, window_params = [{transform_indices = @transform_0, window_bounds = array<i64: 256, 512>}, {transform_indices = @transform_1, window_bounds = array<i64: 512, 9>}, {transform_indices = @transform_2, window_bounds = array<i64: 256, 9>}, {transform_indices = @transform_3, window_bounds = array<i64: 8, 256>}, {pipeline_mode = #tpu.pipeline_mode<synchronous>, transform_indices = @transform_4, window_bounds = array<i64: 3, 9, 32>}, {pipeline_mode = #tpu.pipeline_mode<synchronous>, transform_indices = @transform_5, window_bounds = array<i64: 32, 128>}, {pipeline_mode = #tpu.pipeline_mode<synchronous>, transform_indices = @transform_6, window_bounds = array<i64: 1, 128>}, {transform_indices = @transform_7, window_bounds = array<i64: 1, 8, 128>}]} {
    %c0_i32 = arith.constant 0 : i32
    %0 = arith.cmpi eq, %arg1, %c0_i32 : i32
    %1 = arith.extui %0 : i1 to i32
    %c0_i32_0 = arith.constant 0 : i32
    %2 = arith.cmpi ne, %1, %c0_i32_0 : i32
    scf.if %2 {
      %cst_9 = arith.constant 0.000000e+00 : f32
      %12 = vector.broadcast %cst_9 : f32 to vector<256x9xf32>
      %c0_10 = arith.constant 0 : index
      %c0_11 = arith.constant 0 : index
      %13 = vector.load %arg10[%c0_10, %c0_11] : memref<256x9xf32, #tpu.memory_space<vmem>>, vector<256x9xf32>
      tpu.vector_store %arg10[%c0_10, %c0_11], %12 {strides = array<i32>} : memref<256x9xf32, #tpu.memory_space<vmem>>, vector<256x9xf32>,
    } else {
    }
    %c0 = arith.constant 0 : index
    %c0_1 = arith.constant 0 : index
    %3 = vector.load %arg10[%c0, %c0_1] : memref<256x9xf32, #tpu.memory_space<vmem>>, vector<256x9xf32>
    %c0_2 = arith.constant 0 : index
    %c0_3 = arith.constant 0 : index
    %4 = vector.load %arg2[%c0_2, %c0_3] : memref<256x512xbf16, #tpu.memory_space<vmem>>, vector<256x512xbf16>
    %c0_4 = arith.constant 0 : index
    %c0_5 = arith.constant 0 : index
    %5 = vector.load %arg3[%c0_4, %c0_5] : memref<512x9xbf16, #tpu.memory_space<vmem>>, vector<512x9xbf16>
    %cst = arith.constant dense<0.000000e+00> : vector<256x9xf32>
    %6 = tpu.matmul %4, %5, %cst {dimension_numbers = #tpu.dot_dimension_numbers<[1], [0], [0], [1], [0, 0, 1, 1], [], []>} : vector<256x512xbf16>, vector<512x9xbf16>, vector<256x9xf32> -> vector<256x9xf32>
    %7 = arith.addf %3, %6 : vector<256x9xf32>
    %c0_6 = arith.constant 0 : index
    %c0_7 = arith.constant 0 : index
    %8 = vector.load %arg10[%c0_6, %c0_7] : memref<256x9xf32, #tpu.memory_space<vmem>>, vector<256x9xf32>
    tpu.vector_store %arg10[%c0_6, %c0_7], %7 {strides = array<i32>} : memref<256x9xf32, #tpu.memory_space<vmem>>, vector<256x9xf32>,
    %c1_i32 = arith.constant 1 : i32
    %9 = arith.cmpi eq, %arg1, %c1_i32 : i32
    %10 = arith.extui %9 : i1 to i32
    %c0_i32_8 = arith.constant 0 : i32
    %11 = arith.cmpi ne, %10, %c0_i32_8 : i32
    scf.if %11 {
      %c0_9 = arith.constant 0 : index
      %c0_10 = arith.constant 0 : index
      %12 = vector.load %arg10[%c0_9, %c0_10] : memref<256x9xf32, #tpu.memory_space<vmem>>, vector<256x9xf32>
      %c0_11 = arith.constant 0 : index
      %c0_12 = arith.constant 0 : index
      %13 = vector.load %arg4[%c0_11, %c0_12] : memref<256x9xbf16, #tpu.memory_space<vmem>>, vector<256x9xbf16>
      %14 = vector.extract_strided_slice %12 {offsets = [0, 8], sizes = [256, 1], strides = [1, 1]} : vector<256x9xf32> to vector<256x1xf32>
      %cst_13 = arith.constant 1.000000e+00 : f32
      %15 = vector.broadcast %cst_13 : f32 to vector<256x1xf32>
      %16 = arith.minimumf %14, %15 : vector<256x1xf32>
      %17 = arith.truncf %12 : vector<256x9xf32> to vector<256x9xbf16>
      %c0_14 = arith.constant 0 : index
      %c0_15 = arith.constant 0 : index
      %c0_16 = arith.constant 0 : index
      %18 = vector.load %arg6[%c0_14, %c0_15, %c0_16] : memref<3x9x32xbf16, #tpu.memory_space<vmem>>, vector<1x9x32xbf16>
      %19 = vector.shape_cast %18 : vector<1x9x32xbf16> to vector<9x32xbf16>
      %cst_17 = arith.constant dense<0.000000e+00> : vector<256x32xf32>
      %20 = tpu.matmul %17, %19, %cst_17 {dimension_numbers = #tpu.dot_dimension_numbers<[1], [0], [0], [1], [0, 0, 1, 1], [], []>} : vector<256x9xbf16>, vector<9x32xbf16>, vector<256x32xf32> -> vector<256x32xf32>
      %c1 = arith.constant 1 : index
      %c0_18 = arith.constant 0 : index
      %c0_19 = arith.constant 0 : index
      %21 = vector.load %arg6[%c1, %c0_18, %c0_19] : memref<3x9x32xbf16, #tpu.memory_space<vmem>>, vector<1x9x32xbf16>
      %22 = vector.shape_cast %21 : vector<1x9x32xbf16> to vector<9x32xbf16>
      %cst_20 = arith.constant dense<0.000000e+00> : vector<256x32xf32>
      %23 = tpu.matmul %13, %22, %cst_20 {dimension_numbers = #tpu.dot_dimension_numbers<[1], [0], [0], [1], [0, 0, 1, 1], [], []>} : vector<256x9xbf16>, vector<9x32xbf16>, vector<256x32xf32> -> vector<256x32xf32>
      %c2 = arith.constant 2 : index
      %c0_21 = arith.constant 0 : index
      %c0_22 = arith.constant 0 : index
      %24 = vector.load %arg6[%c2, %c0_21, %c0_22] : memref<3x9x32xbf16, #tpu.memory_space<vmem>>, vector<1x9x32xbf16>
      %25 = vector.shape_cast %24 : vector<1x9x32xbf16> to vector<9x32xbf16>
      %cst_23 = arith.constant dense<0.000000e+00> : vector<256x32xf32>
      %26 = tpu.matmul %13, %25, %cst_23 {dimension_numbers = #tpu.dot_dimension_numbers<[1], [0], [0], [1], [0, 0, 1, 1], [], []>} : vector<256x9xbf16>, vector<9x32xbf16>, vector<256x32xf32> -> vector<256x32xf32>
      %27 = arith.addf %20, %23 : vector<256x32xf32>
      %28 = vector.broadcast %16 : vector<256x1xf32> to vector<256x32xf32>
      %29 = arith.mulf %28, %26 : vector<256x32xf32>
      %30 = arith.addf %27, %29 : vector<256x32xf32>
      %cst_24 = arith.constant 0.000000e+00 : f32
      %31 = vector.broadcast %cst_24 : f32 to vector<256x32xf32>
      %32 = arith.maximumf %30, %31 : vector<256x32xf32>
      %33 = arith.truncf %32 : vector<256x32xf32> to vector<256x32xbf16>
      %c0_25 = arith.constant 0 : index
      %c0_26 = arith.constant 0 : index
      %34 = vector.load %arg7[%c0_25, %c0_26] : memref<32x128xbf16, #tpu.memory_space<vmem>>, vector<32x128xbf16>
      %cst_27 = arith.constant dense<0.000000e+00> : vector<256x128xf32>
      %35 = tpu.matmul %33, %34, %cst_27 {dimension_numbers = #tpu.dot_dimension_numbers<[1], [0], [0], [1], [0, 0, 1, 1], [], []>} : vector<256x32xbf16>, vector<32x128xbf16>, vector<256x128xf32> -> vector<256x128xf32>
      %c0_28 = arith.constant 0 : index
      %c0_29 = arith.constant 0 : index
      %36 = vector.load %arg8[%c0_28, %c0_29] : memref<1x128xf32, #tpu.memory_space<vmem>>, vector<1x128xf32>
      %37 = vector.broadcast %36 : vector<1x128xf32> to vector<256x128xf32>
      %38 = arith.addf %35, %37 : vector<256x128xf32>
      %cst_30 = arith.constant dense<0xFF800000> : vector<256xf32>
      %39 = vector.multi_reduction <maximumf>, %38, %cst_30 [1] : vector<256x128xf32> to vector<256xf32>
      %40 = vector.shape_cast %39 : vector<256xf32> to vector<256x1xf32>
      %41 = vector.broadcast %40 : vector<256x1xf32> to vector<256x128xf32>
      %42 = arith.subf %38, %41 : vector<256x128xf32>
      %43 = math.exp %42 : vector<256x128xf32>
      %cst_31 = arith.constant dense<0.000000e+00> : vector<256xf32>
      %44 = vector.multi_reduction <add>, %43, %cst_31 [1] : vector<256x128xf32> to vector<256xf32>
      %45 = vector.shape_cast %44 : vector<256xf32> to vector<256x1xf32>
      %46 = tpu.reciprocal %45 {approx = true} : vector<256x1xf32> -> vector<256x1xf32>
      %47 = vector.broadcast %46 : vector<256x1xf32> to vector<256x128xf32>
      %48 = arith.mulf %43, %47 : vector<256x128xf32>
      %c0_32 = arith.constant 0 : index
      %c0_33 = arith.constant 0 : index
      %49 = vector.load %arg5[%c0_32, %c0_33] : memref<8x256xbf16, #tpu.memory_space<vmem>>, vector<8x256xbf16>
      %50 = arith.truncf %48 : vector<256x128xf32> to vector<256x128xbf16>
      %cst_34 = arith.constant dense<0.000000e+00> : vector<8x128xf32>
      %51 = tpu.matmul %49, %50, %cst_34 {dimension_numbers = #tpu.dot_dimension_numbers<[1], [0], [0], [1], [0, 0, 1, 1], [], []>} : vector<8x256xbf16>, vector<256x128xbf16>, vector<8x128xf32> -> vector<8x128xf32>
      %c0_35 = arith.constant 0 : index
      %c0_36 = arith.constant 0 : index
      %c0_37 = arith.constant 0 : index
      %52 = vector.load %arg9[%c0_35, %c0_36, %c0_37] : memref<1x8x128xf32, #tpu.memory_space<vmem>>, vector<1x8x128xf32>
      %53 = vector.shape_cast %52 : vector<1x8x128xf32> to vector<8x128xf32>
      %54 = vector.shape_cast %51 : vector<8x128xf32> to vector<1x8x128xf32>
      tpu.vector_store %arg9[%c0_35, %c0_36, %c0_37], %54 {strides = array<i32>} : memref<1x8x128xf32, #tpu.memory_space<vmem>>, vector<1x8x128xf32>,
    } else {
    }
    return
  }
  func.func @transform_0(%arg0: i32, %arg1: i32) -> (i32, i32) {
    %c0_i32 = arith.constant 0 : i32
    return %arg0, %arg1 : i32, i32
  }
  func.func @transform_1(%arg0: i32, %arg1: i32) -> (i32, i32) {
    %c0_i32 = arith.constant 0 : i32
    %c0_i32_0 = arith.constant 0 : i32
    return %arg1, %c0_i32 : i32, i32
  }
  func.func @transform_2(%arg0: i32, %arg1: i32) -> (i32, i32) {
    %c0_i32 = arith.constant 0 : i32
    %c0_i32_0 = arith.constant 0 : i32
    return %arg0, %c0_i32 : i32, i32
  }
  func.func @transform_3(%arg0: i32, %arg1: i32) -> (i32, i32) {
    %c0_i32 = arith.constant 0 : i32
    %c0_i32_0 = arith.constant 0 : i32
    return %c0_i32, %arg0 : i32, i32
  }
  func.func @transform_4(%arg0: i32, %arg1: i32) -> (i32, i32, i32) {
    %c0_i32 = arith.constant 0 : i32
    %c0_i32_0 = arith.constant 0 : i32
    %c0_i32_1 = arith.constant 0 : i32
    %c0_i32_2 = arith.constant 0 : i32
    return %c0_i32, %c0_i32_0, %c0_i32_1 : i32, i32, i32
  }
  func.func @transform_5(%arg0: i32, %arg1: i32) -> (i32, i32) {
    %c0_i32 = arith.constant 0 : i32
    %c0_i32_0 = arith.constant 0 : i32
    %c0_i32_1 = arith.constant 0 : i32
    return %c0_i32, %c0_i32_0 : i32, i32
  }
  func.func @transform_6(%arg0: i32, %arg1: i32) -> (i32, i32) {
    %c0_i32 = arith.constant 0 : i32
    %c0_i32_0 = arith.constant 0 : i32
    %c0_i32_1 = arith.constant 0 : i32
    return %c0_i32, %c0_i32_0 : i32, i32
  }
  func.func @transform_7(%arg0: i32, %arg1: i32) -> (i32, i32, i32) {
    %c0_i32 = arith.constant 0 : i32
    %c0_i32_0 = arith.constant 0 : i32
    %c0_i32_1 = arith.constant 0 : i32
    return %arg0, %c0_i32, %c0_i32_0 : i32, i32, i32
  }
}

</mosaic_0001>

<llo_original>
// kernel: fpnn_v4_forward.1
$region0: #{fpnn_v4_forward.1}
  #allocation0 [shape = 'u32[]', space=smem, size = 0x4, offset = 0x4, fixed_abs, tag = 'smem constant byte address 0x4 - core index']
  #allocation1 [shape = 'u32[144,128]{1,0:T(1,128)}', space=vmem, size = 0x12000, scoped, tag = 'internal scratch']
  #allocation2 [shape = 'f32[256,9]{1,0:T(8,128)}', space=vmem, size = 0x20000, scoped, tag = 'scratch operand']
  %s0 = inlined_call_operand.hbm [shape: bf16[1024,1024], index: 0, kind: input, shape index: {}]
  %s1 = inlined_call_operand.vmem [shape: bf16[1024,9], index: 1, kind: input, shape index: {}, may-alias: {1,2}]
  %s2 = inlined_call_operand.vmem [shape: bf16[1024,9], index: 2, kind: input, shape index: {}, may-alias: {1,2}]
  %s3 = inlined_call_operand.hbm [shape: bf16[8,1024], index: 3, kind: input, shape index: {}]
  %s4 = inlined_call_operand.vmem [shape: bf16[3,9,32], index: 4, kind: input, shape index: {}]
  %s5 = inlined_call_operand.hbm [shape: bf16[32,128], index: 5, kind: input, shape index: {}]
  %s6 = inlined_call_operand.hbm [shape: f32[1,128], index: 6, kind: input, shape index: {}]
  %s7 = inlined_call_operand.vmem [shape: f32[4,8,128], index: 7, kind: output, shape index: {}]
  %s8 = sld [smem:[#allocation0]]
  $region85: #{fpnn_v4_forward.1} parent=0
    _
  %s10 = ssub.s32 1, %s8
  %s11 = scalar_select 0, %s10, %s8
  $region1: #{fpnn_v4_forward.1} parent=0
    #allocation3 [shape = 'u8[524288]{0}', space=vmem, size = 0x80000, scoped, tag = 'input window, operand 0']
    #allocation4 [shape = 's32[2]{0}', space=sflag, size = 0x8, scoped, tag = 'scoped memory for fpnn_v4_forward.1']
    #allocation5 [shape = 'u8[8192]{0}', space=vmem, size = 0x2000, scoped, tag = 'input window, operand 3']
    #allocation6 [shape = 's32[2]{0}', space=sflag, size = 0x8, scoped, tag = 'scoped memory for fpnn_v4_forward.1']
    #allocation7 [shape = 'u8[8192]{0}', space=vmem, size = 0x2000, scoped, tag = 'input window, operand 5, single buffered']
    #allocation8 [shape = 'u8[512]{0}', space=vmem, size = 0x400, scoped, tag = 'input window, operand 6, single buffered']
    #allocation9 [shape = 's32[1]{0}', space=sflag, size = 0x4, scoped, tag = 'scoped memory for fpnn_v4_forward.1']
    %12 = vsyncpa [#allocation4], 0
    %s13 = scalar_lea.sflag [#allocation4], 1
    %14 = vsyncpa %s13, 0
    %15 = vsyncpa [#allocation6], 0
    %s16 = scalar_lea.sflag [#allocation6], 1
    %17 = vsyncpa %s16, 0
    %18 = vsyncpa [#allocation9], 0
    loop: start=0, step=1, limit=10
    $region2: #{fpnn_v4_forward.1} parent=1 // loop_pre_header
      _
    $region3: #{fpnn_v4_forward.1} parent=1 // loop_header
      %s20 = sphi 0, %s24
      %p21 = scmp.ge.s32.totalorder %s20, 10
      %s27 = sphi 0, %s39
      %s28 = sphi 0, %s35
      %s29 = sphi 0, %s27
      %s30 = sphi 0, %s28
      %s31 = sphi 0, %s29
      %s32 = sphi 0, %s30
      %s44 = sphi 0, %s46
      %s47 = sphi 0, %s44
      %s48 = sphi 0, %s47
      %s64 = sphi 0, %s48
      %s70 = sphi 0, %s72
      %s73 = sphi 0, %s70
      %s74 = sphi 0, %s73
      %s90 = sphi 0, %s74
      %s96 = sphi 0, %s98
      %s99 = sphi 0, %s96
      %s100 = sphi 0, %s99
      %s116 = sphi 0, %s100
      %s122 = sphi 0, %s124
      %s125 = sphi 0, %s122
      %s126 = sphi 0, %s125
      %s142 = sphi 0, %s126
      %s146 = sphi 0, %s146
      %s148 = sphi 0, %s146
      %s149 = sphi 0, %s148
      %s163 = sphi 0, %s149
      %s167 = sphi 0, %s167
      %s169 = sphi 0, %s167
      %s170 = sphi 0, %s169
      %s184 = sphi 0, %s170
      %s188 = sphi 0, %s188
      %s190 = sphi 0, %s188
      %s191 = sphi 0, %s190
      %s205 = sphi 0, %s191
      %s211 = sphi 0, %s213
      %s214 = sphi 0, %s211
      %s215 = sphi 0, %s214
      %s231 = sphi 0, %s215
    $region4: #{fpnn_v4_forward.1} parent=1 // loop_header_branch
      %23 = sbr.rel (%p21) target = $region8
    $region5: #{fpnn_v4_forward.1} parent=1 // loop_body
      %s25 = ssub.s32 %s20, 1
      %s26 = ssub.s32 %s20, 2
      %s33 = sadd.s32 1, %s28
      %p34 = scmp.ge.s32.totalorder %s33, 2
      %s35 = scalar_select %p34, 0, %s33
      %s36 = sadd.s32 1, %s27
      %s37 = scalar_select %p34, %s36, %s27
      %p38 = scmp.ge.s32.totalorder %s37, 4
      %s39 = scalar_select %p38, 0, %s37
      %s40 = ssub.s32 %s27, %s39
      %s41 = ssub.s32 %s28, %s35
      %s42 = sor.u32 %s40, %s41
      %p43 = scmp.eq.s32.totalorder %s42, 0
      %s45 = sadd.s32 %s44, 1
      %s46 = scalar_select %p43, %s44, %s45
      %p49 = pneg %p43
      %p50 = scmp.eq.s32.totalorder %s20, 7
      %p51 = por %p49, %p50
      %p52 = scmp.ne.s32.totalorder %s44, %s47
      %p53 = scmp.eq.s32.totalorder %s20, 0
      %p54 = por %p52, %p53
      %p55 = scmp.ne.s32.totalorder %s44, %s47
      %p56 = scmp.eq.s32.totalorder %s25, 7
      %p57 = por %p55, %p56
      %p58 = scmp.ne.s32.totalorder %s47, %s48
      %p59 = scmp.eq.s32.totalorder %s25, 0
      %p60 = por %p58, %p59
      %p61 = scmp.ne.s32.totalorder %s47, %s48
      %p62 = scmp.eq.s32.totalorder %s26, 7
      %p63 = por %p61, %p62
      %p65 = scmp.ne.s32.totalorder %s48, %s64
      %p66 = scmp.eq.s32.totalorder %s26, 0
      %p67 = por %p65, %p66
      %s68 = ssub.s32 %s28, %s35
      %p69 = scmp.eq.s32.totalorder %s68, 0
      %s71 = sadd.s32 %s70, 1
      %s72 = scalar_select %p69, %s70, %s71
      %p75 = pneg %p69
      %p76 = scmp.eq.s32.totalorder %s20, 7
      %p77 = por %p75, %p76
      %p78 = scmp.ne.s32.totalorder %s70, %s73
      %p79 = scmp.eq.s32.totalorder %s20, 0
      %p80 = por %p78, %p79
      %p81 = scmp.ne.s32.totalorder %s70, %s73
      %p82 = scmp.eq.s32.totalorder %s25, 7
      %p83 = por %p81, %p82
      %p84 = scmp.ne.s32.totalorder %s73, %s74
      %p85 = scmp.eq.s32.totalorder %s25, 0
      %p86 = por %p84, %p85
      %p87 = scmp.ne.s32.totalorder %s73, %s74
      %p88 = scmp.eq.s32.totalorder %s26, 7
      %p89 = por %p87, %p88
      %p91 = scmp.ne.s32.totalorder %s74, %s90
      %p92 = scmp.eq.s32.totalorder %s26, 0
      %p93 = por %p91, %p92
      %s94 = ssub.s32 %s27, %s39
      %p95 = scmp.eq.s32.totalorder %s94, 0
      %s97 = sadd.s32 %s96, 1
      %s98 = scalar_select %p95, %s96, %s97
      %p101 = pneg %p95
      %p102 = scmp.eq.s32.totalorder %s20, 7
      %p103 = por %p101, %p102
      %p104 = scmp.ne.s32.totalorder %s96, %s99
      %p105 = scmp.eq.s32.totalorder %s20, 0
      %p106 = por %p104, %p105
      %p107 = scmp.ne.s32.totalorder %s96, %s99
      %p108 = scmp.eq.s32.totalorder %s25, 7
      %p109 = por %p107, %p108
      %p110 = scmp.ne.s32.totalorder %s99, %s100
      %p111 = scmp.eq.s32.totalorder %s25, 0
      %p112 = por %p110, %p111
      %p113 = scmp.ne.s32.totalorder %s99, %s100
      %p114 = scmp.eq.s32.totalorder %s26, 7
      %p115 = por %p113, %p114
      %p117 = scmp.ne.s32.totalorder %s100, %s116
      %p118 = scmp.eq.s32.totalorder %s26, 0
      %p119 = por %p117, %p118
      %s120 = ssub.s32 %s27, %s39
      %p121 = scmp.eq.s32.totalorder %s120, 0
      %s123 = sadd.s32 %s122, 1
      %s124 = scalar_select %p121, %s122, %s123
      %p127 = pneg %p121
      %p128 = scmp.eq.s32.totalorder %s20, 7
      %p129 = por %p127, %p128
      %p130 = scmp.ne.s32.totalorder %s122, %s125
      %p131 = scmp.eq.s32.totalorder %s20, 0
      %p132 = por %p130, %p131
      %p133 = scmp.ne.s32.totalorder %s122, %s125
      %p134 = scmp.eq.s32.totalorder %s25, 7
      %p135 = por %p133, %p134
      %p136 = scmp.ne.s32.totalorder %s125, %s126
      %p137 = scmp.eq.s32.totalorder %s25, 0
      %p138 = por %p136, %p137
      %p139 = scmp.ne.s32.totalorder %s125, %s126
      %p140 = scmp.eq.s32.totalorder %s26, 7
      %p141 = por %p139, %p140
      %p143 = scmp.ne.s32.totalorder %s126, %s142
      %p144 = scmp.eq.s32.totalorder %s26, 0
      %p145 = por %p143, %p144
      %s147 = sadd.s32 %s146, 1
      %p150 = scmp.eq.s32.totalorder %s20, 7
      %p151 = scmp.ne.s32.totalorder %s146, %s148
      %p152 = scmp.eq.s32.totalorder %s20, 0
      %p153 = por %p151, %p152
      %p154 = scmp.ne.s32.totalorder %s146, %s148
      %p155 = scmp.eq.s32.totalorder %s25, 7
      %p156 = por %p154, %p155
      %p157 = scmp.ne.s32.totalorder %s148, %s149
      %p158 = scmp.eq.s32.totalorder %s25, 0
      %p159 = por %p157, %p158
      %p160 = scmp.ne.s32.totalorder %s148, %s149
      %p161 = scmp.eq.s32.totalorder %s26, 7
      %p162 = por %p160, %p161
      %p164 = scmp.ne.s32.totalorder %s149, %s163
      %p165 = scmp.eq.s32.totalorder %s26, 0
      %p166 = por %p164, %p165
      %s168 = sadd.s32 %s167, 1
      %p171 = scmp.eq.s32.totalorder %s20, 7
      %p172 = scmp.ne.s32.totalorder %s167, %s169
      %p173 = scmp.eq.s32.totalorder %s20, 0
      %p174 = por %p172, %p173
      %p175 = scmp.ne.s32.totalorder %s167, %s169
      %p176 = scmp.eq.s32.totalorder %s25, 7
      %p177 = por %p175, %p176
      %p178 = scmp.ne.s32.totalorder %s169, %s170
      %p179 = scmp.eq.s32.totalorder %s25, 0
      %p180 = por %p178, %p179
      %p181 = scmp.ne.s32.totalorder %s169, %s170
      %p182 = scmp.eq.s32.totalorder %s26, 7
      %p183 = por %p181, %p182
      %p185 = scmp.ne.s32.totalorder %s170, %s184
      %p186 = scmp.eq.s32.totalorder %s26, 0
      %p187 = por %p185, %p186
      %s189 = sadd.s32 %s188, 1
      %p192 = scmp.eq.s32.totalorder %s20, 7
      %p193 = scmp.ne.s32.totalorder %s188, %s190
      %p194 = scmp.eq.s32.totalorder %s20, 0
      %p195 = por %p193, %p194
      %p196 = scmp.ne.s32.totalorder %s188, %s190
      %p197 = scmp.eq.s32.totalorder %s25, 7
      %p198 = por %p196, %p197
      %p199 = scmp.ne.s32.totalorder %s190, %s191
      %p200 = scmp.eq.s32.totalorder %s25, 0
      %p201 = por %p199, %p200
      %p202 = scmp.ne.s32.totalorder %s190, %s191
      %p203 = scmp.eq.s32.totalorder %s26, 7
      %p204 = por %p202, %p203
      %p206 = scmp.ne.s32.totalorder %s191, %s205
      %p207 = scmp.eq.s32.totalorder %s26, 0
      %p208 = por %p206, %p207
      %s209 = ssub.s32 %s27, %s39
      %p210 = scmp.eq.s32.totalorder %s209, 0
      %s212 = sadd.s32 %s211, 1
      %s213 = scalar_select %p210, %s211, %s212
      %p216 = pneg %p210
      %p217 = scmp.eq.s32.totalorder %s20, 7
      %p218 = por %p216, %p217
      %p219 = scmp.ne.s32.totalorder %s211, %s214
      %p220 = scmp.eq.s32.totalorder %s20, 0
      %p221 = por %p219, %p220
      %p222 = scmp.ne.s32.totalorder %s211, %s214
      %p223 = scmp.eq.s32.totalorder %s25, 7
      %p224 = por %p222, %p223
      %p225 = scmp.ne.s32.totalorder %s214, %s215
      %p226 = scmp.eq.s32.totalorder %s25, 0
      %p227 = por %p225, %p226
      %p228 = scmp.ne.s32.totalorder %s214, %s215
      %p229 = scmp.eq.s32.totalorder %s26, 7
      %p230 = por %p228, %p229
      %p232 = scmp.ne.s32.totalorder %s215, %s231
      %p233 = scmp.eq.s32.totalorder %s26, 0
      %p234 = por %p232, %p233
      %p235 = scmp.le.s32.totalorder 1, %s20
      %p236 = scmp.lt.s32.totalorder %s20, 9
      %p237 = pnand %p235, %p236
      %p238 = pneg %p237
      // Predicated region
      $region9: #{fpnn_v4_forward.1} parent=5 // pred_check
        _
      $region10: #{fpnn_v4_forward.1} parent=5 // pred_check_branch
        %240 = sbr.rel (%p237) target = $region12
      $region11: #{fpnn_v4_forward.1} parent=5 // pred_region
        %s241 = ssub.s32 %s20, 1
        // Predicated region
        $region13: #{fpnn_v4_forward.1} parent=11 // pred_check
          %p242 = pneg %p159
        $region14: #{fpnn_v4_forward.1} parent=11 // pred_check_branch
          %244 = sbr.rel (%p242) target = $region16
        $region15: #{fpnn_v4_forward.1} parent=11 // pred_region
          _
        $region16: #{fpnn_v4_forward.1} parent=11 // pred_fallthru
          _
        // Predicated region
        $region17: #{fpnn_v4_forward.1} parent=11 // pred_check
          %p245 = pneg %p180
        $region18: #{fpnn_v4_forward.1} parent=11 // pred_check_branch
          %247 = sbr.rel (%p245) target = $region20
        $region19: #{fpnn_v4_forward.1} parent=11 // pred_region
          %s249 = ssub.s32 256, 256
          %250 = vsyncadd [#allocation6], %s249
          %s251 = sshll.u32 [#allocation7], 4
          %s252 = int_to_ptr.vmem [resolvable:$true] %s251
          %257 = dma.hbm_to_vmem [thread:$0]  %s5, 256, %s252, [#allocation6], 64, 64, 4
        $region20: #{fpnn_v4_forward.1} parent=11 // pred_fallthru
          _
        // Predicated region
        $region21: #{fpnn_v4_forward.1} parent=11 // pred_check
          %p258 = pneg %p201
        $region22: #{fpnn_v4_forward.1} parent=11 // pred_check_branch
          %260 = sbr.rel (%p258) target = $region24
        $region23: #{fpnn_v4_forward.1} parent=11 // pred_region
          %s262 = ssub.s32 16, 16
          %263 = vsyncadd [#allocation9], %s262
          %s265 = sshll.u32 [#allocation8], 4
          %s266 = int_to_ptr.vmem [resolvable:$true] %s265
          %268 = dma.hbm_to_vmem [thread:$0]  %s6, 16, %s266, [#allocation9]
        $region24: #{fpnn_v4_forward.1} parent=11 // pred_fallthru
          _
      $region12: #{fpnn_v4_forward.1} parent=5 // pred_fallthru
        _
      %p269 = scmp.lt.s32.totalorder %s20, 8
      // Predicated region
      $region25: #{fpnn_v4_forward.1} parent=5 // pred_check
        %p270 = pneg %p269
      $region26: #{fpnn_v4_forward.1} parent=5 // pred_check_branch
        %272 = sbr.rel (%p270) target = $region28
      $region27: #{fpnn_v4_forward.1} parent=5 // pred_region
        // Predicated region
        $region29: #{fpnn_v4_forward.1} parent=27 // pred_check
          %p273 = pneg %p54
        $region30: #{fpnn_v4_forward.1} parent=27 // pred_check_branch
          %275 = sbr.rel (%p273) target = $region32
        $region31: #{fpnn_v4_forward.1} parent=27 // pred_region
          %s276 = sand.u32 %s44, 1
          %s277 = scalar_lea.sflag [#allocation4], %s276
          %s278 = sand.u32 %s44, 1
          %s279 = smul.addr %s278, 512
          %s280 = scalar_lea.vmem [#allocation3], %s279
          %s281 = smul.u32 32, %s27
          %s282 = smul.u32 4, %s28
          %s284 = ssub.s32 8192, 8192
          %285 = vsyncadd %s277, %s284
          %s286 = smul.addr %s281, 8
          %s287 = sadd.s32 %s282, %s286
          %s288 = smul.addr %s287, 64
          %s289 = scalar_lea.hbm %s0, %s288
          %s290 = sshll.u32 %s280, 4
          %s291 = int_to_ptr.vmem [resolvable:$true] %s290
          %296 = dma.hbm_to_vmem [thread:$0]  %s289, 8192, %s291, %s277, 512, 256, 16
        $region32: #{fpnn_v4_forward.1} parent=27 // pred_fallthru
          _
        // Predicated region
        $region33: #{fpnn_v4_forward.1} parent=27 // pred_check
          %p297 = pneg %p80
        $region34: #{fpnn_v4_forward.1} parent=27 // pred_check_branch
          %299 = sbr.rel (%p297) target = $region36
        $region35: #{fpnn_v4_forward.1} parent=27 // pred_region
          %s300 = smul.u32 64, %s28
          %p301 = scmp.lt.s32.totalorder %s300, 127
          %s302 = scalar_select %p301, %s300, 127
          %s303 = smul.addr %s302, 4
          %s304 = scalar_lea.vmem %s1, %s303
          %s305 = smul.u32 64, %s28
        $region36: #{fpnn_v4_forward.1} parent=27 // pred_fallthru
          _
        // Predicated region
        $region37: #{fpnn_v4_forward.1} parent=27 // pred_check
          %p306 = pneg %p106
        $region38: #{fpnn_v4_forward.1} parent=27 // pred_check_branch
          %308 = sbr.rel (%p306) target = $region40
        $region39: #{fpnn_v4_forward.1} parent=27 // pred_region
          %s309 = smul.u32 32, %s27
          %p310 = scmp.lt.s32.totalorder %s309, 127
          %s311 = scalar_select %p310, %s309, 127
          %s312 = smul.addr %s311, 4
          %s313 = scalar_lea.vmem %s2, %s312
          %s314 = smul.u32 32, %s27
        $region40: #{fpnn_v4_forward.1} parent=27 // pred_fallthru
          _
        // Predicated region
        $region41: #{fpnn_v4_forward.1} parent=27 // pred_check
          %p315 = pneg %p132
        $region42: #{fpnn_v4_forward.1} parent=27 // pred_check_branch
          %317 = sbr.rel (%p315) target = $region44
        $region43: #{fpnn_v4_forward.1} parent=27 // pred_region
          %s318 = sand.u32 %s20, 1
          %s319 = scalar_lea.sflag [#allocation6], %s318
          %s320 = sand.u32 %s122, 1
          %s321 = smul.addr %s320, 8
          %s322 = scalar_lea.vmem [#allocation5], %s321
          %s323 = smul.u32 2, %s27
          %s325 = ssub.s32 128, 128
          %326 = vsyncadd %s319, %s325
          %s327 = smul.addr %s323, 64
          %s328 = scalar_lea.hbm %s3, %s327
          %s330 = sshll.u32 %s322, 4
          %s331 = int_to_ptr.vmem [resolvable:$true] %s330
          %333 = dma.hbm_to_vmem [thread:$0]  %s328, 128, %s331, %s319
        $region44: #{fpnn_v4_forward.1} parent=27 // pred_fallthru
          _
      $region28: #{fpnn_v4_forward.1} parent=5 // pred_fallthru
        _
      %p334 = scmp.le.s32.totalorder 1, %s20
      %p335 = scmp.lt.s32.totalorder %s20, 9
      %p336 = pnand %p334, %p335
      %p337 = pneg %p336
      // Predicated region
      $region45: #{fpnn_v4_forward.1} parent=5 // pred_check
        _
      $region46: #{fpnn_v4_forward.1} parent=5 // pred_check_branch
        %339 = sbr.rel (%p336) target = $region48
      $region47: #{fpnn_v4_forward.1} parent=5 // pred_region
        %s340 = ssub.s32 %s20, 1
        %s341 = sand.u32 %s47, 1
        %s342 = scalar_lea.sflag [#allocation4], %s341
        %s343 = sand.u32 %s47, 1
        %s344 = smul.addr %s343, 512
        %s345 = scalar_lea.vmem [#allocation3], %s344
        // Predicated region
        $region49: #{fpnn_v4_forward.1} parent=47 // pred_check
          %p346 = pneg %p60
        $region50: #{fpnn_v4_forward.1} parent=47 // pred_check_branch
          %348 = sbr.rel (%p346) target = $region52
        $region51: #{fpnn_v4_forward.1} parent=47 // pred_region
          %349 = dma.done %s342, 8192
        $region52: #{fpnn_v4_forward.1} parent=47 // pred_fallthru
          _
        %s350 = sand.u32 %s25, 1
        %s351 = scalar_lea.sflag [#allocation6], %s350
        %s352 = sand.u32 %s125, 1
        %s353 = smul.addr %s352, 8
        %s354 = scalar_lea.vmem [#allocation5], %s353
        // Predicated region
        $region53: #{fpnn_v4_forward.1} parent=47 // pred_check
          %p355 = pneg %p138
        $region54: #{fpnn_v4_forward.1} parent=47 // pred_check_branch
          %357 = sbr.rel (%p355) target = $region56
        $region55: #{fpnn_v4_forward.1} parent=47 // pred_region
          %358 = dma.done %s351, 128
        $region56: #{fpnn_v4_forward.1} parent=47 // pred_fallthru
          _
        // Predicated region
        $region57: #{fpnn_v4_forward.1} parent=47 // pred_check
          %p359 = pneg %p180
        $region58: #{fpnn_v4_forward.1} parent=47 // pred_check_branch
          %361 = sbr.rel (%p359) target = $region60
        $region59: #{fpnn_v4_forward.1} parent=47 // pred_region
          %362 = dma.done [#allocation6], 256
        $region60: #{fpnn_v4_forward.1} parent=47 // pred_fallthru
          _
        // Predicated region
        $region61: #{fpnn_v4_forward.1} parent=47 // pred_check
          %p363 = pneg %p201
        $region62: #{fpnn_v4_forward.1} parent=47 // pred_check_branch
          %365 = sbr.rel (%p363) target = $region64
        $region63: #{fpnn_v4_forward.1} parent=47 // pred_region
          %366 = dma.done [#allocation9], 16
        $region64: #{fpnn_v4_forward.1} parent=47 // pred_fallthru
          _
        %s367 = sand.u32 %s47, 1
        %s368 = scalar_lea.sflag [#allocation4], %s367
        %s369 = sand.u32 %s47, 1
        %s370 = smul.addr %s369, 512
        %s371 = scalar_lea.vmem [#allocation3], %s370
        %p372 = pneg %p60
        %p373 = pneg %p57
        %s374 = smul.u32 64, %s30
        %p375 = scmp.lt.s32.totalorder %s374, 127
        %s376 = scalar_select %p375, %s374, 127
        %s377 = smul.addr %s376, 4
        %s378 = scalar_lea.vmem %s1, %s377
        %p379 = pneg %p86
        %p380 = pneg %p83
        %s381 = smul.u32 32, %s29
        %p382 = scmp.lt.s32.totalorder %s381, 127
        %s383 = scalar_select %p382, %s381, 127
        %s384 = smul.addr %s383, 4
        %s385 = scalar_lea.vmem %s2, %s384
        %p386 = pneg %p112
        %p387 = pneg %p109
        %s388 = sand.u32 %s25, 1
        %s389 = scalar_lea.sflag [#allocation6], %s388
        %s390 = sand.u32 %s125, 1
        %s391 = smul.addr %s390, 8
        %s392 = scalar_lea.vmem [#allocation5], %s391
        %p393 = pneg %p138
        %p394 = pneg %p135
        %p395 = pneg %p159
        %p396 = pneg %p156
        %p397 = pneg %p180
        %p398 = pneg %p177
        %p399 = pneg %p201
        %p400 = pneg %p198
        %p401 = pneg %p227
        %p402 = pneg %p224
        %p403 = scmp.lt.s32.totalorder %s29, 3
        %s404 = scalar_select %p403, %s29, 3
        %s405 = smul.addr %s404, 8
        %s406 = scalar_lea.vmem %s7, %s405
        %s407 = smul.u32 32, %s29
        %s408 = smul.u32 4, %s30
        %s409 = smul.u32 64, %s30
        %p410 = scmp.lt.s32.totalorder %s409, 127
        %s411 = scalar_select %p410, %s409, 127
        %s412 = smul.addr %s411, 4
        %s413 = scalar_lea.vmem %s1, %s412
        %s414 = smul.u32 64, %s30
        %s415 = smul.u32 32, %s29
        %p416 = scmp.lt.s32.totalorder %s415, 127
        %s417 = scalar_select %p416, %s415, 127
        %s418 = smul.addr %s417, 4
        %s419 = scalar_lea.vmem %s2, %s418
        %s420 = smul.u32 32, %s29
        %s421 = smul.u32 2, %s29
        %p422 = scmp.lt.s32.totalorder %s29, 3
        %s423 = scalar_select %p422, %s29, 3
        %s424 = smul.addr %s423, 8
        %s425 = scalar_lea.vmem %s7, %s424
        %p427 = scmp.eq.s32.totalorder %s30, 0
        // Predicated region
        $region65: #{fpnn_v4_forward.1} parent=47 // pred_check
          %p428 = pneg %p427
        $region66: #{fpnn_v4_forward.1} parent=47 // pred_check_branch
          %430 = sbr.rel (%p428) target = $region68
        $region67: #{fpnn_v4_forward.1} parent=47 // pred_region
          %vm431 = vcmask 72704
          %432 = vst.msk [vmem:[#allocation2] sm:$0xff] %vm431, 0.0
          %433 = vst.msk [vmem:[#allocation2 + $0x8] sm:$0xff] %vm431, 0.0
          %434 = vst.msk [vmem:[#allocation2 + $0x10] sm:$0xff] %vm431, 0.0
          %435 = vst.msk [vmem:[#allocation2 + $0x18] sm:$0xff] %vm431, 0.0
          %436 = vst.msk [vmem:[#allocation2 + $0x20] sm:$0xff] %vm431, 0.0
          %437 = vst.msk [vmem:[#allocation2 + $0x28] sm:$0xff] %vm431, 0.0
          %438 = vst.msk [vmem:[#allocation2 + $0x30] sm:$0xff] %vm431, 0.0
          %439 = vst.msk [vmem:[#allocation2 + $0x38] sm:$0xff] %vm431, 0.0
          %440 = vst.msk [vmem:[#allocation2 + $0x40] sm:$0xff] %vm431, 0.0
          %441 = vst.msk [vmem:[#allocation2 + $0x48] sm:$0xff] %vm431, 0.0
          %442 = vst.msk [vmem:[#allocation2 + $0x50] sm:$0xff] %vm431, 0.0
          %443 = vst.msk [vmem:[#allocation2 + $0x58] sm:$0xff] %vm431, 0.0
          %444 = vst.msk [vmem:[#allocation2 + $0x60] sm:$0xff] %vm431, 0.0
          %445 = vst.msk [vmem:[#allocation2 + $0x68] sm:$0xff] %vm431, 0.0
          %446 = vst.msk [vmem:[#allocation2 + $0x70] sm:$0xff] %vm431, 0.0
          %447 = vst.msk [vmem:[#allocation2 + $0x78] sm:$0xff] %vm431, 0.0
          %448 = vst.msk [vmem:[#allocation2 + $0x80] sm:$0xff] %vm431, 0.0
          %449 = vst.msk [vmem:[#allocation2 + $0x88] sm:$0xff] %vm431, 0.0
          %450 = vst.msk [vmem:[#allocation2 + $0x90] sm:$0xff] %vm431, 0.0
          %451 = vst.msk [vmem:[#allocation2 + $0x98] sm:$0xff] %vm431, 0.0
          %452 = vst.msk [vmem:[#allocation2 + $0xa0] sm:$0xff] %vm431, 0.0
          %453 = vst.msk [vmem:[#allocation2 + $0xa8] sm:$0xff] %vm431, 0.0
          %454 = vst.msk [vmem:[#allocation2 + $0xb0] sm:$0xff] %vm431, 0.0
          %455 = vst.msk [vmem:[#allocation2 + $0xb8] sm:$0xff] %vm431, 0.0
          %456 = vst.msk [vmem:[#allocation2 + $0xc0] sm:$0xff] %vm431, 0.0
          %457 = vst.msk [vmem:[#allocation2 + $0xc8] sm:$0xff] %vm431, 0.0
          %458 = vst.msk [vmem:[#allocation2 + $0xd0] sm:$0xff] %vm431, 0.0
          %459 = vst.msk [vmem:[#allocation2 + $0xd8] sm:$0xff] %vm431, 0.0
          %460 = vst.msk [vmem:[#allocation2 + $0xe0] sm:$0xff] %vm431, 0.0
          %461 = vst.msk [vmem:[#allocation2 + $0xe8] sm:$0xff] %vm431, 0.0
          %462 = vst.msk [vmem:[#allocation2 + $0xf0] sm:$0xff] %vm431, 0.0
          %463 = vst.msk [vmem:[#allocation2 + $0xf8] sm:$0xff] %vm431, 0.0
        $region68: #{fpnn_v4_forward.1} parent=47 // pred_fallthru
          _
        %v464 = vld [vmem:[#allocation2] sm:$0xff]
        %v465 = vld [vmem:[#allocation2 + $0x8] sm:$0xff]
        %v466 = vld [vmem:[#allocation2 + $0x10] sm:$0xff]
        %v467 = vld [vmem:[#allocation2 + $0x18] sm:$0xff]
        %v468 = vld [vmem:[#allocation2 + $0x20] sm:$0xff]
        %v469 = vld [vmem:[#allocation2 + $0x28] sm:$0xff]
        %v470 = vld [vmem:[#allocation2 + $0x30] sm:$0xff]
        %v471 = vld [vmem:[#allocation2 + $0x38] sm:$0xff]
        %v472 = vld [vmem:[#allocation2 + $0x40] sm:$0xff]
        %v473 = vld [vmem:[#allocation2 + $0x48] sm:$0xff]
        %v474 = vld [vmem:[#allocation2 + $0x50] sm:$0xff]
        %v475 = vld [vmem:[#allocation2 + $0x58] sm:$0xff]
        %v476 = vld [vmem:[#allocation2 + $0x60] sm:$0xff]
        %v477 = vld [vmem:[#allocation2 + $0x68] sm:$0xff]
        %v478 = vld [vmem:[#allocation2 + $0x70] sm:$0xff]
        %v479 = vld [vmem:[#allocation2 + $0x78] sm:$0xff]
        %v480 = vld [vmem:[#allocation2 + $0x80] sm:$0xff]
        %v481 = vld [vmem:[#allocation2 + $0x88] sm:$0xff]
        %v482 = vld [vmem:[#allocation2 + $0x90] sm:$0xff]
        %v483 = vld [vmem:[#allocation2 + $0x98] sm:$0xff]
        %v484 = vld [vmem:[#allocation2 + $0xa0] sm:$0xff]
        %v485 = vld [vmem:[#allocation2 + $0xa8] sm:$0xff]
        %v486 = vld [vmem:[#allocation2 + $0xb0] sm:$0xff]
        %v487 = vld [vmem:[#allocation2 + $0xb8] sm:$0xff]
        %v488 = vld [vmem:[#allocation2 + $0xc0] sm:$0xff]
        %v489 = vld [vmem:[#allocation2 + $0xc8] sm:$0xff]
        %v490 = vld [vmem:[#allocation2 + $0xd0] sm:$0xff]
        %v491 = vld [vmem:[#allocation2 + $0xd8] sm:$0xff]
        %v492 = vld [vmem:[#allocation2 + $0xe0] sm:$0xff]
        %v493 = vld [vmem:[#allocation2 + $0xe8] sm:$0xff]
        %v494 = vld [vmem:[#allocation2 + $0xf0] sm:$0xff]
        %v495 = vld [vmem:[#allocation2 + $0xf8] sm:$0xff]
        %v496 = vld [vmem:[%s345] sm:$0xff]
        %v497 = vld [vmem:[%s345 + $0x8] sm:$0xff]
        %v498 = vld [vmem:[%s345 + $0x10] sm:$0xff]
        %v499 = vld [vmem:[%s345 + $0x18] sm:$0xff]
        %v500 = vld [vmem:[%s345 + $0x20] sm:$0xff]
        %v501 = vld [vmem:[%s345 + $0x28] sm:$0xff]
        %v502 = vld [vmem:[%s345 + $0x30] sm:$0xff]
        %v503 = vld [vmem:[%s345 + $0x38] sm:$0xff]
        %v504 = vld [vmem:[%s345 + $0x40] sm:$0xff]
        %v505 = vld [vmem:[%s345 + $0x48] sm:$0xff]
        %v506 = vld [vmem:[%s345 + $0x50] sm:$0xff]
        %v507 = vld [vmem:[%s345 + $0x58] sm:$0xff]
        %v508 = vld [vmem:[%s345 + $0x60] sm:$0xff]
        %v509 = vld [vmem:[%s345 + $0x68] sm:$0xff]
        %v510 = vld [vmem:[%s345 + $0x70] sm:$0xff]
        %v511 = vld [vmem:[%s345 + $0x78] sm:$0xff]
        %v512 = vld [vmem:[%s345 + $0x80] sm:$0xff]
        %v513 = vld [vmem:[%s345 + $0x88] sm:$0xff]
        %v514 = vld [vmem:[%s345 + $0x90] sm:$0xff]
        %v515 = vld [vmem:[%s345 + $0x98] sm:$0xff]
        %v516 = vld [vmem:[%s345 + $0xa0] sm:$0xff]
        %v517 = vld [vmem:[%s345 + $0xa8] sm:$0xff]
        %v518 = vld [vmem:[%s345 + $0xb0] sm:$0xff]
        %v519 = vld [vmem:[%s345 + $0xb8] sm:$0xff]
        %v520 = vld [vmem:[%s345 + $0xc0] sm:$0xff]
        %v521 = vld [vmem:[%s345 + $0xc8] sm:$0xff]
        %v522 = vld [vmem:[%s345 + $0xd0] sm:$0xff]
        %v523 = vld [vmem:[%s345 + $0xd8] sm:$0xff]
        %v524 = vld [vmem:[%s345 + $0xe0] sm:$0xff]
        %v525 = vld [vmem:[%s345 + $0xe8] sm:$0xff]
        %v526 = vld [vmem:[%s345 + $0xf0] sm:$0xff]
        %v527 = vld [vmem:[%s345 + $0xf8] sm:$0xff]
        %v528 = vld [vmem:[%s345 + $0x100] sm:$0xff]
        %v529 = vld [vmem:[%s345 + $0x108] sm:$0xff]
        %v530 = vld [vmem:[%s345 + $0x110] sm:$0xff]
        %v531 = vld [vmem:[%s345 + $0x118] sm:$0xff]
        %v532 = vld [vmem:[%s345 + $0x120] sm:$0xff]
        %v533 = vld [vmem:[%s345 + $0x128] sm:$0xff]
        %v534 = vld [vmem:[%s345 + $0x130] sm:$0xff]
        %v535 = vld [vmem:[%s345 + $0x138] sm:$0xff]
        %v536 = vld [vmem:[%s345 + $0x140] sm:$0xff]
        %v537 = vld [vmem:[%s345 + $0x148] sm:$0xff]
        %v538 = vld [vmem:[%s345 + $0x150] sm:$0xff]
        %v539 = vld [vmem:[%s345 + $0x158] sm:$0xff]
        %v540 = vld [vmem:[%s345 + $0x160] sm:$0xff]
        %v541 = vld [vmem:[%s345 + $0x168] sm:$0xff]
        %v542 = vld [vmem:[%s345 + $0x170] sm:$0xff]
        %v543 = vld [vmem:[%s345 + $0x178] sm:$0xff]
        %v544 = vld [vmem:[%s345 + $0x180] sm:$0xff]
        %v545 = vld [vmem:[%s345 + $0x188] sm:$0xff]
        %v546 = vld [vmem:[%s345 + $0x190] sm:$0xff]
        %v547 = vld [vmem:[%s345 + $0x198] sm:$0xff]
        %v548 = vld [vmem:[%s345 + $0x1a0] sm:$0xff]
        %v549 = vld [vmem:[%s345 + $0x1a8] sm:$0xff]
        %v550 = vld [vmem:[%s345 + $0x1b0] sm:$0xff]
        %v551 = vld [vmem:[%s345 + $0x1b8] sm:$0xff]
        %v552 = vld [vmem:[%s345 + $0x1c0] sm:$0xff]
        %v553 = vld [vmem:[%s345 + $0x1c8] sm:$0xff]
        %v554 = vld [vmem:[%s345 + $0x1d0] sm:$0xff]
        %v555 = vld [vmem:[%s345 + $0x1d8] sm:$0xff]
        %v556 = vld [vmem:[%s345 + $0x1e0] sm:$0xff]
        %v557 = vld [vmem:[%s345 + $0x1e8] sm:$0xff]
        %v558 = vld [vmem:[%s345 + $0x1f0] sm:$0xff]
        %v559 = vld [vmem:[%s345 + $0x1f8] sm:$0xff]
        %v560 = vld [vmem:[%s413] sm:$0xf]
        %v561 = vld [vmem:[%s413 + $0x4] sm:$0xf]
        %v562 = vld [vmem:[%s413 + $0x8] sm:$0xf]
        %v563 = vld [vmem:[%s413 + $0xc] sm:$0xf]
        %v564 = vld [vmem:[%s413 + $0x10] sm:$0xf]
        %v565 = vld [vmem:[%s413 + $0x14] sm:$0xf]
        %v566 = vld [vmem:[%s413 + $0x18] sm:$0xf]
        %v567 = vld [vmem:[%s413 + $0x1c] sm:$0xf]
        %v568 = vld [vmem:[%s413 + $0x20] sm:$0xf]
        %v569 = vld [vmem:[%s413 + $0x24] sm:$0xf]
        %v570 = vld [vmem:[%s413 + $0x28] sm:$0xf]
        %v571 = vld [vmem:[%s413 + $0x2c] sm:$0xf]
        %v572 = vld [vmem:[%s413 + $0x30] sm:$0xf]
        %v573 = vld [vmem:[%s413 + $0x34] sm:$0xf]
        %v574 = vld [vmem:[%s413 + $0x38] sm:$0xf]
        %v575 = vld [vmem:[%s413 + $0x3c] sm:$0xf]
        %v576 = vld [vmem:[%s413 + $0x40] sm:$0xf]
        %v577 = vld [vmem:[%s413 + $0x44] sm:$0xf]
        %v578 = vld [vmem:[%s413 + $0x48] sm:$0xf]
        %v579 = vld [vmem:[%s413 + $0x4c] sm:$0xf]
        %v580 = vld [vmem:[%s413 + $0x50] sm:$0xf]
        %v581 = vld [vmem:[%s413 + $0x54] sm:$0xf]
        %v582 = vld [vmem:[%s413 + $0x58] sm:$0xf]
        %v583 = vld [vmem:[%s413 + $0x5c] sm:$0xf]
        %v584 = vld [vmem:[%s413 + $0x60] sm:$0xf]
        %v585 = vld [vmem:[%s413 + $0x64] sm:$0xf]
        %v586 = vld [vmem:[%s413 + $0x68] sm:$0xf]
        %v587 = vld [vmem:[%s413 + $0x6c] sm:$0xf]
        %v588 = vld [vmem:[%s413 + $0x70] sm:$0xf]
        %v589 = vld [vmem:[%s413 + $0x74] sm:$0xf]
        %v590 = vld [vmem:[%s413 + $0x78] sm:$0xf]
        %v591 = vld [vmem:[%s413 + $0x7c] sm:$0xf]
        %v592 = vld [vmem:[%s413 + $0x80] sm:$0xf]
        %v593 = vld [vmem:[%s413 + $0x84] sm:$0xf]
        %v594 = vld [vmem:[%s413 + $0x88] sm:$0xf]
        %v595 = vld [vmem:[%s413 + $0x8c] sm:$0xf]
        %v596 = vld [vmem:[%s413 + $0x90] sm:$0xf]
        %v597 = vld [vmem:[%s413 + $0x94] sm:$0xf]
        %v598 = vld [vmem:[%s413 + $0x98] sm:$0xf]
        %v599 = vld [vmem:[%s413 + $0x9c] sm:$0xf]
        %v600 = vld [vmem:[%s413 + $0xa0] sm:$0xf]
        %v601 = vld [vmem:[%s413 + $0xa4] sm:$0xf]
        %v602 = vld [vmem:[%s413 + $0xa8] sm:$0xf]
        %v603 = vld [vmem:[%s413 + $0xac] sm:$0xf]
        %v604 = vld [vmem:[%s413 + $0xb0] sm:$0xf]
        %v605 = vld [vmem:[%s413 + $0xb4] sm:$0xf]
        %v606 = vld [vmem:[%s413 + $0xb8] sm:$0xf]
        %v607 = vld [vmem:[%s413 + $0xbc] sm:$0xf]
        %v608 = vld [vmem:[%s413 + $0xc0] sm:$0xf]
        %v609 = vld [vmem:[%s413 + $0xc4] sm:$0xf]
        %v610 = vld [vmem:[%s413 + $0xc8] sm:$0xf]
        %v611 = vld [vmem:[%s413 + $0xcc] sm:$0xf]
        %v612 = vld [vmem:[%s413 + $0xd0] sm:$0xf]
        %v613 = vld [vmem:[%s413 + $0xd4] sm:$0xf]
        %v614 = vld [vmem:[%s413 + $0xd8] sm:$0xf]
        %v615 = vld [vmem:[%s413 + $0xdc] sm:$0xf]
        %v616 = vld [vmem:[%s413 + $0xe0] sm:$0xf]
        %v617 = vld [vmem:[%s413 + $0xe4] sm:$0xf]
        %v618 = vld [vmem:[%s413 + $0xe8] sm:$0xf]
        %v619 = vld [vmem:[%s413 + $0xec] sm:$0xf]
        %v620 = vld [vmem:[%s413 + $0xf0] sm:$0xf]
        %v621 = vld [vmem:[%s413 + $0xf4] sm:$0xf]
        %v622 = vld [vmem:[%s413 + $0xf8] sm:$0xf]
        %v623 = vld [vmem:[%s413 + $0xfc] sm:$0xf]
        %v688 = vunpack.c.l.b16 %v496
        %v689 = vunpack.c.h.b16 %v496
        %v690 = vunpack.c.l.b16 %v497
        %v691 = vunpack.c.h.b16 %v497
        %v692 = vunpack.c.l.b16 %v498
        %v693 = vunpack.c.h.b16 %v498
        %v694 = vunpack.c.l.b16 %v499
        %v695 = vunpack.c.h.b16 %v499
        %v696 = vunpack.c.l.b16 %v500
        %v697 = vunpack.c.h.b16 %v500
        %v698 = vunpack.c.l.b16 %v501
        %v699 = vunpack.c.h.b16 %v501
        %v700 = vunpack.c.l.b16 %v502
        %v701 = vunpack.c.h.b16 %v502
        %v702 = vunpack.c.l.b16 %v503
        %v703 = vunpack.c.h.b16 %v503
        %v704 = vunpack.c.l.b16 %v504
        %v705 = vunpack.c.h.b16 %v504
        %v706 = vunpack.c.l.b16 %v505
        %v707 = vunpack.c.h.b16 %v505
        %v708 = vunpack.c.l.b16 %v506
        %v709 = vunpack.c.h.b16 %v506
        %v710 = vunpack.c.l.b16 %v507
        %v711 = vunpack.c.h.b16 %v507
        %v712 = vunpack.c.l.b16 %v508
        %v713 = vunpack.c.h.b16 %v508
        %v714 = vunpack.c.l.b16 %v509
        %v715 = vunpack.c.h.b16 %v509
        %v716 = vunpack.c.l.b16 %v510
        %v717 = vunpack.c.h.b16 %v510
        %v718 = vunpack.c.l.b16 %v511
        %v719 = vunpack.c.h.b16 %v511
        %v720 = vunpack.c.l.b16 %v512
        %v721 = vunpack.c.h.b16 %v512
        %v722 = vunpack.c.l.b16 %v513
        %v723 = vunpack.c.h.b16 %v513
        %v724 = vunpack.c.l.b16 %v514
        %v725 = vunpack.c.h.b16 %v514
        %v726 = vunpack.c.l.b16 %v515
        %v727 = vunpack.c.h.b16 %v515
        %v728 = vunpack.c.l.b16 %v516
        %v729 = vunpack.c.h.b16 %v516
        %v730 = vunpack.c.l.b16 %v517
        %v731 = vunpack.c.h.b16 %v517
        %v732 = vunpack.c.l.b16 %v518
        %v733 = vunpack.c.h.b16 %v518
        %v734 = vunpack.c.l.b16 %v519
        %v735 = vunpack.c.h.b16 %v519
        %v736 = vunpack.c.l.b16 %v520
        %v737 = vunpack.c.h.b16 %v520
        %v738 = vunpack.c.l.b16 %v521
        %v739 = vunpack.c.h.b16 %v521
        %v740 = vunpack.c.l.b16 %v522
        %v741 = vunpack.c.h.b16 %v522
        %v742 = vunpack.c.l.b16 %v523
        %v743 = vunpack.c.h.b16 %v523
        %v744 = vunpack.c.l.b16 %v524
        %v745 = vunpack.c.h.b16 %v524
        %v746 = vunpack.c.l.b16 %v525
        %v747 = vunpack.c.h.b16 %v525
        %v748 = vunpack.c.l.b16 %v526
        %v749 = vunpack.c.h.b16 %v526
        %v750 = vunpack.c.l.b16 %v527
        %v751 = vunpack.c.h.b16 %v527
        %v752 = vunpack.c.l.b16 %v528
        %v753 = vunpack.c.h.b16 %v528
        %v754 = vunpack.c.l.b16 %v529
        %v755 = vunpack.c.h.b16 %v529
        %v756 = vunpack.c.l.b16 %v530
        %v757 = vunpack.c.h.b16 %v530
        %v758 = vunpack.c.l.b16 %v531
        %v759 = vunpack.c.h.b16 %v531
        %v760 = vunpack.c.l.b16 %v532
        %v761 = vunpack.c.h.b16 %v532
        %v762 = vunpack.c.l.b16 %v533
        %v763 = vunpack.c.h.b16 %v533
        %v764 = vunpack.c.l.b16 %v534
        %v765 = vunpack.c.h.b16 %v534
        %v766 = vunpack.c.l.b16 %v535
        %v767 = vunpack.c.h.b16 %v535
        %v768 = vunpack.c.l.b16 %v536
        %v769 = vunpack.c.h.b16 %v536
        %v770 = vunpack.c.l.b16 %v537
        %v771 = vunpack.c.h.b16 %v537
        %v772 = vunpack.c.l.b16 %v538
        %v773 = vunpack.c.h.b16 %v538
        %v774 = vunpack.c.l.b16 %v539
        %v775 = vunpack.c.h.b16 %v539
        %v776 = vunpack.c.l.b16 %v540
        %v777 = vunpack.c.h.b16 %v540
        %v778 = vunpack.c.l.b16 %v541
        %v779 = vunpack.c.h.b16 %v541
        %v780 = vunpack.c.l.b16 %v542
        %v781 = vunpack.c.h.b16 %v542
        %v782 = vunpack.c.l.b16 %v543
        %v783 = vunpack.c.h.b16 %v543
        %v784 = vunpack.c.l.b16 %v544
        %v785 = vunpack.c.h.b16 %v544
        %v786 = vunpack.c.l.b16 %v545
        %v787 = vunpack.c.h.b16 %v545
        %v788 = vunpack.c.l.b16 %v546
        %v789 = vunpack.c.h.b16 %v546
        %v790 = vunpack.c.l.b16 %v547
        %v791 = vunpack.c.h.b16 %v547
        %v792 = vunpack.c.l.b16 %v548
        %v793 = vunpack.c.h.b16 %v548
        %v794 = vunpack.c.l.b16 %v549
        %v795 = vunpack.c.h.b16 %v549
        %v796 = vunpack.c.l.b16 %v550
        %v797 = vunpack.c.h.b16 %v550
        %v798 = vunpack.c.l.b16 %v551
        %v799 = vunpack.c.h.b16 %v551
        %v800 = vunpack.c.l.b16 %v552
        %v801 = vunpack.c.h.b16 %v552
        %v802 = vunpack.c.l.b16 %v553
        %v803 = vunpack.c.h.b16 %v553
        %v804 = vunpack.c.l.b16 %v554
        %v805 = vunpack.c.h.b16 %v554
        %v806 = vunpack.c.l.b16 %v555
        %v807 = vunpack.c.h.b16 %v555
        %v808 = vunpack.c.l.b16 %v556
        %v809 = vunpack.c.h.b16 %v556
        %v810 = vunpack.c.l.b16 %v557
        %v811 = vunpack.c.h.b16 %v557
        %v812 = vunpack.c.l.b16 %v558
        %v813 = vunpack.c.h.b16 %v558
        %v814 = vunpack.c.l.b16 %v559
        %v815 = vunpack.c.h.b16 %v559
        %v816 = vpack.c.b16 %v692, %v688
        %v817 = vpack.c.b16 %v693, %v689
        %v818 = vpack.c.b16 %v694, %v690
        %v819 = vpack.c.b16 %v695, %v691
        %v820 = vpack.c.b16 %v700, %v696
        %v821 = vpack.c.b16 %v701, %v697
        %v822 = vpack.c.b16 %v702, %v698
        %v823 = vpack.c.b16 %v703, %v699
        %v824 = vpack.c.b16 %v708, %v704
        %v825 = vpack.c.b16 %v709, %v705
        %v826 = vpack.c.b16 %v710, %v706
        %v827 = vpack.c.b16 %v711, %v707
        %v828 = vpack.c.b16 %v716, %v712
        %v829 = vpack.c.b16 %v717, %v713
        %v830 = vpack.c.b16 %v718, %v714
        %v831 = vpack.c.b16 %v719, %v715
        %v832 = vpack.c.b16 %v724, %v720
        %v833 = vpack.c.b16 %v725, %v721
        %v834 = vpack.c.b16 %v726, %v722
        %v835 = vpack.c.b16 %v727, %v723
        %v836 = vpack.c.b16 %v732, %v728
        %v837 = vpack.c.b16 %v733, %v729
        %v838 = vpack.c.b16 %v734, %v730
        %v839 = vpack.c.b16 %v735, %v731
        %v840 = vpack.c.b16 %v740, %v736
        %v841 = vpack.c.b16 %v741, %v737
        %v842 = vpack.c.b16 %v742, %v738
        %v843 = vpack.c.b16 %v743, %v739
        %v844 = vpack.c.b16 %v748, %v744
        %v845 = vpack.c.b16 %v749, %v745
        %v846 = vpack.c.b16 %v750, %v746
        %v847 = vpack.c.b16 %v751, %v747
        %v848 = vpack.c.b16 %v756, %v752
        %v849 = vpack.c.b16 %v757, %v753
        %v850 = vpack.c.b16 %v758, %v754
        %v851 = vpack.c.b16 %v759, %v755
        %v852 = vpack.c.b16 %v764, %v760
        %v853 = vpack.c.b16 %v765, %v761
        %v854 = vpack.c.b16 %v766, %v762
        %v855 = vpack.c.b16 %v767, %v763
        %v856 = vpack.c.b16 %v772, %v768
        %v857 = vpack.c.b16 %v773, %v769
        %v858 = vpack.c.b16 %v774, %v770
        %v859 = vpack.c.b16 %v775, %v771
        %v860 = vpack.c.b16 %v780, %v776
        %v861 = vpack.c.b16 %v781, %v777
        %v862 = vpack.c.b16 %v782, %v778
        %v863 = vpack.c.b16 %v783, %v779
        %v864 = vpack.c.b16 %v788, %v784
        %v865 = vpack.c.b16 %v789, %v785
        %v866 = vpack.c.b16 %v790, %v786
        %v867 = vpack.c.b16 %v791, %v787
        %v868 = vpack.c.b16 %v796, %v792
        %v869 = vpack.c.b16 %v797, %v793
        %v870 = vpack.c.b16 %v798, %v794
        %v871 = vpack.c.b16 %v799, %v795
        %v872 = vpack.c.b16 %v804, %v800
        %v873 = vpack.c.b16 %v805, %v801
        %v874 = vpack.c.b16 %v806, %v802
        %v875 = vpack.c.b16 %v807, %v803
        %v876 = vpack.c.b16 %v812, %v808
        %v877 = vpack.c.b16 %v813, %v809
        %v878 = vpack.c.b16 %v814, %v810
        %v879 = vpack.c.b16 %v815, %v811
        %v1008 = vunpack.c.l.b16 %v560
        %v1009 = vunpack.c.l.b16 %v561
        %v1010 = vunpack.c.l.b16 %v562
        %v1011 = vunpack.c.l.b16 %v563
        %v1012 = vunpack.c.l.b16 %v564
        %v1013 = vunpack.c.l.b16 %v565
        %v1014 = vunpack.c.l.b16 %v566
        %v1015 = vunpack.c.l.b16 %v567
        %v1016 = vunpack.c.l.b16 %v568
        %v1017 = vunpack.c.l.b16 %v569
        %v1018 = vunpack.c.l.b16 %v570
        %v1019 = vunpack.c.l.b16 %v571
        %v1020 = vunpack.c.l.b16 %v572
        %v1021 = vunpack.c.l.b16 %v573
        %v1022 = vunpack.c.l.b16 %v574
        %v1023 = vunpack.c.l.b16 %v575
        %v1024 = vunpack.c.l.b16 %v576
        %v1025 = vunpack.c.l.b16 %v577
        %v1026 = vunpack.c.l.b16 %v578
        %v1027 = vunpack.c.l.b16 %v579
        %v1028 = vunpack.c.l.b16 %v580
        %v1029 = vunpack.c.l.b16 %v581
        %v1030 = vunpack.c.l.b16 %v582
        %v1031 = vunpack.c.l.b16 %v583
        %v1032 = vunpack.c.l.b16 %v584
        %v1033 = vunpack.c.l.b16 %v585
        %v1034 = vunpack.c.l.b16 %v586
        %v1035 = vunpack.c.l.b16 %v587
        %v1036 = vunpack.c.l.b16 %v588
        %v1037 = vunpack.c.l.b16 %v589
        %v1038 = vunpack.c.l.b16 %v590
        %v1039 = vunpack.c.l.b16 %v591
        %v1040 = vunpack.c.l.b16 %v592
        %v1041 = vunpack.c.l.b16 %v593
        %v1042 = vunpack.c.l.b16 %v594
        %v1043 = vunpack.c.l.b16 %v595
        %v1044 = vunpack.c.l.b16 %v596
        %v1045 = vunpack.c.l.b16 %v597
        %v1046 = vunpack.c.l.b16 %v598
        %v1047 = vunpack.c.l.b16 %v599
        %v1048 = vunpack.c.l.b16 %v600
        %v1049 = vunpack.c.l.b16 %v601
        %v1050 = vunpack.c.l.b16 %v602
        %v1051 = vunpack.c.l.b16 %v603
        %v1052 = vunpack.c.l.b16 %v604
        %v1053 = vunpack.c.l.b16 %v605
        %v1054 = vunpack.c.l.b16 %v606
        %v1055 = vunpack.c.l.b16 %v607
        %v1056 = vunpack.c.l.b16 %v608
        %v1057 = vunpack.c.l.b16 %v609
        %v1058 = vunpack.c.l.b16 %v610
        %v1059 = vunpack.c.l.b16 %v611
        %v1060 = vunpack.c.l.b16 %v612
        %v1061 = vunpack.c.l.b16 %v613
        %v1062 = vunpack.c.l.b16 %v614
        %v1063 = vunpack.c.l.b16 %v615
        %v1064 = vunpack.c.l.b16 %v616
        %v1065 = vunpack.c.l.b16 %v617
        %v1066 = vunpack.c.l.b16 %v618
        %v1067 = vunpack.c.l.b16 %v619
        %v1068 = vunpack.c.l.b16 %v620
        %v1069 = vunpack.c.l.b16 %v621
        %v1070 = vunpack.c.l.b16 %v622
        %v1071 = vunpack.c.l.b16 %v623
        %v1072 = vpack.c.b16 %v1009, %v1008
        %v1073 = vpack.c.b16 %v1011, %v1010
        %v1074 = vpack.c.b16 %v1013, %v1012
        %v1075 = vpack.c.b16 %v1015, %v1014
        %v1076 = vpack.c.b16 %v1017, %v1016
        %v1077 = vpack.c.b16 %v1019, %v1018
        %v1078 = vpack.c.b16 %v1021, %v1020
        %v1079 = vpack.c.b16 %v1023, %v1022
        %v1080 = vpack.c.b16 %v1025, %v1024
        %v1081 = vpack.c.b16 %v1027, %v1026
        %v1082 = vpack.c.b16 %v1029, %v1028
        %v1083 = vpack.c.b16 %v1031, %v1030
        %v1084 = vpack.c.b16 %v1033, %v1032
        %v1085 = vpack.c.b16 %v1035, %v1034
        %v1086 = vpack.c.b16 %v1037, %v1036
        %v1087 = vpack.c.b16 %v1039, %v1038
        %v1088 = vpack.c.b16 %v1041, %v1040
        %v1089 = vpack.c.b16 %v1043, %v1042
        %v1090 = vpack.c.b16 %v1045, %v1044
        %v1091 = vpack.c.b16 %v1047, %v1046
        %v1092 = vpack.c.b16 %v1049, %v1048
        %v1093 = vpack.c.b16 %v1051, %v1050
        %v1094 = vpack.c.b16 %v1053, %v1052
        %v1095 = vpack.c.b16 %v1055, %v1054
        %v1096 = vpack.c.b16 %v1057, %v1056
        %v1097 = vpack.c.b16 %v1059, %v1058
        %v1098 = vpack.c.b16 %v1061, %v1060
        %v1099 = vpack.c.b16 %v1063, %v1062
        %v1100 = vpack.c.b16 %v1065, %v1064
        %v1101 = vpack.c.b16 %v1067, %v1066
        %v1102 = vpack.c.b16 %v1069, %v1068
        %v1103 = vpack.c.b16 %v1071, %v1070
        %1136 = vmatprep.subr.bf16.mxu0 0
        %1137 = vmatpush1.bf16.msra.mxu0 %v1072
        %1138 = vmatprep.subr.bf16.mxu0 0
        %1139 = vmatpush1.bf16.msra.mxu0 %v1073
        %1140 = vmatprep.subr.bf16.mxu0 0
        %1141 = vmatpush1.bf16.msra.mxu0 %v1074
        %1142 = vmatprep.subr.bf16.mxu0 0
        %1143 = vmatpush1.bf16.msra.mxu0 %v1075
        %1144 = vmatprep.subr.bf16.mxu0 0
        %1145 = vmatpush1.bf16.msra.mxu0 %v1076
        %1146 = vmatprep.subr.bf16.mxu0 0
        %1147 = vmatpush1.bf16.msra.mxu0 %v1077
        %1148 = vmatprep.subr.bf16.mxu0 0
        %1149 = vmatpush1.bf16.msra.mxu0 %v1078
        %1150 = vmatprep.subr.bf16.mxu0 0
        %1151 = vmatpush1.bf16.msra.mxu0 %v1079
        %1152 = vmatprep.subr.bf16.mxu0 0
        %1153 = vmatpush1.bf16.msra.mxu0 %v1080
        %1154 = vmatprep.subr.bf16.mxu0 0
        %1155 = vmatpush1.bf16.msra.mxu0 %v1081
        %1156 = vmatprep.subr.bf16.mxu0 0
        %1157 = vmatpush1.bf16.msra.mxu0 %v1082
        %1158 = vmatprep.subr.bf16.mxu0 0
        %1159 = vmatpush1.bf16.msra.mxu0 %v1083
        %1160 = vmatprep.subr.bf16.mxu0 0
        %1161 = vmatpush1.bf16.msra.mxu0 %v1084
        %1162 = vmatprep.subr.bf16.mxu0 0
        %1163 = vmatpush1.bf16.msra.mxu0 %v1085
        %1164 = vmatprep.subr.bf16.mxu0 0
        %1165 = vmatpush1.bf16.msra.mxu0 %v1086
        %1166 = vmatprep.subr.bf16.mxu0 0
        %1167 = vmatpush1.bf16.msra.mxu0 %v1087
        %1168 = vmatprep.mubr.bf16.mxu0 %v817
        %1169 = vmatmul.mubr.bf16.gmra.mrb[0].mxu0 %v816
        %v1170 = vpop.f32.mrb[0].mxu0
        %v1171 = vadd.f32 0.0, %v1170
        %v1172 = vpop.f32.mrb[0].mxu0
        %v1173 = vpop.f32.mrb[0].mxu0
        %v1174 = vadd.f32 0.0, %v1173
        %v1175 = vpop.f32.mrb[0].mxu0
        %1176 = vmatprep.mubr.bf16.mxu0 %v821
        %1177 = vmatmul.mubr.bf16.gmra.mrb[0].mxu0 %v820
        %v1178 = vpop.f32.mrb[0].mxu0
        %v1179 = vadd.f32 0.0, %v1178
        %v1180 = vpop.f32.mrb[0].mxu0
        %v1181 = vpop.f32.mrb[0].mxu0
        %v1182 = vadd.f32 0.0, %v1181
        %v1183 = vpop.f32.mrb[0].mxu0
        %1184 = vmatprep.mubr.bf16.mxu0 %v825
        %1185 = vmatmul.mubr.bf16.gmra.mrb[0].mxu0 %v824
        %v1186 = vpop.f32.mrb[0].mxu0
        %v1187 = vadd.f32 0.0, %v1186
        %v1188 = vpop.f32.mrb[0].mxu0
        %v1189 = vpop.f32.mrb[0].mxu0
        %v1190 = vadd.f32 0.0, %v1189
        %v1191 = vpop.f32.mrb[0].mxu0
        %1192 = vmatprep.mubr.bf16.mxu0 %v829
        %1193 = vmatmul.mubr.bf16.gmra.mrb[0].mxu0 %v828
        %v1194 = vpop.f32.mrb[0].mxu0
        %v1195 = vadd.f32 0.0, %v1194
        %v1196 = vpop.f32.mrb[0].mxu0
        %v1197 = vpop.f32.mrb[0].mxu0
        %v1198 = vadd.f32 0.0, %v1197
        %v1199 = vpop.f32.mrb[0].mxu0
        %1200 = vmatprep.mubr.bf16.mxu0 %v833
        %1201 = vmatmul.mubr.bf16.gmra.mrb[0].mxu0 %v832
        %v1202 = vpop.f32.mrb[0].mxu0
        %v1203 = vadd.f32 0.0, %v1202
        %v1204 = vpop.f32.mrb[0].mxu0
        %v1205 = vpop.f32.mrb[0].mxu0
        %v1206 = vadd.f32 0.0, %v1205
        %v1207 = vpop.f32.mrb[0].mxu0
        %1208 = vmatprep.mubr.bf16.mxu0 %v837
        %1209 = vmatmul.mubr.bf16.gmra.mrb[0].mxu0 %v836
        %v1210 = vpop.f32.mrb[0].mxu0
        %v1211 = vadd.f32 0.0, %v1210
        %v1212 = vpop.f32.mrb[0].mxu0
        %v1213 = vpop.f32.mrb[0].mxu0
        %v1214 = vadd.f32 0.0, %v1213
        %v1215 = vpop.f32.mrb[0].mxu0
        %1216 = vmatprep.mubr.bf16.mxu0 %v841
        %1217 = vmatmul.mubr.bf16.gmra.mrb[0].mxu0 %v840
        %v1218 = vpop.f32.mrb[0].mxu0
        %v1219 = vadd.f32 0.0, %v1218
        %v1220 = vpop.f32.mrb[0].mxu0
        %v1221 = vpop.f32.mrb[0].mxu0
        %v1222 = vadd.f32 0.0, %v1221
        %v1223 = vpop.f32.mrb[0].mxu0
        %1224 = vmatprep.mubr.bf16.mxu0 %v845
        %1225 = vmatmul.mubr.bf16.gmra.mrb[0].mxu0 %v844
        %v1226 = vpop.f32.mrb[0].mxu0
        %v1227 = vadd.f32 0.0, %v1226
        %v1228 = vpop.f32.mrb[0].mxu0
        %v1229 = vpop.f32.mrb[0].mxu0
        %v1230 = vadd.f32 0.0, %v1229
        %v1231 = vpop.f32.mrb[0].mxu0
        %1232 = vmatprep.mubr.bf16.mxu0 %v849
        %1233 = vmatmul.mubr.bf16.gmra.mrb[0].mxu0 %v848
        %v1234 = vpop.f32.mrb[0].mxu0
        %v1235 = vadd.f32 0.0, %v1234
        %v1236 = vpop.f32.mrb[0].mxu0
        %v1237 = vpop.f32.mrb[0].mxu0
        %v1238 = vadd.f32 0.0, %v1237
        %v1239 = vpop.f32.mrb[0].mxu0
        %1240 = vmatprep.mubr.bf16.mxu0 %v853
        %1241 = vmatmul.mubr.bf16.gmra.mrb[0].mxu0 %v852
        %v1242 = vpop.f32.mrb[0].mxu0
        %v1243 = vadd.f32 0.0, %v1242
        %v1244 = vpop.f32.mrb[0].mxu0
        %v1245 = vpop.f32.mrb[0].mxu0
        %v1246 = vadd.f32 0.0, %v1245
        %v1247 = vpop.f32.mrb[0].mxu0
        %1248 = vmatprep.mubr.bf16.mxu0 %v857
        %1249 = vmatmul.mubr.bf16.gmra.mrb[0].mxu0 %v856
        %v1250 = vpop.f32.mrb[0].mxu0
        %v1251 = vadd.f32 0.0, %v1250
        %v1252 = vpop.f32.mrb[0].mxu0
        %v1253 = vpop.f32.mrb[0].mxu0
        %v1254 = vadd.f32 0.0, %v1253
        %v1255 = vpop.f32.mrb[0].mxu0
        %1256 = vmatprep.mubr.bf16.mxu0 %v861
        %1257 = vmatmul.mubr.bf16.gmra.mrb[0].mxu0 %v860
        %v1258 = vpop.f32.mrb[0].mxu0
        %v1259 = vadd.f32 0.0, %v1258
        %v1260 = vpop.f32.mrb[0].mxu0
        %v1261 = vpop.f32.mrb[0].mxu0
        %v1262 = vadd.f32 0.0, %v1261
        %v1263 = vpop.f32.mrb[0].mxu0
        %1264 = vmatprep.mubr.bf16.mxu0 %v865
        %1265 = vmatmul.mubr.bf16.gmra.mrb[0].mxu0 %v864
        %v1266 = vpop.f32.mrb[0].mxu0
        %v1267 = vadd.f32 0.0, %v1266
        %v1268 = vpop.f32.mrb[0].mxu0
        %v1269 = vpop.f32.mrb[0].mxu0
        %v1270 = vadd.f32 0.0, %v1269
        %v1271 = vpop.f32.mrb[0].mxu0
        %1272 = vmatprep.mubr.bf16.mxu0 %v869
        %1273 = vmatmul.mubr.bf16.gmra.mrb[0].mxu0 %v868
        %v1274 = vpop.f32.mrb[0].mxu0
        %v1275 = vadd.f32 0.0, %v1274
        %v1276 = vpop.f32.mrb[0].mxu0
        %v1277 = vpop.f32.mrb[0].mxu0
        %v1278 = vadd.f32 0.0, %v1277
        %v1279 = vpop.f32.mrb[0].mxu0
        %1280 = vmatprep.mubr.bf16.mxu0 %v873
        %1281 = vmatmul.mubr.bf16.gmra.mrb[0].mxu0 %v872
        %v1282 = vpop.f32.mrb[0].mxu0
        %v1283 = vadd.f32 0.0, %v1282
        %v1284 = vpop.f32.mrb[0].mxu0
        %v1285 = vpop.f32.mrb[0].mxu0
        %v1286 = vadd.f32 0.0, %v1285
        %v1287 = vpop.f32.mrb[0].mxu0
        %1288 = vmatprep.mubr.bf16.mxu0 %v877
        %1289 = vmatmul.mubr.bf16.gmra.mrb[0].mxu0 %v876
        %v1290 = vpop.f32.mrb[0].mxu0
        %v1291 = vadd.f32 0.0, %v1290
        %v1292 = vpop.f32.mrb[0].mxu0
        %v1293 = vpop.f32.mrb[0].mxu0
        %v1294 = vadd.f32 0.0, %v1293
        %v1295 = vpop.f32.mrb[0].mxu0
        %1296 = vdwg.mxu0
        %1297 = vmatprep.subr.bf16.mxu0 0
        %1298 = vmatpush1.bf16.msra.mxu0 %v1088
        %1299 = vmatprep.subr.bf16.mxu0 0
        %1300 = vmatpush1.bf16.msra.mxu0 %v1089
        %1301 = vmatprep.subr.bf16.mxu0 0
        %1302 = vmatpush1.bf16.msra.mxu0 %v1090
        %1303 = vmatprep.subr.bf16.mxu0 0
        %1304 = vmatpush1.bf16.msra.mxu0 %v1091
        %1305 = vmatprep.subr.bf16.mxu0 0
        %1306 = vmatpush1.bf16.msra.mxu0 %v1092
        %1307 = vmatprep.subr.bf16.mxu0 0
        %1308 = vmatpush1.bf16.msra.mxu0 %v1093
        %1309 = vmatprep.subr.bf16.mxu0 0
        %1310 = vmatpush1.bf16.msra.mxu0 %v1094
        %1311 = vmatprep.subr.bf16.mxu0 0
        %1312 = vmatpush1.bf16.msra.mxu0 %v1095
        %1313 = vmatprep.subr.bf16.mxu0 0
        %1314 = vmatpush1.bf16.msra.mxu0 %v1096
        %1315 = vmatprep.subr.bf16.mxu0 0
        %1316 = vmatpush1.bf16.msra.mxu0 %v1097
        %1317 = vmatprep.subr.bf16.mxu0 0
        %1318 = vmatpush1.bf16.msra.mxu0 %v1098
        %1319 = vmatprep.subr.bf16.mxu0 0
        %1320 = vmatpush1.bf16.msra.mxu0 %v1099
        %1321 = vmatprep.subr.bf16.mxu0 0
        %1322 = vmatpush1.bf16.msra.mxu0 %v1100
        %1323 = vmatprep.subr.bf16.mxu0 0
        %1324 = vmatpush1.bf16.msra.mxu0 %v1101
        %1325 = vmatprep.subr.bf16.mxu0 0
        %1326 = vmatpush1.bf16.msra.mxu0 %v1102
        %1327 = vmatprep.subr.bf16.mxu0 0
        %1328 = vmatpush1.bf16.msra.mxu0 %v1103
        %1329 = vmatprep.mubr.bf16.mxu0 %v819
        %1330 = vmatmul.mubr.bf16.gmra.mrb[0].mxu0 %v818
        %v1331 = vpop.f32.mrb[0].mxu0
        %v1332 = vadd.f32 %v1171, %v1331
        %v1333 = vpop.f32.mrb[0].mxu0
        %v1334 = vpop.f32.mrb[0].mxu0
        %v1335 = vadd.f32 %v1174, %v1334
        %v1336 = vpop.f32.mrb[0].mxu0
        %1337 = vmatprep.mubr.bf16.mxu0 %v823
        %1338 = vmatmul.mubr.bf16.gmra.mrb[0].mxu0 %v822
        %v1339 = vpop.f32.mrb[0].mxu0
        %v1340 = vadd.f32 %v1179, %v1339
        %v1341 = vpop.f32.mrb[0].mxu0
        %v1342 = vpop.f32.mrb[0].mxu0
        %v1343 = vadd.f32 %v1182, %v1342
        %v1344 = vpop.f32.mrb[0].mxu0
        %1345 = vmatprep.mubr.bf16.mxu0 %v827
        %1346 = vmatmul.mubr.bf16.gmra.mrb[0].mxu0 %v826
        %v1347 = vpop.f32.mrb[0].mxu0
        %v1348 = vadd.f32 %v1187, %v1347
        %v1349 = vpop.f32.mrb[0].mxu0
        %v1350 = vpop.f32.mrb[0].mxu0
        %v1351 = vadd.f32 %v1190, %v1350
        %v1352 = vpop.f32.mrb[0].mxu0
        %1353 = vmatprep.mubr.bf16.mxu0 %v831
        %1354 = vmatmul.mubr.bf16.gmra.mrb[0].mxu0 %v830
        %v1355 = vpop.f32.mrb[0].mxu0
        %v1356 = vadd.f32 %v1195, %v1355
        %v1357 = vpop.f32.mrb[0].mxu0
        %v1358 = vpop.f32.mrb[0].mxu0
        %v1359 = vadd.f32 %v1198, %v1358
        %v1360 = vpop.f32.mrb[0].mxu0
        %1361 = vmatprep.mubr.bf16.mxu0 %v835
        %1362 = vmatmul.mubr.bf16.gmra.mrb[0].mxu0 %v834
        %v1363 = vpop.f32.mrb[0].mxu0
        %v1364 = vadd.f32 %v1203, %v1363
        %v1365 = vpop.f32.mrb[0].mxu0
        %v1366 = vpop.f32.mrb[0].mxu0
        %v1367 = vadd.f32 %v1206, %v1366
        %v1368 = vpop.f32.mrb[0].mxu0
        %1369 = vmatprep.mubr.bf16.mxu0 %v839
        %1370 = vmatmul.mubr.bf16.gmra.mrb[0].mxu0 %v838
        %v1371 = vpop.f32.mrb[0].mxu0
        %v1372 = vadd.f32 %v1211, %v1371
        %v1373 = vpop.f32.mrb[0].mxu0
        %v1374 = vpop.f32.mrb[0].mxu0
        %v1375 = vadd.f32 %v1214, %v1374
        %v1376 = vpop.f32.mrb[0].mxu0
        %1377 = vmatprep.mubr.bf16.mxu0 %v843
        %1378 = vmatmul.mubr.bf16.gmra.mrb[0].mxu0 %v842
        %v1379 = vpop.f32.mrb[0].mxu0
        %v1380 = vadd.f32 %v1219, %v1379
        %v1381 = vpop.f32.mrb[0].mxu0
        %v1382 = vpop.f32.mrb[0].mxu0
        %v1383 = vadd.f32 %v1222, %v1382
        %v1384 = vpop.f32.mrb[0].mxu0
        %1385 = vmatprep.mubr.bf16.mxu0 %v847
        %1386 = vmatmul.mubr.bf16.gmra.mrb[0].mxu0 %v846
        %v1387 = vpop.f32.mrb[0].mxu0
        %v1388 = vadd.f32 %v1227, %v1387
        %v1389 = vpop.f32.mrb[0].mxu0
        %v1390 = vpop.f32.mrb[0].mxu0
        %v1391 = vadd.f32 %v1230, %v1390
        %v1392 = vpop.f32.mrb[0].mxu0
        %1393 = vmatprep.mubr.bf16.mxu0 %v851
        %1394 = vmatmul.mubr.bf16.gmra.mrb[0].mxu0 %v850
        %v1395 = vpop.f32.mrb[0].mxu0
        %v1396 = vadd.f32 %v1235, %v1395
        %v1397 = vpop.f32.mrb[0].mxu0
        %v1398 = vpop.f32.mrb[0].mxu0
        %v1399 = vadd.f32 %v1238, %v1398
        %v1400 = vpop.f32.mrb[0].mxu0
        %1401 = vmatprep.mubr.bf16.mxu0 %v855
        %1402 = vmatmul.mubr.bf16.gmra.mrb[0].mxu0 %v854
        %v1403 = vpop.f32.mrb[0].mxu0
        %v1404 = vadd.f32 %v1243, %v1403
        %v1405 = vpop.f32.mrb[0].mxu0
        %v1406 = vpop.f32.mrb[0].mxu0
        %v1407 = vadd.f32 %v1246, %v1406
        %v1408 = vpop.f32.mrb[0].mxu0
        %1409 = vmatprep.mubr.bf16.mxu0 %v859
        %1410 = vmatmul.mubr.bf16.gmra.mrb[0].mxu0 %v858
        %v1411 = vpop.f32.mrb[0].mxu0
        %v1412 = vadd.f32 %v1251, %v1411
        %v1413 = vpop.f32.mrb[0].mxu0
        %v1414 = vpop.f32.mrb[0].mxu0
        %v1415 = vadd.f32 %v1254, %v1414
        %v1416 = vpop.f32.mrb[0].mxu0
        %1417 = vmatprep.mubr.bf16.mxu0 %v863
        %1418 = vmatmul.mubr.bf16.gmra.mrb[0].mxu0 %v862
        %v1419 = vpop.f32.mrb[0].mxu0
        %v1420 = vadd.f32 %v1259, %v1419
        %v1421 = vpop.f32.mrb[0].mxu0
        %v1422 = vpop.f32.mrb[0].mxu0
        %v1423 = vadd.f32 %v1262, %v1422
        %v1424 = vpop.f32.mrb[0].mxu0
        %1425 = vmatprep.mubr.bf16.mxu0 %v867
        %1426 = vmatmul.mubr.bf16.gmra.mrb[0].mxu0 %v866
        %v1427 = vpop.f32.mrb[0].mxu0
        %v1428 = vadd.f32 %v1267, %v1427
        %v1429 = vpop.f32.mrb[0].mxu0
        %v1430 = vpop.f32.mrb[0].mxu0
        %v1431 = vadd.f32 %v1270, %v1430
        %v1432 = vpop.f32.mrb[0].mxu0
        %1433 = vmatprep.mubr.bf16.mxu0 %v871
        %1434 = vmatmul.mubr.bf16.gmra.mrb[0].mxu0 %v870
        %v1435 = vpop.f32.mrb[0].mxu0
        %v1436 = vadd.f32 %v1275, %v1435
        %v1437 = vpop.f32.mrb[0].mxu0
        %v1438 = vpop.f32.mrb[0].mxu0
        %v1439 = vadd.f32 %v1278, %v1438
        %v1440 = vpop.f32.mrb[0].mxu0
        %1441 = vmatprep.mubr.bf16.mxu0 %v875
        %1442 = vmatmul.mubr.bf16.gmra.mrb[0].mxu0 %v874
        %v1443 = vpop.f32.mrb[0].mxu0
        %v1444 = vadd.f32 %v1283, %v1443
        %v1445 = vpop.f32.mrb[0].mxu0
        %v1446 = vpop.f32.mrb[0].mxu0
        %v1447 = vadd.f32 %v1286, %v1446
        %v1448 = vpop.f32.mrb[0].mxu0
        %1449 = vmatprep.mubr.bf16.mxu0 %v879
        %1450 = vmatmul.mubr.bf16.gmra.mrb[0].mxu0 %v878
        %v1451 = vpop.f32.mrb[0].mxu0
        %v1452 = vadd.f32 %v1291, %v1451
        %v1453 = vpop.f32.mrb[0].mxu0
        %v1454 = vpop.f32.mrb[0].mxu0
        %v1455 = vadd.f32 %v1294, %v1454
        %v1456 = vpop.f32.mrb[0].mxu0
        %1457 = vdwg.mxu0
        %v1458 = vadd.f32 %v464, %v1332
        %v1459 = vadd.f32 %v465, %v1335
        %v1460 = vadd.f32 %v466, %v1340
        %v1461 = vadd.f32 %v467, %v1343
        %v1462 = vadd.f32 %v468, %v1348
        %v1463 = vadd.f32 %v469, %v1351
        %v1464 = vadd.f32 %v470, %v1356
        %v1465 = vadd.f32 %v471, %v1359
        %v1466 = vadd.f32 %v472, %v1364
        %v1467 = vadd.f32 %v473, %v1367
        %v1468 = vadd.f32 %v474, %v1372
        %v1469 = vadd.f32 %v475, %v1375
        %v1470 = vadd.f32 %v476, %v1380
        %v1471 = vadd.f32 %v477, %v1383
        %v1472 = vadd.f32 %v478, %v1388
        %v1473 = vadd.f32 %v479, %v1391
        %v1474 = vadd.f32 %v480, %v1396
        %v1475 = vadd.f32 %v481, %v1399
        %v1476 = vadd.f32 %v482, %v1404
        %v1477 = vadd.f32 %v483, %v1407
        %v1478 = vadd.f32 %v484, %v1412
        %v1479 = vadd.f32 %v485, %v1415
        %v1480 = vadd.f32 %v486, %v1420
        %v1481 = vadd.f32 %v487, %v1423
        %v1482 = vadd.f32 %v488, %v1428
        %v1483 = vadd.f32 %v489, %v1431
        %v1484 = vadd.f32 %v490, %v1436
        %v1485 = vadd.f32 %v491, %v1439
        %v1486 = vadd.f32 %v492, %v1444
        %v1487 = vadd.f32 %v493, %v1447
        %v1488 = vadd.f32 %v494, %v1452
        %v1489 = vadd.f32 %v495, %v1455
        %vm1490 = vcmask 72704
        %1491 = vst.msk [vmem:[#allocation2] sm:$0xff] %vm1490, %v1458
        %1492 = vst.msk [vmem:[#allocation2 + $0x8] sm:$0xff] %vm1490, %v1459
        %1493 = vst.msk [vmem:[#allocation2 + $0x10] sm:$0xff] %vm1490, %v1460
        %1494 = vst.msk [vmem:[#allocation2 + $0x18] sm:$0xff] %vm1490, %v1461
        %1495 = vst.msk [vmem:[#allocation2 + $0x20] sm:$0xff] %vm1490, %v1462
        %1496 = vst.msk [vmem:[#allocation2 + $0x28] sm:$0xff] %vm1490, %v1463
        %1497 = vst.msk [vmem:[#allocation2 + $0x30] sm:$0xff] %vm1490, %v1464
        %1498 = vst.msk [vmem:[#allocation2 + $0x38] sm:$0xff] %vm1490, %v1465
        %1499 = vst.msk [vmem:[#allocation2 + $0x40] sm:$0xff] %vm1490, %v1466
        %1500 = vst.msk [vmem:[#allocation2 + $0x48] sm:$0xff] %vm1490, %v1467
        %1501 = vst.msk [vmem:[#allocation2 + $0x50] sm:$0xff] %vm1490, %v1468
        %1502 = vst.msk [vmem:[#allocation2 + $0x58] sm:$0xff] %vm1490, %v1469
        %1503 = vst.msk [vmem:[#allocation2 + $0x60] sm:$0xff] %vm1490, %v1470
        %1504 = vst.msk [vmem:[#allocation2 + $0x68] sm:$0xff] %vm1490, %v1471
        %1505 = vst.msk [vmem:[#allocation2 + $0x70] sm:$0xff] %vm1490, %v1472
        %1506 = vst.msk [vmem:[#allocation2 + $0x78] sm:$0xff] %vm1490, %v1473
        %1507 = vst.msk [vmem:[#allocation2 + $0x80] sm:$0xff] %vm1490, %v1474
        %1508 = vst.msk [vmem:[#allocation2 + $0x88] sm:$0xff] %vm1490, %v1475
        %1509 = vst.msk [vmem:[#allocation2 + $0x90] sm:$0xff] %vm1490, %v1476
        %1510 = vst.msk [vmem:[#allocation2 + $0x98] sm:$0xff] %vm1490, %v1477
        %1511 = vst.msk [vmem:[#allocation2 + $0xa0] sm:$0xff] %vm1490, %v1478
        %1512 = vst.msk [vmem:[#allocation2 + $0xa8] sm:$0xff] %vm1490, %v1479
        %1513 = vst.msk [vmem:[#allocation2 + $0xb0] sm:$0xff] %vm1490, %v1480
        %1514 = vst.msk [vmem:[#allocation2 + $0xb8] sm:$0xff] %vm1490, %v1481
        %1515 = vst.msk [vmem:[#allocation2 + $0xc0] sm:$0xff] %vm1490, %v1482
        %1516 = vst.msk [vmem:[#allocation2 + $0xc8] sm:$0xff] %vm1490, %v1483
        %1517 = vst.msk [vmem:[#allocation2 + $0xd0] sm:$0xff] %vm1490, %v1484
        %1518 = vst.msk [vmem:[#allocation2 + $0xd8] sm:$0xff] %vm1490, %v1485
        %1519 = vst.msk [vmem:[#allocation2 + $0xe0] sm:$0xff] %vm1490, %v1486
        %1520 = vst.msk [vmem:[#allocation2 + $0xe8] sm:$0xff] %vm1490, %v1487
        %1521 = vst.msk [vmem:[#allocation2 + $0xf0] sm:$0xff] %vm1490, %v1488
        %1522 = vst.msk [vmem:[#allocation2 + $0xf8] sm:$0xff] %vm1490, %v1489
        %p1523 = scmp.eq.s32.totalorder %s30, 1
        // Predicated region
        $region69: #{fpnn_v4_forward.1} parent=47 // pred_check
          %p1524 = pneg %p1523
        $region70: #{fpnn_v4_forward.1} parent=47 // pred_check_branch
          %1526 = sbr.rel (%p1524) target = $region72
        $region71: #{fpnn_v4_forward.1} parent=47 // pred_region
          %v1527 = vld [vmem:[#allocation2] sm:$0xff]
          %v1528 = vld [vmem:[#allocation2 + $0x8] sm:$0xff]
          %v1529 = vld [vmem:[#allocation2 + $0x10] sm:$0xff]
          %v1530 = vld [vmem:[#allocation2 + $0x18] sm:$0xff]
          %v1531 = vld [vmem:[#allocation2 + $0x20] sm:$0xff]
          %v1532 = vld [vmem:[#allocation2 + $0x28] sm:$0xff]
          %v1533 = vld [vmem:[#allocation2 + $0x30] sm:$0xff]
          %v1534 = vld [vmem:[#allocation2 + $0x38] sm:$0xff]
          %v1535 = vld [vmem:[#allocation2 + $0x40] sm:$0xff]
          %v1536 = vld [vmem:[#allocation2 + $0x48] sm:$0xff]
          %v1537 = vld [vmem:[#allocation2 + $0x50] sm:$0xff]
          %v1538 = vld [vmem:[#allocation2 + $0x58] sm:$0xff]
          %v1539 = vld [vmem:[#allocation2 + $0x60] sm:$0xff]
          %v1540 = vld [vmem:[#allocation2 + $0x68] sm:$0xff]
          %v1541 = vld [vmem:[#allocation2 + $0x70] sm:$0xff]
          %v1542 = vld [vmem:[#allocation2 + $0x78] sm:$0xff]
          %v1543 = vld [vmem:[#allocation2 + $0x80] sm:$0xff]
          %v1544 = vld [vmem:[#allocation2 + $0x88] sm:$0xff]
          %v1545 = vld [vmem:[#allocation2 + $0x90] sm:$0xff]
          %v1546 = vld [vmem:[#allocation2 + $0x98] sm:$0xff]
          %v1547 = vld [vmem:[#allocation2 + $0xa0] sm:$0xff]
          %v1548 = vld [vmem:[#allocation2 + $0xa8] sm:$0xff]
          %v1549 = vld [vmem:[#allocation2 + $0xb0] sm:$0xff]
          %v1550 = vld [vmem:[#allocation2 + $0xb8] sm:$0xff]
          %v1551 = vld [vmem:[#allocation2 + $0xc0] sm:$0xff]
          %v1552 = vld [vmem:[#allocation2 + $0xc8] sm:$0xff]
          %v1553 = vld [vmem:[#allocation2 + $0xd0] sm:$0xff]
          %v1554 = vld [vmem:[#allocation2 + $0xd8] sm:$0xff]
          %v1555 = vld [vmem:[#allocation2 + $0xe0] sm:$0xff]
          %v1556 = vld [vmem:[#allocation2 + $0xe8] sm:$0xff]
          %v1557 = vld [vmem:[#allocation2 + $0xf0] sm:$0xff]
          %v1558 = vld [vmem:[#allocation2 + $0xf8] sm:$0xff]
          %v1559 = vld [vmem:[%s419] sm:$0xf]
          %v1560 = vld [vmem:[%s419 + $0x4] sm:$0xf]
          %v1561 = vld [vmem:[%s419 + $0x8] sm:$0xf]
          %v1562 = vld [vmem:[%s419 + $0xc] sm:$0xf]
          %v1563 = vld [vmem:[%s419 + $0x10] sm:$0xf]
          %v1564 = vld [vmem:[%s419 + $0x14] sm:$0xf]
          %v1565 = vld [vmem:[%s419 + $0x18] sm:$0xf]
          %v1566 = vld [vmem:[%s419 + $0x1c] sm:$0xf]
          %v1567 = vld [vmem:[%s419 + $0x20] sm:$0xf]
          %v1568 = vld [vmem:[%s419 + $0x24] sm:$0xf]
          %v1569 = vld [vmem:[%s419 + $0x28] sm:$0xf]
          %v1570 = vld [vmem:[%s419 + $0x2c] sm:$0xf]
          %v1571 = vld [vmem:[%s419 + $0x30] sm:$0xf]
          %v1572 = vld [vmem:[%s419 + $0x34] sm:$0xf]
          %v1573 = vld [vmem:[%s419 + $0x38] sm:$0xf]
          %v1574 = vld [vmem:[%s419 + $0x3c] sm:$0xf]
          %v1575 = vld [vmem:[%s419 + $0x40] sm:$0xf]
          %v1576 = vld [vmem:[%s419 + $0x44] sm:$0xf]
          %v1577 = vld [vmem:[%s419 + $0x48] sm:$0xf]
          %v1578 = vld [vmem:[%s419 + $0x4c] sm:$0xf]
          %v1579 = vld [vmem:[%s419 + $0x50] sm:$0xf]
          %v1580 = vld [vmem:[%s419 + $0x54] sm:$0xf]
          %v1581 = vld [vmem:[%s419 + $0x58] sm:$0xf]
          %v1582 = vld [vmem:[%s419 + $0x5c] sm:$0xf]
          %v1583 = vld [vmem:[%s419 + $0x60] sm:$0xf]
          %v1584 = vld [vmem:[%s419 + $0x64] sm:$0xf]
          %v1585 = vld [vmem:[%s419 + $0x68] sm:$0xf]
          %v1586 = vld [vmem:[%s419 + $0x6c] sm:$0xf]
          %v1587 = vld [vmem:[%s419 + $0x70] sm:$0xf]
          %v1588 = vld [vmem:[%s419 + $0x74] sm:$0xf]
          %v1589 = vld [vmem:[%s419 + $0x78] sm:$0xf]
          %v1590 = vld [vmem:[%s419 + $0x7c] sm:$0xf]
          %v1591 = vmin.f32 %v1527, 1.0
          %v1592 = vmin.f32 %v1528, 1.0
          %v1593 = vmin.f32 %v1529, 1.0
          %v1594 = vmin.f32 %v1530, 1.0
          %v1595 = vmin.f32 %v1531, 1.0
          %v1596 = vmin.f32 %v1532, 1.0
          %v1597 = vmin.f32 %v1533, 1.0
          %v1598 = vmin.f32 %v1534, 1.0
          %v1599 = vmin.f32 %v1535, 1.0
          %v1600 = vmin.f32 %v1536, 1.0
          %v1601 = vmin.f32 %v1537, 1.0
          %v1602 = vmin.f32 %v1538, 1.0
          %v1603 = vmin.f32 %v1539, 1.0
          %v1604 = vmin.f32 %v1540, 1.0
          %v1605 = vmin.f32 %v1541, 1.0
          %v1606 = vmin.f32 %v1542, 1.0
          %v1607 = vmin.f32 %v1543, 1.0
          %v1608 = vmin.f32 %v1544, 1.0
          %v1609 = vmin.f32 %v1545, 1.0
          %v1610 = vmin.f32 %v1546, 1.0
          %v1611 = vmin.f32 %v1547, 1.0
          %v1612 = vmin.f32 %v1548, 1.0
          %v1613 = vmin.f32 %v1549, 1.0
          %v1614 = vmin.f32 %v1550, 1.0
          %v1615 = vmin.f32 %v1551, 1.0
          %v1616 = vmin.f32 %v1552, 1.0
          %v1617 = vmin.f32 %v1553, 1.0
          %v1618 = vmin.f32 %v1554, 1.0
          %v1619 = vmin.f32 %v1555, 1.0
          %v1620 = vmin.f32 %v1556, 1.0
          %v1621 = vmin.f32 %v1557, 1.0
          %v1622 = vmin.f32 %v1558, 1.0
          %v1623 = vpack.c.bf16 %v1528, %v1527
          %v1624 = vpack.c.bf16 %v1530, %v1529
          %v1625 = vpack.c.bf16 %v1532, %v1531
          %v1626 = vpack.c.bf16 %v1534, %v1533
          %v1627 = vpack.c.bf16 %v1536, %v1535
          %v1628 = vpack.c.bf16 %v1538, %v1537
          %v1629 = vpack.c.bf16 %v1540, %v1539
          %v1630 = vpack.c.bf16 %v1542, %v1541
          %v1631 = vpack.c.bf16 %v1544, %v1543
          %v1632 = vpack.c.bf16 %v1546, %v1545
          %v1633 = vpack.c.bf16 %v1548, %v1547
          %v1634 = vpack.c.bf16 %v1550, %v1549
          %v1635 = vpack.c.bf16 %v1552, %v1551
          %v1636 = vpack.c.bf16 %v1554, %v1553
          %v1637 = vpack.c.bf16 %v1556, %v1555
          %v1638 = vpack.c.bf16 %v1558, %v1557
          %v1639 = vld [vmem:[%s4] sm:$0xf]
          %v1640 = vld [vmem:[%s4 + $0x4] sm:$0x1]
          %s1641 = scalar_lea.vmem %s4, 8
          %v1642 = vld [vmem:[%s1641] sm:$0xf]
          %v1643 = vld [vmem:[%s1641 + $0x4] sm:$0x1]
          %v1676 = vunpack.c.l.b16 %v1559
          %v1677 = vunpack.c.l.b16 %v1560
          %v1678 = vunpack.c.l.b16 %v1561
          %v1679 = vunpack.c.l.b16 %v1562
          %v1680 = vunpack.c.l.b16 %v1563
          %v1681 = vunpack.c.l.b16 %v1564
          %v1682 = vunpack.c.l.b16 %v1565
          %v1683 = vunpack.c.l.b16 %v1566
          %v1684 = vunpack.c.l.b16 %v1567
          %v1685 = vunpack.c.l.b16 %v1568
          %v1686 = vunpack.c.l.b16 %v1569
          %v1687 = vunpack.c.l.b16 %v1570
          %v1688 = vunpack.c.l.b16 %v1571
          %v1689 = vunpack.c.l.b16 %v1572
          %v1690 = vunpack.c.l.b16 %v1573
          %v1691 = vunpack.c.l.b16 %v1574
          %v1692 = vunpack.c.l.b16 %v1575
          %v1693 = vunpack.c.l.b16 %v1576
          %v1694 = vunpack.c.l.b16 %v1577
          %v1695 = vunpack.c.l.b16 %v1578
          %v1696 = vunpack.c.l.b16 %v1579
          %v1697 = vunpack.c.l.b16 %v1580
          %v1698 = vunpack.c.l.b16 %v1581
          %v1699 = vunpack.c.l.b16 %v1582
          %v1700 = vunpack.c.l.b16 %v1583
          %v1701 = vunpack.c.l.b16 %v1584
          %v1702 = vunpack.c.l.b16 %v1585
          %v1703 = vunpack.c.l.b16 %v1586
          %v1704 = vunpack.c.l.b16 %v1587
          %v1705 = vunpack.c.l.b16 %v1588
          %v1706 = vunpack.c.l.b16 %v1589
          %v1707 = vunpack.c.l.b16 %v1590
          %v1708 = vpack.c.b16 %v1677, %v1676
          %v1709 = vpack.c.b16 %v1679, %v1678
          %v1710 = vpack.c.b16 %v1681, %v1680
          %v1711 = vpack.c.b16 %v1683, %v1682
          %v1712 = vpack.c.b16 %v1685, %v1684
          %v1713 = vpack.c.b16 %v1687, %v1686
          %v1714 = vpack.c.b16 %v1689, %v1688
          %v1715 = vpack.c.b16 %v1691, %v1690
          %v1716 = vpack.c.b16 %v1693, %v1692
          %v1717 = vpack.c.b16 %v1695, %v1694
          %v1718 = vpack.c.b16 %v1697, %v1696
          %v1719 = vpack.c.b16 %v1699, %v1698
          %v1720 = vpack.c.b16 %v1701, %v1700
          %v1721 = vpack.c.b16 %v1703, %v1702
          %v1722 = vpack.c.b16 %v1705, %v1704
          %v1723 = vpack.c.b16 %v1707, %v1706
          %v1726 = vunpack.c.l.b16 %v1642
          %v1727 = vunpack.c.l.b16 %v1643
          %v1728 = vpack.c.b16 %v1727, %v1726
          %v1730 = vsel %vm1490, %v1708, 0
          %v1733 = vsel %vm1490, %v1709, 0
          %v1736 = vsel %vm1490, %v1710, 0
          %v1739 = vsel %vm1490, %v1711, 0
          %v1742 = vsel %vm1490, %v1712, 0
          %v1745 = vsel %vm1490, %v1713, 0
          %v1748 = vsel %vm1490, %v1714, 0
          %v1751 = vsel %vm1490, %v1715, 0
          %v1754 = vsel %vm1490, %v1716, 0
          %v1757 = vsel %vm1490, %v1717, 0
          %v1760 = vsel %vm1490, %v1718, 0
          %v1763 = vsel %vm1490, %v1719, 0
          %v1766 = vsel %vm1490, %v1720, 0
          %v1769 = vsel %vm1490, %v1721, 0
          %v1772 = vsel %vm1490, %v1722, 0
          %v1775 = vsel %vm1490, %v1723, 0
          %vm1777 = vcmask 1043456
          %vm1778 = vcmask 1044480
          %v1779 = vsel %vm1777, 4294967295, 65535
          %v1780 = vsel %vm1778, %v1779, 0
          %v1782 = vand.u32 %v1728, %v1780
          %1784 = vmatprep.subr.bf16.mxu0 0
          %1785 = vmatpush1.bf16.msra.mxu0 %v1782
          %1786 = vmatprep.subr.bf16.mxu0 0
          %1787 = vmatpush1.bf16.msra.mxu0 0
          %1788 = vmatprep.subr.bf16.mxu0 0
          %1789 = vmatpush1.bf16.msra.mxu0 0
          %1790 = vmatprep.subr.bf16.mxu0 0
          %1791 = vmatpush1.bf16.msra.mxu0 0
          %1792 = vmatprep.subr.bf16.mxu0 0
          %1793 = vmatpush1.bf16.msra.mxu0 0
          %1794 = vmatprep.subr.bf16.mxu0 0
          %1795 = vmatpush1.bf16.msra.mxu0 0
          %1796 = vmatprep.subr.bf16.mxu0 0
          %1797 = vmatpush1.bf16.msra.mxu0 0
          %1798 = vmatprep.subr.bf16.mxu0 0
          %1799 = vmatpush1.bf16.msra.mxu0 0
          %1800 = vmatprep.subr.bf16.mxu0 0
          %1801 = vmatpush1.bf16.msra.mxu0 0
          %1802 = vmatprep.subr.bf16.mxu0 0
          %1803 = vmatpush1.bf16.msra.mxu0 0
          %1804 = vmatprep.subr.bf16.mxu0 0
          %1805 = vmatpush1.bf16.msra.mxu0 0
          %1806 = vmatprep.subr.bf16.mxu0 0
          %1807 = vmatpush1.bf16.msra.mxu0 0
          %1808 = vmatprep.subr.bf16.mxu0 0
          %1809 = vmatpush1.bf16.msra.mxu0 0
          %1810 = vmatprep.subr.bf16.mxu0 0
          %1811 = vmatpush1.bf16.msra.mxu0 0
          %1812 = vmatprep.subr.bf16.mxu0 0
          %1813 = vmatpush1.bf16.msra.mxu0 0
          %1814 = vmatprep.subr.bf16.mxu0 0
          %1815 = vmatpush1.bf16.msra.mxu0 0
          %1816 = vmatprep.mubr.bf16.mxu0 0
          %1817 = vmatmul.mubr.bf16.gmra.mrb[0].mxu0 %v1730
          %v1818 = vpop.f32.mrb[0].mxu0
          %v1819 = vadd.f32 0.0, %v1818
          %v1820 = vpop.f32.mrb[0].mxu0
          %v1821 = vpop.f32.mrb[0].mxu0
          %v1822 = vadd.f32 0.0, %v1821
          %v1823 = vpop.f32.mrb[0].mxu0
          %1824 = vmatprep.mubr.bf16.mxu0 0
          %1825 = vmatmul.mubr.bf16.gmra.mrb[0].mxu0 %v1733
          %v1826 = vpop.f32.mrb[0].mxu0
          %v1827 = vadd.f32 0.0, %v1826
          %v1828 = vpop.f32.mrb[0].mxu0
          %v1829 = vpop.f32.mrb[0].mxu0
          %v1830 = vadd.f32 0.0, %v1829
          %v1831 = vpop.f32.mrb[0].mxu0
          %1832 = vmatprep.mubr.bf16.mxu0 0
          %1833 = vmatmul.mubr.bf16.gmra.mrb[0].mxu0 %v1736
          %v1834 = vpop.f32.mrb[0].mxu0
          %v1835 = vadd.f32 0.0, %v1834
          %v1836 = vpop.f32.mrb[0].mxu0
          %v1837 = vpop.f32.mrb[0].mxu0
          %v1838 = vadd.f32 0.0, %v1837
          %v1839 = vpop.f32.mrb[0].mxu0
          %1840 = vmatprep.mubr.bf16.mxu0 0
          %1841 = vmatmul.mubr.bf16.gmra.mrb[0].mxu0 %v1739
          %v1842 = vpop.f32.mrb[0].mxu0
          %v1843 = vadd.f32 0.0, %v1842
          %v1844 = vpop.f32.mrb[0].mxu0
          %v1845 = vpop.f32.mrb[0].mxu0
          %v1846 = vadd.f32 0.0, %v1845
          %v1847 = vpop.f32.mrb[0].mxu0
          %1848 = vmatprep.mubr.bf16.mxu0 0
          %1849 = vmatmul.mubr.bf16.gmra.mrb[0].mxu0 %v1742
          %v1850 = vpop.f32.mrb[0].mxu0
          %v1851 = vadd.f32 0.0, %v1850
          %v1852 = vpop.f32.mrb[0].mxu0
          %v1853 = vpop.f32.mrb[0].mxu0
          %v1854 = vadd.f32 0.0, %v1853
          %v1855 = vpop.f32.mrb[0].mxu0
          %1856 = vmatprep.mubr.bf16.mxu0 0
          %1857 = vmatmul.mubr.bf16.gmra.mrb[0].mxu0 %v1745
          %v1858 = vpop.f32.mrb[0].mxu0
          %v1859 = vadd.f32 0.0, %v1858
          %v1860 = vpop.f32.mrb[0].mxu0
          %v1861 = vpop.f32.mrb[0].mxu0
          %v1862 = vadd.f32 0.0, %v1861
          %v1863 = vpop.f32.mrb[0].mxu0
          %1864 = vmatprep.mubr.bf16.mxu0 0
          %1865 = vmatmul.mubr.bf16.gmra.mrb[0].mxu0 %v1748
          %v1866 = vpop.f32.mrb[0].mxu0
          %v1867 = vadd.f32 0.0, %v1866
          %v1868 = vpop.f32.mrb[0].mxu0
          %v1869 = vpop.f32.mrb[0].mxu0
          %v1870 = vadd.f32 0.0, %v1869
          %v1871 = vpop.f32.mrb[0].mxu0
          %1872 = vmatprep.mubr.bf16.mxu0 0
          %1873 = vmatmul.mubr.bf16.gmra.mrb[0].mxu0 %v1751
          %v1874 = vpop.f32.mrb[0].mxu0
          %v1875 = vadd.f32 0.0, %v1874
          %v1876 = vpop.f32.mrb[0].mxu0
          %v1877 = vpop.f32.mrb[0].mxu0
          %v1878 = vadd.f32 0.0, %v1877
          %v1879 = vpop.f32.mrb[0].mxu0
          %1880 = vmatprep.mubr.bf16.mxu0 0
          %1881 = vmatmul.mubr.bf16.gmra.mrb[0].mxu0 %v1754
          %v1882 = vpop.f32.mrb[0].mxu0
          %v1883 = vadd.f32 0.0, %v1882
          %v1884 = vpop.f32.mrb[0].mxu0
          %v1885 = vpop.f32.mrb[0].mxu0
          %v1886 = vadd.f32 0.0, %v1885
          %v1887 = vpop.f32.mrb[0].mxu0
          %1888 = vmatprep.mubr.bf16.mxu0 0
          %1889 = vmatmul.mubr.bf16.gmra.mrb[0].mxu0 %v1757
          %v1890 = vpop.f32.mrb[0].mxu0
          %v1891 = vadd.f32 0.0, %v1890
          %v1892 = vpop.f32.mrb[0].mxu0
          %v1893 = vpop.f32.mrb[0].mxu0
          %v1894 = vadd.f32 0.0, %v1893
          %v1895 = vpop.f32.mrb[0].mxu0
          %1896 = vmatprep.mubr.bf16.mxu0 0
          %1897 = vmatmul.mubr.bf16.gmra.mrb[0].mxu0 %v1760
          %v1898 = vpop.f32.mrb[0].mxu0
          %v1899 = vadd.f32 0.0, %v1898
          %v1900 = vpop.f32.mrb[0].mxu0
          %v1901 = vpop.f32.mrb[0].mxu0
          %v1902 = vadd.f32 0.0, %v1901
          %v1903 = vpop.f32.mrb[0].mxu0
          %1904 = vmatprep.mubr.bf16.mxu0 0
          %1905 = vmatmul.mubr.bf16.gmra.mrb[0].mxu0 %v1763
          %v1906 = vpop.f32.mrb[0].mxu0
          %v1907 = vadd.f32 0.0, %v1906
          %v1908 = vpop.f32.mrb[0].mxu0
          %v1909 = vpop.f32.mrb[0].mxu0
          %v1910 = vadd.f32 0.0, %v1909
          %v1911 = vpop.f32.mrb[0].mxu0
          %1912 = vmatprep.mubr.bf16.mxu0 0
          %1913 = vmatmul.mubr.bf16.gmra.mrb[0].mxu0 %v1766
          %v1914 = vpop.f32.mrb[0].mxu0
          %v1915 = vadd.f32 0.0, %v1914
          %v1916 = vpop.f32.mrb[0].mxu0
          %v1917 = vpop.f32.mrb[0].mxu0
          %v1918 = vadd.f32 0.0, %v1917
          %v1919 = vpop.f32.mrb[0].mxu0
          %1920 = vmatprep.mubr.bf16.mxu0 0
          %1921 = vmatmul.mubr.bf16.gmra.mrb[0].mxu0 %v1769
          %v1922 = vpop.f32.mrb[0].mxu0
          %v1923 = vadd.f32 0.0, %v1922
          %v1924 = vpop.f32.mrb[0].mxu0
          %v1925 = vpop.f32.mrb[0].mxu0
          %v1926 = vadd.f32 0.0, %v1925
          %v1927 = vpop.f32.mrb[0].mxu0
          %1928 = vmatprep.mubr.bf16.mxu0 0
          %1929 = vmatmul.mubr.bf16.gmra.mrb[0].mxu0 %v1772
          %v1930 = vpop.f32.mrb[0].mxu0
          %v1931 = vadd.f32 0.0, %v1930
          %v1932 = vpop.f32.mrb[0].mxu0
          %v1933 = vpop.f32.mrb[0].mxu0
          %v1934 = vadd.f32 0.0, %v1933
          %v1935 = vpop.f32.mrb[0].mxu0
          %1936 = vmatprep.mubr.bf16.mxu0 0
          %1937 = vmatmul.mubr.bf16.gmra.mrb[0].mxu0 %v1775
          %v1938 = vpop.f32.mrb[0].mxu0
          %v1939 = vadd.f32 0.0, %v1938
          %v1940 = vpop.f32.mrb[0].mxu0
          %v1941 = vpop.f32.mrb[0].mxu0
          %v1942 = vadd.f32 0.0, %v1941
          %v1943 = vpop.f32.mrb[0].mxu0
          %1944 = vdwg.mxu0
          %s1945 = scalar_lea.vmem %s4, 16
          %v1946 = vld [vmem:[%s1945] sm:$0xf]
          %v1947 = vld [vmem:[%s1945 + $0x4] sm:$0x1]
          %v1950 = vunpack.c.l.b16 %v1946
          %v1951 = vunpack.c.l.b16 %v1947
          %v1952 = vpack.c.b16 %v1951, %v1950
          %v1954 = vand.u32 %v1952, %v1780
          %1956 = vmatprep.subr.bf16.mxu0 0
          %1957 = vmatpush1.bf16.msra.mxu0 %v1954
          %1958 = vmatprep.subr.bf16.mxu0 0
          %1959 = vmatpush1.bf16.msra.mxu0 0
          %1960 = vmatprep.subr.bf16.mxu0 0
          %1961 = vmatpush1.bf16.msra.mxu0 0
          %1962 = vmatprep.subr.bf16.mxu0 0
          %1963 = vmatpush1.bf16.msra.mxu0 0
          %1964 = vmatprep.subr.bf16.mxu0 0
          %1965 = vmatpush1.bf16.msra.mxu0 0
          %1966 = vmatprep.subr.bf16.mxu0 0
          %1967 = vmatpush1.bf16.msra.mxu0 0
          %1968 = vmatprep.subr.bf16.mxu0 0
          %1969 = vmatpush1.bf16.msra.mxu0 0
          %1970 = vmatprep.subr.bf16.mxu0 0
          %1971 = vmatpush1.bf16.msra.mxu0 0
          %1972 = vmatprep.subr.bf16.mxu0 0
          %1973 = vmatpush1.bf16.msra.mxu0 0
          %1974 = vmatprep.subr.bf16.mxu0 0
          %1975 = vmatpush1.bf16.msra.mxu0 0
          %1976 = vmatprep.subr.bf16.mxu0 0
          %1977 = vmatpush1.bf16.msra.mxu0 0
          %1978 = vmatprep.subr.bf16.mxu0 0
          %1979 = vmatpush1.bf16.msra.mxu0 0
          %1980 = vmatprep.subr.bf16.mxu0 0
          %1981 = vmatpush1.bf16.msra.mxu0 0
          %1982 = vmatprep.subr.bf16.mxu0 0
          %1983 = vmatpush1.bf16.msra.mxu0 0
          %1984 = vmatprep.subr.bf16.mxu0 0
          %1985 = vmatpush1.bf16.msra.mxu0 0
          %1986 = vmatprep.subr.bf16.mxu0 0
          %1987 = vmatpush1.bf16.msra.mxu0 0
          %1988 = vmatprep.mubr.bf16.mxu0 0
          %1989 = vmatmul.mubr.bf16.gmra.mrb[0].mxu0 %v1730
          %v1990 = vpop.f32.mrb[0].mxu0
          %v1991 = vadd.f32 0.0, %v1990
          %v1992 = vpop.f32.mrb[0].mxu0
          %v1993 = vpop.f32.mrb[0].mxu0
          %v1994 = vadd.f32 0.0, %v1993
          %v1995 = vpop.f32.mrb[0].mxu0
          %1996 = vmatprep.mubr.bf16.mxu0 0
          %1997 = vmatmul.mubr.bf16.gmra.mrb[0].mxu0 %v1733
          %v1998 = vpop.f32.mrb[0].mxu0
          %v1999 = vadd.f32 0.0, %v1998
          %v2000 = vpop.f32.mrb[0].mxu0
          %v2001 = vpop.f32.mrb[0].mxu0
          %v2002 = vadd.f32 0.0, %v2001
          %v2003 = vpop.f32.mrb[0].mxu0
          %2004 = vmatprep.mubr.bf16.mxu0 0
          %2005 = vmatmul.mubr.bf16.gmra.mrb[0].mxu0 %v1736
          %v2006 = vpop.f32.mrb[0].mxu0
          %v2007 = vadd.f32 0.0, %v2006
          %v2008 = vpop.f32.mrb[0].mxu0
          %v2009 = vpop.f32.mrb[0].mxu0
          %v2010 = vadd.f32 0.0, %v2009
          %v2011 = vpop.f32.mrb[0].mxu0
          %2012 = vmatprep.mubr.bf16.mxu0 0
          %2013 = vmatmul.mubr.bf16.gmra.mrb[0].mxu0 %v1739
          %v2014 = vpop.f32.mrb[0].mxu0
          %v2015 = vadd.f32 0.0, %v2014
          %v2016 = vpop.f32.mrb[0].mxu0
          %v2017 = vpop.f32.mrb[0].mxu0
          %v2018 = vadd.f32 0.0, %v2017
          %v2019 = vpop.f32.mrb[0].mxu0
          %2020 = vmatprep.mubr.bf16.mxu0 0
          %2021 = vmatmul.mubr.bf16.gmra.mrb[0].mxu0 %v1742
          %v2022 = vpop.f32.mrb[0].mxu0
          %v2023 = vadd.f32 0.0, %v2022
          %v2024 = vpop.f32.mrb[0].mxu0
          %v2025 = vpop.f32.mrb[0].mxu0
          %v2026 = vadd.f32 0.0, %v2025
          %v2027 = vpop.f32.mrb[0].mxu0
          %2028 = vmatprep.mubr.bf16.mxu0 0
          %2029 = vmatmul.mubr.bf16.gmra.mrb[0].mxu0 %v1745
          %v2030 = vpop.f32.mrb[0].mxu0
          %v2031 = vadd.f32 0.0, %v2030
          %v2032 = vpop.f32.mrb[0].mxu0
          %v2033 = vpop.f32.mrb[0].mxu0
          %v2034 = vadd.f32 0.0, %v2033
          %v2035 = vpop.f32.mrb[0].mxu0
          %2036 = vmatprep.mubr.bf16.mxu0 0
          %2037 = vmatmul.mubr.bf16.gmra.mrb[0].mxu0 %v1748
          %v2038 = vpop.f32.mrb[0].mxu0
          %v2039 = vadd.f32 0.0, %v2038
          %v2040 = vpop.f32.mrb[0].mxu0
          %v2041 = vpop.f32.mrb[0].mxu0
          %v2042 = vadd.f32 0.0, %v2041
          %v2043 = vpop.f32.mrb[0].mxu0
          %2044 = vmatprep.mubr.bf16.mxu0 0
          %2045 = vmatmul.mubr.bf16.gmra.mrb[0].mxu0 %v1751
          %v2046 = vpop.f32.mrb[0].mxu0
          %v2047 = vadd.f32 0.0, %v2046
          %v2048 = vpop.f32.mrb[0].mxu0
          %v2049 = vpop.f32.mrb[0].mxu0
          %v2050 = vadd.f32 0.0, %v2049
          %v2051 = vpop.f32.mrb[0].mxu0
          %2052 = vmatprep.mubr.bf16.mxu0 0
          %2053 = vmatmul.mubr.bf16.gmra.mrb[0].mxu0 %v1754
          %v2054 = vpop.f32.mrb[0].mxu0
          %v2055 = vadd.f32 0.0, %v2054
          %v2056 = vpop.f32.mrb[0].mxu0
          %v2057 = vpop.f32.mrb[0].mxu0
          %v2058 = vadd.f32 0.0, %v2057
          %v2059 = vpop.f32.mrb[0].mxu0
          %2060 = vmatprep.mubr.bf16.mxu0 0
          %2061 = vmatmul.mubr.bf16.gmra.mrb[0].mxu0 %v1757
          %v2062 = vpop.f32.mrb[0].mxu0
          %v2063 = vadd.f32 0.0, %v2062
          %v2064 = vpop.f32.mrb[0].mxu0
          %v2065 = vpop.f32.mrb[0].mxu0
          %v2066 = vadd.f32 0.0, %v2065
          %v2067 = vpop.f32.mrb[0].mxu0
          %2068 = vmatprep.mubr.bf16.mxu0 0
          %2069 = vmatmul.mubr.bf16.gmra.mrb[0].mxu0 %v1760
          %v2070 = vpop.f32.mrb[0].mxu0
          %v2071 = vadd.f32 0.0, %v2070
          %v2072 = vpop.f32.mrb[0].mxu0
          %v2073 = vpop.f32.mrb[0].mxu0
          %v2074 = vadd.f32 0.0, %v2073
          %v2075 = vpop.f32.mrb[0].mxu0
          %2076 = vmatprep.mubr.bf16.mxu0 0
          %2077 = vmatmul.mubr.bf16.gmra.mrb[0].mxu0 %v1763
          %v2078 = vpop.f32.mrb[0].mxu0
          %v2079 = vadd.f32 0.0, %v2078
          %v2080 = vpop.f32.mrb[0].mxu0
          %v2081 = vpop.f32.mrb[0].mxu0
          %v2082 = vadd.f32 0.0, %v2081
          %v2083 = vpop.f32.mrb[0].mxu0
          %2084 = vmatprep.mubr.bf16.mxu0 0
          %2085 = vmatmul.mubr.bf16.gmra.mrb[0].mxu0 %v1766
          %v2086 = vpop.f32.mrb[0].mxu0
          %v2087 = vadd.f32 0.0, %v2086
          %v2088 = vpop.f32.mrb[0].mxu0
          %v2089 = vpop.f32.mrb[0].mxu0
          %v2090 = vadd.f32 0.0, %v2089
          %v2091 = vpop.f32.mrb[0].mxu0
          %2092 = vmatprep.mubr.bf16.mxu0 0
          %2093 = vmatmul.mubr.bf16.gmra.mrb[0].mxu0 %v1769
          %v2094 = vpop.f32.mrb[0].mxu0
          %v2095 = vadd.f32 0.0, %v2094
          %v2096 = vpop.f32.mrb[0].mxu0
          %v2097 = vpop.f32.mrb[0].mxu0
          %v2098 = vadd.f32 0.0, %v2097
          %v2099 = vpop.f32.mrb[0].mxu0
          %2100 = vmatprep.mubr.bf16.mxu0 0
          %2101 = vmatmul.mubr.bf16.gmra.mrb[0].mxu0 %v1772
          %v2102 = vpop.f32.mrb[0].mxu0
          %v2103 = vadd.f32 0.0, %v2102
          %v2104 = vpop.f32.mrb[0].mxu0
          %v2105 = vpop.f32.mrb[0].mxu0
          %v2106 = vadd.f32 0.0, %v2105
          %v2107 = vpop.f32.mrb[0].mxu0
          %2108 = vmatprep.mubr.bf16.mxu0 0
          %2109 = vmatmul.mubr.bf16.gmra.mrb[0].mxu0 %v1775
          %v2110 = vpop.f32.mrb[0].mxu0
          %v2111 = vadd.f32 0.0, %v2110
          %v2112 = vpop.f32.mrb[0].mxu0
          %v2113 = vpop.f32.mrb[0].mxu0
          %v2114 = vadd.f32 0.0, %v2113
          %v2115 = vpop.f32.mrb[0].mxu0
          %2116 = vdwg.mxu0
          %v2119 = vunpack.c.l.b16 %v1639
          %v2120 = vunpack.c.l.b16 %v1640
          %v2121 = vpack.c.b16 %v2120, %v2119
          %v2123 = vsel %vm1490, %v1623, 0
          %v2126 = vsel %vm1490, %v1624, 0
          %v2129 = vsel %vm1490, %v1625, 0
          %v2132 = vsel %vm1490, %v1626, 0
          %v2135 = vsel %vm1490, %v1627, 0
          %v2138 = vsel %vm1490, %v1628, 0
          %v2141 = vsel %vm1490, %v1629, 0
          %v2144 = vsel %vm1490, %v1630, 0
          %v2147 = vsel %vm1490, %v1631, 0
          %v2150 = vsel %vm1490, %v1632, 0
          %v2153 = vsel %vm1490, %v1633, 0
          %v2156 = vsel %vm1490, %v1634, 0
          %v2159 = vsel %vm1490, %v1635, 0
          %v2162 = vsel %vm1490, %v1636, 0
          %v2165 = vsel %vm1490, %v1637, 0
          %v2168 = vsel %vm1490, %v1638, 0
          %v2171 = vand.u32 %v2121, %v1780
          %2173 = vmatprep.subr.bf16.mxu0 0
          %2174 = vmatpush1.bf16.msra.mxu0 %v2171
          %2175 = vmatprep.subr.bf16.mxu0 0
          %2176 = vmatpush1.bf16.msra.mxu0 0
          %2177 = vmatprep.subr.bf16.mxu0 0
          %2178 = vmatpush1.bf16.msra.mxu0 0
          %2179 = vmatprep.subr.bf16.mxu0 0
          %2180 = vmatpush1.bf16.msra.mxu0 0
          %2181 = vmatprep.subr.bf16.mxu0 0
          %2182 = vmatpush1.bf16.msra.mxu0 0
          %2183 = vmatprep.subr.bf16.mxu0 0
          %2184 = vmatpush1.bf16.msra.mxu0 0
          %2185 = vmatprep.subr.bf16.mxu0 0
          %2186 = vmatpush1.bf16.msra.mxu0 0
          %2187 = vmatprep.subr.bf16.mxu0 0
          %2188 = vmatpush1.bf16.msra.mxu0 0
          %2189 = vmatprep.subr.bf16.mxu0 0
          %2190 = vmatpush1.bf16.msra.mxu0 0
          %2191 = vmatprep.subr.bf16.mxu0 0
          %2192 = vmatpush1.bf16.msra.mxu0 0
          %2193 = vmatprep.subr.bf16.mxu0 0
          %2194 = vmatpush1.bf16.msra.mxu0 0
          %2195 = vmatprep.subr.bf16.mxu0 0
          %2196 = vmatpush1.bf16.msra.mxu0 0
          %2197 = vmatprep.subr.bf16.mxu0 0
          %2198 = vmatpush1.bf16.msra.mxu0 0
          %2199 = vmatprep.subr.bf16.mxu0 0
          %2200 = vmatpush1.bf16.msra.mxu0 0
          %2201 = vmatprep.subr.bf16.mxu0 0
          %2202 = vmatpush1.bf16.msra.mxu0 0
          %2203 = vmatprep.subr.bf16.mxu0 0
          %2204 = vmatpush1.bf16.msra.mxu0 0
          %2205 = vmatprep.mubr.bf16.mxu0 0
          %2206 = vmatmul.mubr.bf16.gmra.mrb[0].mxu0 %v2123
          %v2207 = vpop.f32.mrb[0].mxu0
          %v2208 = vadd.f32 %v1819, %v2207
          %v2209 = vpop.f32.mrb[0].mxu0
          %v2210 = vpop.f32.mrb[0].mxu0
          %v2211 = vadd.f32 %v1822, %v2210
          %v2212 = vpop.f32.mrb[0].mxu0
          %2213 = vmatprep.mubr.bf16.mxu0 0
          %2214 = vmatmul.mubr.bf16.gmra.mrb[0].mxu0 %v2126
          %v2215 = vpop.f32.mrb[0].mxu0
          %v2216 = vadd.f32 %v1827, %v2215
          %v2217 = vpop.f32.mrb[0].mxu0
          %v2218 = vpop.f32.mrb[0].mxu0
          %v2219 = vadd.f32 %v1830, %v2218
          %v2220 = vpop.f32.mrb[0].mxu0
          %2221 = vmatprep.mubr.bf16.mxu0 0
          %2222 = vmatmul.mubr.bf16.gmra.mrb[0].mxu0 %v2129
          %v2223 = vpop.f32.mrb[0].mxu0
          %v2224 = vadd.f32 %v1835, %v2223
          %v2225 = vpop.f32.mrb[0].mxu0
          %v2226 = vpop.f32.mrb[0].mxu0
          %v2227 = vadd.f32 %v1838, %v2226
          %v2228 = vpop.f32.mrb[0].mxu0
          %2229 = vmatprep.mubr.bf16.mxu0 0
          %2230 = vmatmul.mubr.bf16.gmra.mrb[0].mxu0 %v2132
          %v2231 = vpop.f32.mrb[0].mxu0
          %v2232 = vadd.f32 %v1843, %v2231
          %v2233 = vpop.f32.mrb[0].mxu0
          %v2234 = vpop.f32.mrb[0].mxu0
          %v2235 = vadd.f32 %v1846, %v2234
          %v2236 = vpop.f32.mrb[0].mxu0
          %2237 = vmatprep.mubr.bf16.mxu0 0
          %2238 = vmatmul.mubr.bf16.gmra.mrb[0].mxu0 %v2135
          %v2239 = vpop.f32.mrb[0].mxu0
          %v2240 = vadd.f32 %v1851, %v2239
          %v2241 = vpop.f32.mrb[0].mxu0
          %v2242 = vpop.f32.mrb[0].mxu0
          %v2243 = vadd.f32 %v1854, %v2242
          %v2244 = vpop.f32.mrb[0].mxu0
          %2245 = vmatprep.mubr.bf16.mxu0 0
          %2246 = vmatmul.mubr.bf16.gmra.mrb[0].mxu0 %v2138
          %v2247 = vpop.f32.mrb[0].mxu0
          %v2248 = vadd.f32 %v1859, %v2247
          %v2249 = vpop.f32.mrb[0].mxu0
          %v2250 = vpop.f32.mrb[0].mxu0
          %v2251 = vadd.f32 %v1862, %v2250
          %v2252 = vpop.f32.mrb[0].mxu0
          %2253 = vmatprep.mubr.bf16.mxu0 0
          %2254 = vmatmul.mubr.bf16.gmra.mrb[0].mxu0 %v2141
          %v2255 = vpop.f32.mrb[0].mxu0
          %v2256 = vadd.f32 %v1867, %v2255
          %v2257 = vpop.f32.mrb[0].mxu0
          %v2258 = vpop.f32.mrb[0].mxu0
          %v2259 = vadd.f32 %v1870, %v2258
          %v2260 = vpop.f32.mrb[0].mxu0
          %2261 = vmatprep.mubr.bf16.mxu0 0
          %2262 = vmatmul.mubr.bf16.gmra.mrb[0].mxu0 %v2144
          %v2263 = vpop.f32.mrb[0].mxu0
          %v2264 = vadd.f32 %v1875, %v2263
          %v2265 = vpop.f32.mrb[0].mxu0
          %v2266 = vpop.f32.mrb[0].mxu0
          %v2267 = vadd.f32 %v1878, %v2266
          %v2268 = vpop.f32.mrb[0].mxu0
          %2269 = vmatprep.mubr.bf16.mxu0 0
          %2270 = vmatmul.mubr.bf16.gmra.mrb[0].mxu0 %v2147
          %v2271 = vpop.f32.mrb[0].mxu0
          %v2272 = vadd.f32 %v1883, %v2271
          %v2273 = vpop.f32.mrb[0].mxu0
          %v2274 = vpop.f32.mrb[0].mxu0
          %v2275 = vadd.f32 %v1886, %v2274
          %v2276 = vpop.f32.mrb[0].mxu0
          %2277 = vmatprep.mubr.bf16.mxu0 0
          %2278 = vmatmul.mubr.bf16.gmra.mrb[0].mxu0 %v2150
          %v2279 = vpop.f32.mrb[0].mxu0
          %v2280 = vadd.f32 %v1891, %v2279
          %v2281 = vpop.f32.mrb[0].mxu0
          %v2282 = vpop.f32.mrb[0].mxu0
          %v2283 = vadd.f32 %v1894, %v2282
          %v2284 = vpop.f32.mrb[0].mxu0
          %2285 = vmatprep.mubr.bf16.mxu0 0
          %2286 = vmatmul.mubr.bf16.gmra.mrb[0].mxu0 %v2153
          %v2287 = vpop.f32.mrb[0].mxu0
          %v2288 = vadd.f32 %v1899, %v2287
          %v2289 = vpop.f32.mrb[0].mxu0
          %v2290 = vpop.f32.mrb[0].mxu0
          %v2291 = vadd.f32 %v1902, %v2290
          %v2292 = vpop.f32.mrb[0].mxu0
          %2293 = vmatprep.mubr.bf16.mxu0 0
          %2294 = vmatmul.mubr.bf16.gmra.mrb[0].mxu0 %v2156
          %v2295 = vpop.f32.mrb[0].mxu0
          %v2296 = vadd.f32 %v1907, %v2295
          %v2297 = vpop.f32.mrb[0].mxu0
          %v2298 = vpop.f32.mrb[0].mxu0
          %v2299 = vadd.f32 %v1910, %v2298
          %v2300 = vpop.f32.mrb[0].mxu0
          %2301 = vmatprep.mubr.bf16.mxu0 0
          %2302 = vmatmul.mubr.bf16.gmra.mrb[0].mxu0 %v2159
          %v2303 = vpop.f32.mrb[0].mxu0
          %v2304 = vadd.f32 %v1915, %v2303
          %v2305 = vpop.f32.mrb[0].mxu0
          %v2306 = vpop.f32.mrb[0].mxu0
          %v2307 = vadd.f32 %v1918, %v2306
          %v2308 = vpop.f32.mrb[0].mxu0
          %2309 = vmatprep.mubr.bf16.mxu0 0
          %2310 = vmatmul.mubr.bf16.gmra.mrb[0].mxu0 %v2162
          %v2311 = vpop.f32.mrb[0].mxu0
          %v2312 = vadd.f32 %v1923, %v2311
          %v2313 = vpop.f32.mrb[0].mxu0
          %v2314 = vpop.f32.mrb[0].mxu0
          %v2315 = vadd.f32 %v1926, %v2314
          %v2316 = vpop.f32.mrb[0].mxu0
          %2317 = vmatprep.mubr.bf16.mxu0 0
          %2318 = vmatmul.mubr.bf16.gmra.mrb[0].mxu0 %v2165
          %v2319 = vpop.f32.mrb[0].mxu0
          %v2320 = vadd.f32 %v1931, %v2319
          %v2321 = vpop.f32.mrb[0].mxu0
          %v2322 = vpop.f32.mrb[0].mxu0
          %v2323 = vadd.f32 %v1934, %v2322
          %v2324 = vpop.f32.mrb[0].mxu0
          %2325 = vmatprep.mubr.bf16.mxu0 0
          %2326 = vmatmul.mubr.bf16.gmra.mrb[0].mxu0 %v2168
          %v2327 = vpop.f32.mrb[0].mxu0
          %v2328 = vadd.f32 %v1939, %v2327
          %v2329 = vpop.f32.mrb[0].mxu0
          %v2330 = vpop.f32.mrb[0].mxu0
          %v2331 = vadd.f32 %v1942, %v2330
          %v2332 = vpop.f32.mrb[0].mxu0
          %2333 = vdwg.mxu0
          %2335 = vset.pattern.permute.xlu0 8
          %2336 = vperm.xlu0 %2335, %v1591
          %v2337 = vpop.permute.xlu0 %2336
          %2340 = vset.pattern.permute.xlu0 8
          %2341 = vperm.xlu0 %2340, %v1592
          %v2342 = vpop.permute.xlu0 %2341
          %2345 = vset.pattern.permute.xlu0 8
          %2346 = vperm.xlu0 %2345, %v1593
          %v2347 = vpop.permute.xlu0 %2346
          %2350 = vset.pattern.permute.xlu0 8
          %2351 = vperm.xlu0 %2350, %v1594
          %v2352 = vpop.permute.xlu0 %2351
          %2355 = vset.pattern.permute.xlu0 8
          %2356 = vperm.xlu0 %2355, %v1595
          %v2357 = vpop.permute.xlu0 %2356
          %2360 = vset.pattern.permute.xlu0 8
          %2361 = vperm.xlu0 %2360, %v1596
          %v2362 = vpop.permute.xlu0 %2361
          %2365 = vset.pattern.permute.xlu0 8
          %2366 = vperm.xlu0 %2365, %v1597
          %v2367 = vpop.permute.xlu0 %2366
          %2370 = vset.pattern.permute.xlu0 8
          %2371 = vperm.xlu0 %2370, %v1598
          %v2372 = vpop.permute.xlu0 %2371
          %2375 = vset.pattern.permute.xlu0 8
          %2376 = vperm.xlu0 %2375, %v1599
          %v2377 = vpop.permute.xlu0 %2376
          %2380 = vset.pattern.permute.xlu0 8
          %2381 = vperm.xlu0 %2380, %v1600
          %v2382 = vpop.permute.xlu0 %2381
          %2385 = vset.pattern.permute.xlu0 8
          %2386 = vperm.xlu0 %2385, %v1601
          %v2387 = vpop.permute.xlu0 %2386
          %2390 = vset.pattern.permute.xlu0 8
          %2391 = vperm.xlu0 %2390, %v1602
          %v2392 = vpop.permute.xlu0 %2391
          %2395 = vset.pattern.permute.xlu0 8
          %2396 = vperm.xlu0 %2395, %v1603
          %v2397 = vpop.permute.xlu0 %2396
          %2400 = vset.pattern.permute.xlu0 8
          %2401 = vperm.xlu0 %2400, %v1604
          %v2402 = vpop.permute.xlu0 %2401
          %2405 = vset.pattern.permute.xlu0 8
          %2406 = vperm.xlu0 %2405, %v1605
          %v2407 = vpop.permute.xlu0 %2406
          %2410 = vset.pattern.permute.xlu0 8
          %2411 = vperm.xlu0 %2410, %v1606
          %v2412 = vpop.permute.xlu0 %2411
          %2415 = vset.pattern.permute.xlu0 8
          %2416 = vperm.xlu0 %2415, %v1607
          %v2417 = vpop.permute.xlu0 %2416
          %2420 = vset.pattern.permute.xlu0 8
          %2421 = vperm.xlu0 %2420, %v1608
          %v2422 = vpop.permute.xlu0 %2421
          %2425 = vset.pattern.permute.xlu0 8
          %2426 = vperm.xlu0 %2425, %v1609
          %v2427 = vpop.permute.xlu0 %2426
          %2430 = vset.pattern.permute.xlu0 8
          %2431 = vperm.xlu0 %2430, %v1610
          %v2432 = vpop.permute.xlu0 %2431
          %2435 = vset.pattern.permute.xlu0 8
          %2436 = vperm.xlu0 %2435, %v1611
          %v2437 = vpop.permute.xlu0 %2436
          %2440 = vset.pattern.permute.xlu0 8
          %2441 = vperm.xlu0 %2440, %v1612
          %v2442 = vpop.permute.xlu0 %2441
          %2445 = vset.pattern.permute.xlu0 8
          %2446 = vperm.xlu0 %2445, %v1613
          %v2447 = vpop.permute.xlu0 %2446
          %2450 = vset.pattern.permute.xlu0 8
          %2451 = vperm.xlu0 %2450, %v1614
          %v2452 = vpop.permute.xlu0 %2451
          %2455 = vset.pattern.permute.xlu0 8
          %2456 = vperm.xlu0 %2455, %v1615
          %v2457 = vpop.permute.xlu0 %2456
          %2460 = vset.pattern.permute.xlu0 8
          %2461 = vperm.xlu0 %2460, %v1616
          %v2462 = vpop.permute.xlu0 %2461
          %2465 = vset.pattern.permute.xlu0 8
          %2466 = vperm.xlu0 %2465, %v1617
          %v2467 = vpop.permute.xlu0 %2466
          %2470 = vset.pattern.permute.xlu0 8
          %2471 = vperm.xlu0 %2470, %v1618
          %v2472 = vpop.permute.xlu0 %2471
          %2475 = vset.pattern.permute.xlu0 8
          %2476 = vperm.xlu0 %2475, %v1619
          %v2477 = vpop.permute.xlu0 %2476
          %2480 = vset.pattern.permute.xlu0 8
          %2481 = vperm.xlu0 %2480, %v1620
          %v2482 = vpop.permute.xlu0 %2481
          %2485 = vset.pattern.permute.xlu0 8
          %2486 = vperm.xlu0 %2485, %v1621
          %v2487 = vpop.permute.xlu0 %2486
          %2490 = vset.pattern.permute.xlu0 8
          %2491 = vperm.xlu0 %2490, %v1622
          %v2492 = vpop.permute.xlu0 %2491
          %v2494 = vmul.f32 %v2337, %v1991
          %v2495 = vmul.f32 %v2342, %v1994
          %v2496 = vmul.f32 %v2347, %v1999
          %v2497 = vmul.f32 %v2352, %v2002
          %v2498 = vmul.f32 %v2357, %v2007
          %v2499 = vmul.f32 %v2362, %v2010
          %v2500 = vmul.f32 %v2367, %v2015
          %v2501 = vmul.f32 %v2372, %v2018
          %v2502 = vmul.f32 %v2377, %v2023
          %v2503 = vmul.f32 %v2382, %v2026
          %v2504 = vmul.f32 %v2387, %v2031
          %v2505 = vmul.f32 %v2392, %v2034
          %v2506 = vmul.f32 %v2397, %v2039
          %v2507 = vmul.f32 %v2402, %v2042
          %v2508 = vmul.f32 %v2407, %v2047
          %v2509 = vmul.f32 %v2412, %v2050
          %v2510 = vmul.f32 %v2417, %v2055
          %v2511 = vmul.f32 %v2422, %v2058
          %v2512 = vmul.f32 %v2427, %v2063
          %v2513 = vmul.f32 %v2432, %v2066
          %v2514 = vmul.f32 %v2437, %v2071
          %v2515 = vmul.f32 %v2442, %v2074
          %v2516 = vmul.f32 %v2447, %v2079
          %v2517 = vmul.f32 %v2452, %v2082
          %v2518 = vmul.f32 %v2457, %v2087
          %v2519 = vmul.f32 %v2462, %v2090
          %v2520 = vmul.f32 %v2467, %v2095
          %v2521 = vmul.f32 %v2472, %v2098
          %v2522 = vmul.f32 %v2477, %v2103
          %v2523 = vmul.f32 %v2482, %v2106
          %v2524 = vmul.f32 %v2487, %v2111
          %v2525 = vmul.f32 %v2492, %v2114
          %v2526 = vadd.f32 %v2208, %v2494
          %v2527 = vadd.f32 %v2211, %v2495
          %v2528 = vadd.f32 %v2216, %v2496
          %v2529 = vadd.f32 %v2219, %v2497
          %v2530 = vadd.f32 %v2224, %v2498
          %v2531 = vadd.f32 %v2227, %v2499
          %v2532 = vadd.f32 %v2232, %v2500
          %v2533 = vadd.f32 %v2235, %v2501
          %v2534 = vadd.f32 %v2240, %v2502
          %v2535 = vadd.f32 %v2243, %v2503
          %v2536 = vadd.f32 %v2248, %v2504
          %v2537 = vadd.f32 %v2251, %v2505
          %v2538 = vadd.f32 %v2256, %v2506
          %v2539 = vadd.f32 %v2259, %v2507
          %v2540 = vadd.f32 %v2264, %v2508
          %v2541 = vadd.f32 %v2267, %v2509
          %v2542 = vadd.f32 %v2272, %v2510
          %v2543 = vadd.f32 %v2275, %v2511
          %v2544 = vadd.f32 %v2280, %v2512
          %v2545 = vadd.f32 %v2283, %v2513
          %v2546 = vadd.f32 %v2288, %v2514
          %v2547 = vadd.f32 %v2291, %v2515
          %v2548 = vadd.f32 %v2296, %v2516
          %v2549 = vadd.f32 %v2299, %v2517
          %v2550 = vadd.f32 %v2304, %v2518
          %v2551 = vadd.f32 %v2307, %v2519
          %v2552 = vadd.f32 %v2312, %v2520
          %v2553 = vadd.f32 %v2315, %v2521
          %v2554 = vadd.f32 %v2320, %v2522
          %v2555 = vadd.f32 %v2323, %v2523
          %v2556 = vadd.f32 %v2328, %v2524
          %v2557 = vadd.f32 %v2331, %v2525
          %v2558 = vmax.f32 %v2526, 0.0
          %v2559 = vmax.f32 %v2527, 0.0
          %v2560 = vmax.f32 %v2528, 0.0
          %v2561 = vmax.f32 %v2529, 0.0
          %v2562 = vmax.f32 %v2530, 0.0
          %v2563 = vmax.f32 %v2531, 0.0
          %v2564 = vmax.f32 %v2532, 0.0
          %v2565 = vmax.f32 %v2533, 0.0
          %v2566 = vmax.f32 %v2534, 0.0
          %v2567 = vmax.f32 %v2535, 0.0
          %v2568 = vmax.f32 %v2536, 0.0
          %v2569 = vmax.f32 %v2537, 0.0
          %v2570 = vmax.f32 %v2538, 0.0
          %v2571 = vmax.f32 %v2539, 0.0
          %v2572 = vmax.f32 %v2540, 0.0
          %v2573 = vmax.f32 %v2541, 0.0
          %v2574 = vmax.f32 %v2542, 0.0
          %v2575 = vmax.f32 %v2543, 0.0
          %v2576 = vmax.f32 %v2544, 0.0
          %v2577 = vmax.f32 %v2545, 0.0
          %v2578 = vmax.f32 %v2546, 0.0
          %v2579 = vmax.f32 %v2547, 0.0
          %v2580 = vmax.f32 %v2548, 0.0
          %v2581 = vmax.f32 %v2549, 0.0
          %v2582 = vmax.f32 %v2550, 0.0
          %v2583 = vmax.f32 %v2551, 0.0
          %v2584 = vmax.f32 %v2552, 0.0
          %v2585 = vmax.f32 %v2553, 0.0
          %v2586 = vmax.f32 %v2554, 0.0
          %v2587 = vmax.f32 %v2555, 0.0
          %v2588 = vmax.f32 %v2556, 0.0
          %v2589 = vmax.f32 %v2557, 0.0
          %v2590 = vpack.c.bf16 %v2559, %v2558
          %v2591 = vpack.c.bf16 %v2561, %v2560
          %v2592 = vpack.c.bf16 %v2563, %v2562
          %v2593 = vpack.c.bf16 %v2565, %v2564
          %v2594 = vpack.c.bf16 %v2567, %v2566
          %v2595 = vpack.c.bf16 %v2569, %v2568
          %v2596 = vpack.c.bf16 %v2571, %v2570
          %v2597 = vpack.c.bf16 %v2573, %v2572
          %v2598 = vpack.c.bf16 %v2575, %v2574
          %v2599 = vpack.c.bf16 %v2577, %v2576
          %v2600 = vpack.c.bf16 %v2579, %v2578
          %v2601 = vpack.c.bf16 %v2581, %v2580
          %v2602 = vpack.c.bf16 %v2583, %v2582
          %v2603 = vpack.c.bf16 %v2585, %v2584
          %v2604 = vpack.c.bf16 %v2587, %v2586
          %v2605 = vpack.c.bf16 %v2589, %v2588
          %v2606 = vld [vmem:[#allocation7] sm:$0xf]
          %v2607 = vld [vmem:[#allocation7 + $0x4] sm:$0xf]
          %v2608 = vld [vmem:[#allocation7 + $0x8] sm:$0xf]
          %v2609 = vld [vmem:[#allocation7 + $0xc] sm:$0xf]
          %v2610 = vld [vmem:[#allocation8] sm:$0x1]
          %v2612 = vlaneseq
          %v2613 = vshrl.u32 %v2612, 7
          %v2614 = vsub.s32 0, %v2613
          %v2615 = vrot.slane %v2610, %v2614
          %v2621 = vunpack.c.l.b16 %v2606
          %v2622 = vunpack.c.l.b16 %v2607
          %v2623 = vunpack.c.l.b16 %v2608
          %v2624 = vunpack.c.l.b16 %v2609
          %v2625 = vpack.c.b16 %v2622, %v2621
          %v2626 = vpack.c.b16 %v2624, %v2623
          %vm2629 = vcmask 261120
          %v2631 = vsel %vm2629, %v2590, 0
          %v2634 = vsel %vm2629, %v2591, 0
          %v2637 = vsel %vm2629, %v2592, 0
          %v2640 = vsel %vm2629, %v2593, 0
          %v2643 = vsel %vm2629, %v2594, 0
          %v2646 = vsel %vm2629, %v2595, 0
          %v2649 = vsel %vm2629, %v2596, 0
          %v2652 = vsel %vm2629, %v2597, 0
          %v2655 = vsel %vm2629, %v2598, 0
          %v2658 = vsel %vm2629, %v2599, 0
          %v2661 = vsel %vm2629, %v2600, 0
          %v2664 = vsel %vm2629, %v2601, 0
          %v2667 = vsel %vm2629, %v2602, 0
          %v2670 = vsel %vm2629, %v2603, 0
          %v2673 = vsel %vm2629, %v2604, 0
          %v2676 = vsel %vm2629, %v2605, 0
          %2678 = vmatprep.subr.bf16.mxu0 0
          %2679 = vmatpush1.bf16.msra.mxu0 %v2625
          %2680 = vmatprep.subr.bf16.mxu0 0
          %2681 = vmatpush1.bf16.msra.mxu0 %v2626
          %2682 = vmatprep.subr.bf16.mxu0 0
          %2683 = vmatpush1.bf16.msra.mxu0 0
          %2684 = vmatprep.subr.bf16.mxu0 0
          %2685 = vmatpush1.bf16.msra.mxu0 0
          %2686 = vmatprep.subr.bf16.mxu0 0
          %2687 = vmatpush1.bf16.msra.mxu0 0
          %2688 = vmatprep.subr.bf16.mxu0 0
          %2689 = vmatpush1.bf16.msra.mxu0 0
          %2690 = vmatprep.subr.bf16.mxu0 0
          %2691 = vmatpush1.bf16.msra.mxu0 0
          %2692 = vmatprep.subr.bf16.mxu0 0
          %2693 = vmatpush1.bf16.msra.mxu0 0
          %2694 = vmatprep.subr.bf16.mxu0 0
          %2695 = vmatpush1.bf16.msra.mxu0 0
          %2696 = vmatprep.subr.bf16.mxu0 0
          %2697 = vmatpush1.bf16.msra.mxu0 0
          %2698 = vmatprep.subr.bf16.mxu0 0
          %2699 = vmatpush1.bf16.msra.mxu0 0
          %2700 = vmatprep.subr.bf16.mxu0 0
          %2701 = vmatpush1.bf16.msra.mxu0 0
          %2702 = vmatprep.subr.bf16.mxu0 0
          %2703 = vmatpush1.bf16.msra.mxu0 0
          %2704 = vmatprep.subr.bf16.mxu0 0
          %2705 = vmatpush1.bf16.msra.mxu0 0
          %2706 = vmatprep.subr.bf16.mxu0 0
          %2707 = vmatpush1.bf16.msra.mxu0 0
          %2708 = vmatprep.subr.bf16.mxu0 0
          %2709 = vmatpush1.bf16.msra.mxu0 0
          %2710 = vmatprep.mubr.bf16.mxu0 0
          %2711 = vmatmul.mubr.bf16.gmra.mrb[0].mxu0 %v2631
          %v2712 = vpop.f32.mrb[0].mxu0
          %v2713 = vadd.f32 %v2615, %v2712
          %v2714 = vpop.f32.mrb[0].mxu0
          %v2715 = vpop.f32.mrb[0].mxu0
          %v2716 = vadd.f32 %v2615, %v2715
          %v2717 = vpop.f32.mrb[0].mxu0
          %2718 = vmatprep.mubr.bf16.mxu0 0
          %2719 = vmatmul.mubr.bf16.gmra.mrb[0].mxu0 %v2634
          %v2720 = vpop.f32.mrb[0].mxu0
          %v2721 = vadd.f32 %v2615, %v2720
          %v2722 = vpop.f32.mrb[0].mxu0
          %v2723 = vpop.f32.mrb[0].mxu0
          %v2724 = vadd.f32 %v2615, %v2723
          %v2725 = vpop.f32.mrb[0].mxu0
          %2726 = vmatprep.mubr.bf16.mxu0 0
          %2727 = vmatmul.mubr.bf16.gmra.mrb[0].mxu0 %v2637
          %v2728 = vpop.f32.mrb[0].mxu0
          %v2729 = vadd.f32 %v2615, %v2728
          %v2730 = vpop.f32.mrb[0].mxu0
          %v2731 = vpop.f32.mrb[0].mxu0
          %v2732 = vadd.f32 %v2615, %v2731
          %v2733 = vpop.f32.mrb[0].mxu0
          %2734 = vmatprep.mubr.bf16.mxu0 0
          %2735 = vmatmul.mubr.bf16.gmra.mrb[0].mxu0 %v2640
          %v2736 = vpop.f32.mrb[0].mxu0
          %v2737 = vadd.f32 %v2615, %v2736
          %v2738 = vpop.f32.mrb[0].mxu0
          %v2739 = vpop.f32.mrb[0].mxu0
          %v2740 = vadd.f32 %v2615, %v2739
          %v2741 = vpop.f32.mrb[0].mxu0
          %2742 = vmatprep.mubr.bf16.mxu0 0
          %2743 = vmatmul.mubr.bf16.gmra.mrb[0].mxu0 %v2643
          %v2744 = vpop.f32.mrb[0].mxu0
          %v2745 = vadd.f32 %v2615, %v2744
          %v2746 = vpop.f32.mrb[0].mxu0
          %v2747 = vpop.f32.mrb[0].mxu0
          %v2748 = vadd.f32 %v2615, %v2747
          %v2749 = vpop.f32.mrb[0].mxu0
          %2750 = vmatprep.mubr.bf16.mxu0 0
          %2751 = vmatmul.mubr.bf16.gmra.mrb[0].mxu0 %v2646
          %v2752 = vpop.f32.mrb[0].mxu0
          %v2753 = vadd.f32 %v2615, %v2752
          %v2754 = vpop.f32.mrb[0].mxu0
          %v2755 = vpop.f32.mrb[0].mxu0
          %v2756 = vadd.f32 %v2615, %v2755
          %v2757 = vpop.f32.mrb[0].mxu0
          %2758 = vmatprep.mubr.bf16.mxu0 0
          %2759 = vmatmul.mubr.bf16.gmra.mrb[0].mxu0 %v2649
          %v2760 = vpop.f32.mrb[0].mxu0
          %v2761 = vadd.f32 %v2615, %v2760
          %v2762 = vpop.f32.mrb[0].mxu0
          %v2763 = vpop.f32.mrb[0].mxu0
          %v2764 = vadd.f32 %v2615, %v2763
          %v2765 = vpop.f32.mrb[0].mxu0
          %2766 = vmatprep.mubr.bf16.mxu0 0
          %2767 = vmatmul.mubr.bf16.gmra.mrb[0].mxu0 %v2652
          %v2768 = vpop.f32.mrb[0].mxu0
          %v2769 = vadd.f32 %v2615, %v2768
          %v2770 = vpop.f32.mrb[0].mxu0
          %v2771 = vpop.f32.mrb[0].mxu0
          %v2772 = vadd.f32 %v2615, %v2771
          %v2773 = vpop.f32.mrb[0].mxu0
          %2774 = vmatprep.mubr.bf16.mxu0 0
          %2775 = vmatmul.mubr.bf16.gmra.mrb[0].mxu0 %v2655
          %v2776 = vpop.f32.mrb[0].mxu0
          %v2777 = vadd.f32 %v2615, %v2776
          %v2778 = vpop.f32.mrb[0].mxu0
          %v2779 = vpop.f32.mrb[0].mxu0
          %v2780 = vadd.f32 %v2615, %v2779
          %v2781 = vpop.f32.mrb[0].mxu0
          %2782 = vmatprep.mubr.bf16.mxu0 0
          %2783 = vmatmul.mubr.bf16.gmra.mrb[0].mxu0 %v2658
          %v2784 = vpop.f32.mrb[0].mxu0
          %v2785 = vadd.f32 %v2615, %v2784
          %v2786 = vpop.f32.mrb[0].mxu0
          %v2787 = vpop.f32.mrb[0].mxu0
          %v2788 = vadd.f32 %v2615, %v2787
          %v2789 = vpop.f32.mrb[0].mxu0
          %2790 = vmatprep.mubr.bf16.mxu0 0
          %2791 = vmatmul.mubr.bf16.gmra.mrb[0].mxu0 %v2661
          %v2792 = vpop.f32.mrb[0].mxu0
          %v2793 = vadd.f32 %v2615, %v2792
          %v2794 = vpop.f32.mrb[0].mxu0
          %v2795 = vpop.f32.mrb[0].mxu0
          %v2796 = vadd.f32 %v2615, %v2795
          %v2797 = vpop.f32.mrb[0].mxu0
          %2798 = vmatprep.mubr.bf16.mxu0 0
          %2799 = vmatmul.mubr.bf16.gmra.mrb[0].mxu0 %v2664
          %v2800 = vpop.f32.mrb[0].mxu0
          %v2801 = vadd.f32 %v2615, %v2800
          %v2802 = vpop.f32.mrb[0].mxu0
          %v2803 = vpop.f32.mrb[0].mxu0
          %v2804 = vadd.f32 %v2615, %v2803
          %v2805 = vpop.f32.mrb[0].mxu0
          %2806 = vmatprep.mubr.bf16.mxu0 0
          %2807 = vmatmul.mubr.bf16.gmra.mrb[0].mxu0 %v2667
          %v2808 = vpop.f32.mrb[0].mxu0
          %v2809 = vadd.f32 %v2615, %v2808
          %v2810 = vpop.f32.mrb[0].mxu0
          %v2811 = vpop.f32.mrb[0].mxu0
          %v2812 = vadd.f32 %v2615, %v2811
          %v2813 = vpop.f32.mrb[0].mxu0
          %2814 = vmatprep.mubr.bf16.mxu0 0
          %2815 = vmatmul.mubr.bf16.gmra.mrb[0].mxu0 %v2670
          %v2816 = vpop.f32.mrb[0].mxu0
          %v2817 = vadd.f32 %v2615, %v2816
          %v2818 = vpop.f32.mrb[0].mxu0
          %v2819 = vpop.f32.mrb[0].mxu0
          %v2820 = vadd.f32 %v2615, %v2819
          %v2821 = vpop.f32.mrb[0].mxu0
          %2822 = vmatprep.mubr.bf16.mxu0 0
          %2823 = vmatmul.mubr.bf16.gmra.mrb[0].mxu0 %v2673
          %v2824 = vpop.f32.mrb[0].mxu0
          %v2825 = vadd.f32 %v2615, %v2824
          %v2826 = vpop.f32.mrb[0].mxu0
          %v2827 = vpop.f32.mrb[0].mxu0
          %v2828 = vadd.f32 %v2615, %v2827
          %v2829 = vpop.f32.mrb[0].mxu0
          %2830 = vmatprep.mubr.bf16.mxu0 0
          %2831 = vmatmul.mubr.bf16.gmra.mrb[0].mxu0 %v2676
          %v2832 = vpop.f32.mrb[0].mxu0
          %v2833 = vadd.f32 %v2615, %v2832
          %v2834 = vpop.f32.mrb[0].mxu0
          %v2835 = vpop.f32.mrb[0].mxu0
          %v2836 = vadd.f32 %v2615, %v2835
          %v2837 = vpop.f32.mrb[0].mxu0
          %2838 = vdwg.mxu0
          %2839 = vmax.xlane.f32.xlu0 %v2713
          %v2840 = vpop.xlane.xlu0 %2839
          %2841 = vmax.xlane.f32.xlu0 %v2716
          %v2842 = vpop.xlane.xlu0 %2841
          %2843 = vmax.xlane.f32.xlu0 %v2721
          %v2844 = vpop.xlane.xlu0 %2843
          %2845 = vmax.xlane.f32.xlu0 %v2724
          %v2846 = vpop.xlane.xlu0 %2845
          %2847 = vmax.xlane.f32.xlu0 %v2729
          %v2848 = vpop.xlane.xlu0 %2847
          %2849 = vmax.xlane.f32.xlu0 %v2732
          %v2850 = vpop.xlane.xlu0 %2849
          %2851 = vmax.xlane.f32.xlu0 %v2737
          %v2852 = vpop.xlane.xlu0 %2851
          %2853 = vmax.xlane.f32.xlu0 %v2740
          %v2854 = vpop.xlane.xlu0 %2853
          %2855 = vmax.xlane.f32.xlu0 %v2745
          %v2856 = vpop.xlane.xlu0 %2855
          %2857 = vmax.xlane.f32.xlu0 %v2748
          %v2858 = vpop.xlane.xlu0 %2857
          %2859 = vmax.xlane.f32.xlu0 %v2753
          %v2860 = vpop.xlane.xlu0 %2859
          %2861 = vmax.xlane.f32.xlu0 %v2756
          %v2862 = vpop.xlane.xlu0 %2861
          %2863 = vmax.xlane.f32.xlu0 %v2761
          %v2864 = vpop.xlane.xlu0 %2863
          %2865 = vmax.xlane.f32.xlu0 %v2764
          %v2866 = vpop.xlane.xlu0 %2865
          %2867 = vmax.xlane.f32.xlu0 %v2769
          %v2868 = vpop.xlane.xlu0 %2867
          %2869 = vmax.xlane.f32.xlu0 %v2772
          %v2870 = vpop.xlane.xlu0 %2869
          %2871 = vmax.xlane.f32.xlu0 %v2777
          %v2872 = vpop.xlane.xlu0 %2871
          %2873 = vmax.xlane.f32.xlu0 %v2780
          %v2874 = vpop.xlane.xlu0 %2873
          %2875 = vmax.xlane.f32.xlu0 %v2785
          %v2876 = vpop.xlane.xlu0 %2875
          %2877 = vmax.xlane.f32.xlu0 %v2788
          %v2878 = vpop.xlane.xlu0 %2877
          %2879 = vmax.xlane.f32.xlu0 %v2793
          %v2880 = vpop.xlane.xlu0 %2879
          %2881 = vmax.xlane.f32.xlu0 %v2796
          %v2882 = vpop.xlane.xlu0 %2881
          %2883 = vmax.xlane.f32.xlu0 %v2801
          %v2884 = vpop.xlane.xlu0 %2883
          %2885 = vmax.xlane.f32.xlu0 %v2804
          %v2886 = vpop.xlane.xlu0 %2885
          %2887 = vmax.xlane.f32.xlu0 %v2809
          %v2888 = vpop.xlane.xlu0 %2887
          %2889 = vmax.xlane.f32.xlu0 %v2812
          %v2890 = vpop.xlane.xlu0 %2889
          %2891 = vmax.xlane.f32.xlu0 %v2817
          %v2892 = vpop.xlane.xlu0 %2891
          %2893 = vmax.xlane.f32.xlu0 %v2820
          %v2894 = vpop.xlane.xlu0 %2893
          %2895 = vmax.xlane.f32.xlu0 %v2825
          %v2896 = vpop.xlane.xlu0 %2895
          %2897 = vmax.xlane.f32.xlu0 %v2828
          %v2898 = vpop.xlane.xlu0 %2897
          %2899 = vmax.xlane.f32.xlu0 %v2833
          %v2900 = vpop.xlane.xlu0 %2899
          %2901 = vmax.xlane.f32.xlu0 %v2836
          %v2902 = vpop.xlane.xlu0 %2901
          %v2903 = vsub.f32 %v2713, %v2840
          %v2904 = vsub.f32 %v2716, %v2842
          %v2905 = vsub.f32 %v2721, %v2844
          %v2906 = vsub.f32 %v2724, %v2846
          %v2907 = vsub.f32 %v2729, %v2848
          %v2908 = vsub.f32 %v2732, %v2850
          %v2909 = vsub.f32 %v2737, %v2852
          %v2910 = vsub.f32 %v2740, %v2854
          %v2911 = vsub.f32 %v2745, %v2856
          %v2912 = vsub.f32 %v2748, %v2858
          %v2913 = vsub.f32 %v2753, %v2860
          %v2914 = vsub.f32 %v2756, %v2862
          %v2915 = vsub.f32 %v2761, %v2864
          %v2916 = vsub.f32 %v2764, %v2866
          %v2917 = vsub.f32 %v2769, %v2868
          %v2918 = vsub.f32 %v2772, %v2870
          %v2919 = vsub.f32 %v2777, %v2872
          %v2920 = vsub.f32 %v2780, %v2874
          %v2921 = vsub.f32 %v2785, %v2876
          %v2922 = vsub.f32 %v2788, %v2878
          %v2923 = vsub.f32 %v2793, %v2880
          %v2924 = vsub.f32 %v2796, %v2882
          %v2925 = vsub.f32 %v2801, %v2884
          %v2926 = vsub.f32 %v2804, %v2886
          %v2927 = vsub.f32 %v2809, %v2888
          %v2928 = vsub.f32 %v2812, %v2890
          %v2929 = vsub.f32 %v2817, %v2892
          %v2930 = vsub.f32 %v2820, %v2894
          %v2931 = vsub.f32 %v2825, %v2896
          %v2932 = vsub.f32 %v2828, %v2898
          %v2933 = vsub.f32 %v2833, %v2900
          %v2934 = vsub.f32 %v2836, %v2902
          %v2935 = vmul.f32 %v2903, 1.442695
          %v2936 = vpow.pop %v2935
          %v2937 = vmul.f32 %v2904, 1.442695
          %v2938 = vpow.pop %v2937
          %v2939 = vmul.f32 %v2905, 1.442695
          %v2940 = vpow.pop %v2939
          %v2941 = vmul.f32 %v2906, 1.442695
          %v2942 = vpow.pop %v2941
          %v2943 = vmul.f32 %v2907, 1.442695
          %v2944 = vpow.pop %v2943
          %v2945 = vmul.f32 %v2908, 1.442695
          %v2946 = vpow.pop %v2945
          %v2947 = vmul.f32 %v2909, 1.442695
          %v2948 = vpow.pop %v2947
          %v2949 = vmul.f32 %v2910, 1.442695
          %v2950 = vpow.pop %v2949
          %v2951 = vmul.f32 %v2911, 1.442695
          %v2952 = vpow.pop %v2951
          %v2953 = vmul.f32 %v2912, 1.442695
          %v2954 = vpow.pop %v2953
          %v2955 = vmul.f32 %v2913, 1.442695
          %v2956 = vpow.pop %v2955
          %v2957 = vmul.f32 %v2914, 1.442695
          %v2958 = vpow.pop %v2957
          %v2959 = vmul.f32 %v2915, 1.442695
          %v2960 = vpow.pop %v2959
          %v2961 = vmul.f32 %v2916, 1.442695
          %v2962 = vpow.pop %v2961
          %v2963 = vmul.f32 %v2917, 1.442695
          %v2964 = vpow.pop %v2963
          %v2965 = vmul.f32 %v2918, 1.442695
          %v2966 = vpow.pop %v2965
          %v2967 = vmul.f32 %v2919, 1.442695
          %v2968 = vpow.pop %v2967
          %v2969 = vmul.f32 %v2920, 1.442695
          %v2970 = vpow.pop %v2969
          %v2971 = vmul.f32 %v2921, 1.442695
          %v2972 = vpow.pop %v2971
          %v2973 = vmul.f32 %v2922, 1.442695
          %v2974 = vpow.pop %v2973
          %v2975 = vmul.f32 %v2923, 1.442695
          %v2976 = vpow.pop %v2975
          %v2977 = vmul.f32 %v2924, 1.442695
          %v2978 = vpow.pop %v2977
          %v2979 = vmul.f32 %v2925, 1.442695
          %v2980 = vpow.pop %v2979
          %v2981 = vmul.f32 %v2926, 1.442695
          %v2982 = vpow.pop %v2981
          %v2983 = vmul.f32 %v2927, 1.442695
          %v2984 = vpow.pop %v2983
          %v2985 = vmul.f32 %v2928, 1.442695
          %v2986 = vpow.pop %v2985
          %v2987 = vmul.f32 %v2929, 1.442695
          %v2988 = vpow.pop %v2987
          %v2989 = vmul.f32 %v2930, 1.442695
          %v2990 = vpow.pop %v2989
          %v2991 = vmul.f32 %v2931, 1.442695
          %v2992 = vpow.pop %v2991
          %v2993 = vmul.f32 %v2932, 1.442695
          %v2994 = vpow.pop %v2993
          %v2995 = vmul.f32 %v2933, 1.442695
          %v2996 = vpow.pop %v2995
          %v2997 = vmul.f32 %v2934, 1.442695
          %v2998 = vpow.pop %v2997
          %2999 = vadd.xlane.f32.xlu0 %v2936
          %v3000 = vpop.xlane.xlu0 %2999
          %3001 = vadd.xlane.f32.xlu0 %v2938
          %v3002 = vpop.xlane.xlu0 %3001
          %3003 = vadd.xlane.f32.xlu0 %v2940
          %v3004 = vpop.xlane.xlu0 %3003
          %3005 = vadd.xlane.f32.xlu0 %v2942
          %v3006 = vpop.xlane.xlu0 %3005
          %3007 = vadd.xlane.f32.xlu0 %v2944
          %v3008 = vpop.xlane.xlu0 %3007
          %3009 = vadd.xlane.f32.xlu0 %v2946
          %v3010 = vpop.xlane.xlu0 %3009
          %3011 = vadd.xlane.f32.xlu0 %v2948
          %v3012 = vpop.xlane.xlu0 %3011
          %3013 = vadd.xlane.f32.xlu0 %v2950
          %v3014 = vpop.xlane.xlu0 %3013
          %3015 = vadd.xlane.f32.xlu0 %v2952
          %v3016 = vpop.xlane.xlu0 %3015
          %3017 = vadd.xlane.f32.xlu0 %v2954
          %v3018 = vpop.xlane.xlu0 %3017
          %3019 = vadd.xlane.f32.xlu0 %v2956
          %v3020 = vpop.xlane.xlu0 %3019
          %3021 = vadd.xlane.f32.xlu0 %v2958
          %v3022 = vpop.xlane.xlu0 %3021
          %3023 = vadd.xlane.f32.xlu0 %v2960
          %v3024 = vpop.xlane.xlu0 %3023
          %3025 = vadd.xlane.f32.xlu0 %v2962
          %v3026 = vpop.xlane.xlu0 %3025
          %3027 = vadd.xlane.f32.xlu0 %v2964
          %v3028 = vpop.xlane.xlu0 %3027
          %3029 = vadd.xlane.f32.xlu0 %v2966
          %v3030 = vpop.xlane.xlu0 %3029
          %3031 = vadd.xlane.f32.xlu0 %v2968
          %v3032 = vpop.xlane.xlu0 %3031
          %3033 = vadd.xlane.f32.xlu0 %v2970
          %v3034 = vpop.xlane.xlu0 %3033
          %3035 = vadd.xlane.f32.xlu0 %v2972
          %v3036 = vpop.xlane.xlu0 %3035
          %3037 = vadd.xlane.f32.xlu0 %v2974
          %v3038 = vpop.xlane.xlu0 %3037
          %3039 = vadd.xlane.f32.xlu0 %v2976
          %v3040 = vpop.xlane.xlu0 %3039
          %3041 = vadd.xlane.f32.xlu0 %v2978
          %v3042 = vpop.xlane.xlu0 %3041
          %3043 = vadd.xlane.f32.xlu0 %v2980
          %v3044 = vpop.xlane.xlu0 %3043
          %3045 = vadd.xlane.f32.xlu0 %v2982
          %v3046 = vpop.xlane.xlu0 %3045
          %3047 = vadd.xlane.f32.xlu0 %v2984
          %v3048 = vpop.xlane.xlu0 %3047
          %3049 = vadd.xlane.f32.xlu0 %v2986
          %v3050 = vpop.xlane.xlu0 %3049
          %3051 = vadd.xlane.f32.xlu0 %v2988
          %v3052 = vpop.xlane.xlu0 %3051
          %3053 = vadd.xlane.f32.xlu0 %v2990
          %v3054 = vpop.xlane.xlu0 %3053
          %3055 = vadd.xlane.f32.xlu0 %v2992
          %v3056 = vpop.xlane.xlu0 %3055
          %3057 = vadd.xlane.f32.xlu0 %v2994
          %v3058 = vpop.xlane.xlu0 %3057
          %3059 = vadd.xlane.f32.xlu0 %v2996
          %v3060 = vpop.xlane.xlu0 %3059
          %3061 = vadd.xlane.f32.xlu0 %v2998
          %v3062 = vpop.xlane.xlu0 %3061
          %v3063 = vrcp.pop %v3000
          %v3064 = vrcp.pop %v3002
          %v3065 = vrcp.pop %v3004
          %v3066 = vrcp.pop %v3006
          %v3067 = vrcp.pop %v3008
          %v3068 = vrcp.pop %v3010
          %v3069 = vrcp.pop %v3012
          %v3070 = vrcp.pop %v3014
          %v3071 = vrcp.pop %v3016
          %v3072 = vrcp.pop %v3018
          %v3073 = vrcp.pop %v3020
          %v3074 = vrcp.pop %v3022
          %v3075 = vrcp.pop %v3024
          %v3076 = vrcp.pop %v3026
          %v3077 = vrcp.pop %v3028
          %v3078 = vrcp.pop %v3030
          %v3079 = vrcp.pop %v3032
          %v3080 = vrcp.pop %v3034
          %v3081 = vrcp.pop %v3036
          %v3082 = vrcp.pop %v3038
          %v3083 = vrcp.pop %v3040
          %v3084 = vrcp.pop %v3042
          %v3085 = vrcp.pop %v3044
          %v3086 = vrcp.pop %v3046
          %v3087 = vrcp.pop %v3048
          %v3088 = vrcp.pop %v3050
          %v3089 = vrcp.pop %v3052
          %v3090 = vrcp.pop %v3054
          %v3091 = vrcp.pop %v3056
          %v3092 = vrcp.pop %v3058
          %v3093 = vrcp.pop %v3060
          %v3094 = vrcp.pop %v3062
          %v3095 = vmul.f32 %v2936, %v3063
          %v3096 = vmul.f32 %v2938, %v3064
          %v3097 = vmul.f32 %v2940, %v3065
          %v3098 = vmul.f32 %v2942, %v3066
          %v3099 = vmul.f32 %v2944, %v3067
          %v3100 = vmul.f32 %v2946, %v3068
          %v3101 = vmul.f32 %v2948, %v3069
          %v3102 = vmul.f32 %v2950, %v3070
          %v3103 = vmul.f32 %v2952, %v3071
          %v3104 = vmul.f32 %v2954, %v3072
          %v3105 = vmul.f32 %v2956, %v3073
          %v3106 = vmul.f32 %v2958, %v3074
          %v3107 = vmul.f32 %v2960, %v3075
          %v3108 = vmul.f32 %v2962, %v3076
          %v3109 = vmul.f32 %v2964, %v3077
          %v3110 = vmul.f32 %v2966, %v3078
          %v3111 = vmul.f32 %v2968, %v3079
          %v3112 = vmul.f32 %v2970, %v3080
          %v3113 = vmul.f32 %v2972, %v3081
          %v3114 = vmul.f32 %v2974, %v3082
          %v3115 = vmul.f32 %v2976, %v3083
          %v3116 = vmul.f32 %v2978, %v3084
          %v3117 = vmul.f32 %v2980, %v3085
          %v3118 = vmul.f32 %v2982, %v3086
          %v3119 = vmul.f32 %v2984, %v3087
          %v3120 = vmul.f32 %v2986, %v3088
          %v3121 = vmul.f32 %v2988, %v3089
          %v3122 = vmul.f32 %v2990, %v3090
          %v3123 = vmul.f32 %v2992, %v3091
          %v3124 = vmul.f32 %v2994, %v3092
          %v3125 = vmul.f32 %v2996, %v3093
          %v3126 = vmul.f32 %v2998, %v3094
          %v3127 = vld [vmem:[%s354] sm:$0xff]
          %v3128 = vpack.c.bf16 %v3096, %v3095
          %v3129 = vpack.c.bf16 %v3098, %v3097
          %v3130 = vpack.c.bf16 %v3100, %v3099
          %v3131 = vpack.c.bf16 %v3102, %v3101
          %v3132 = vpack.c.bf16 %v3104, %v3103
          %v3133 = vpack.c.bf16 %v3106, %v3105
          %v3134 = vpack.c.bf16 %v3108, %v3107
          %v3135 = vpack.c.bf16 %v3110, %v3109
          %v3136 = vpack.c.bf16 %v3112, %v3111
          %v3137 = vpack.c.bf16 %v3114, %v3113
          %v3138 = vpack.c.bf16 %v3116, %v3115
          %v3139 = vpack.c.bf16 %v3118, %v3117
          %v3140 = vpack.c.bf16 %v3120, %v3119
          %v3141 = vpack.c.bf16 %v3122, %v3121
          %v3142 = vpack.c.bf16 %v3124, %v3123
          %v3143 = vpack.c.bf16 %v3126, %v3125
          %v3145 = vunpack.c.l.b16 %v3127
          %v3146 = vunpack.c.h.b16 %v3127
          %v3147 = vpack.c.b16 %v3145, %v3145
          %v3148 = vpack.c.b16 %v3146, %v3146
          %3151 = vmatprep.subr.bf16.mxu0 0
          %3152 = vmatpush1.bf16.msra.mxu0 %v3128
          %3153 = vmatprep.subr.bf16.mxu0 0
          %3154 = vmatpush1.bf16.msra.mxu0 %v3129
          %3155 = vmatprep.subr.bf16.mxu0 0
          %3156 = vmatpush1.bf16.msra.mxu0 %v3130
          %3157 = vmatprep.subr.bf16.mxu0 0
          %3158 = vmatpush1.bf16.msra.mxu0 %v3131
          %3159 = vmatprep.subr.bf16.mxu0 0
          %3160 = vmatpush1.bf16.msra.mxu0 %v3132
          %3161 = vmatprep.subr.bf16.mxu0 0
          %3162 = vmatpush1.bf16.msra.mxu0 %v3133
          %3163 = vmatprep.subr.bf16.mxu0 0
          %3164 = vmatpush1.bf16.msra.mxu0 %v3134
          %3165 = vmatprep.subr.bf16.mxu0 0
          %3166 = vmatpush1.bf16.msra.mxu0 %v3135
          %3167 = vmatprep.subr.bf16.mxu0 0
          %3168 = vmatpush1.bf16.msra.mxu0 %v3136
          %3169 = vmatprep.subr.bf16.mxu0 0
          %3170 = vmatpush1.bf16.msra.mxu0 %v3137
          %3171 = vmatprep.subr.bf16.mxu0 0
          %3172 = vmatpush1.bf16.msra.mxu0 %v3138
          %3173 = vmatprep.subr.bf16.mxu0 0
          %3174 = vmatpush1.bf16.msra.mxu0 %v3139
          %3175 = vmatprep.subr.bf16.mxu0 0
          %3176 = vmatpush1.bf16.msra.mxu0 %v3140
          %3177 = vmatprep.subr.bf16.mxu0 0
          %3178 = vmatpush1.bf16.msra.mxu0 %v3141
          %3179 = vmatprep.subr.bf16.mxu0 0
          %3180 = vmatpush1.bf16.msra.mxu0 %v3142
          %3181 = vmatprep.subr.bf16.mxu0 0
          %3182 = vmatpush1.bf16.msra.mxu0 %v3143
          %3183 = vmatprep.mubr.bf16.mxu0 %v3148
          %3184 = vmatmul.mubr.bf16.gmra.mrb[0].mxu0 %v3147
          %v3185 = vpop.f32.mrb[0].mxu0
          %v3186 = vadd.f32 0.0, %v3185
          %v3187 = vpop.f32.mrb[0].mxu0
          %v3188 = vpop.f32.mrb[0].mxu0
          %v3189 = vpop.f32.mrb[0].mxu0
          %3190 = vdwg.mxu0
          %3191 = vst [vmem:[%s425] sm:$0xff] %v3186
        $region72: #{fpnn_v4_forward.1} parent=47 // pred_fallthru
          _
        %p3192 = scmp.lt.s32.totalorder %s29, 3
        %s3193 = scalar_select %p3192, %s29, 3
        %s3194 = smul.addr %s3193, 8
        %s3195 = scalar_lea.vmem %s7, %s3194
        // Predicated region
        $region73: #{fpnn_v4_forward.1} parent=47 // pred_check
          %p3196 = pneg %p224
        $region74: #{fpnn_v4_forward.1} parent=47 // pred_check_branch
          %3198 = sbr.rel (%p3196) target = $region76
        $region75: #{fpnn_v4_forward.1} parent=47 // pred_region
          _
        $region76: #{fpnn_v4_forward.1} parent=47 // pred_fallthru
          _
      $region48: #{fpnn_v4_forward.1} parent=5 // pred_fallthru
        _
      %p3199 = scmp.le.s32.totalorder 2, %s20
      // Predicated region
      $region77: #{fpnn_v4_forward.1} parent=5 // pred_check
        %p3200 = pneg %p3199
      $region78: #{fpnn_v4_forward.1} parent=5 // pred_check_branch
        %3202 = sbr.rel (%p3200) target = $region80
      $region79: #{fpnn_v4_forward.1} parent=5 // pred_region
        %s3203 = ssub.s32 %s20, 2
        // Predicated region
        $region81: #{fpnn_v4_forward.1} parent=79 // pred_check
          %p3204 = pneg %p230
        $region82: #{fpnn_v4_forward.1} parent=79 // pred_check_branch
          %3206 = sbr.rel (%p3204) target = $region84
        $region83: #{fpnn_v4_forward.1} parent=79 // pred_region
          %p3207 = scmp.lt.s32.totalorder %s31, 3
          %s3208 = scalar_select %p3207, %s31, 3
          %s3209 = smul.addr %s3208, 8
          %s3210 = scalar_lea.vmem %s7, %s3209
        $region84: #{fpnn_v4_forward.1} parent=79 // pred_fallthru
          _
      $region80: #{fpnn_v4_forward.1} parent=5 // pred_fallthru
        _
    $region6: #{fpnn_v4_forward.1} parent=1 // loop_footer
      %s24 = sadd.s32 1, %s20
    $region7: #{fpnn_v4_forward.1} parent=1 // loop_footer_branch
      %19 = sbr.rel target = $region3
    $region8: #{fpnn_v4_forward.1} parent=1 // loop_exit
      _
    %3211 = vsyncpa [#allocation4], 1
    %s3212 = scalar_lea.sflag [#allocation4], 1
    %3213 = vsyncpa %s3212, 1
    %3214 = vsyncpa [#allocation6], 1
    %s3215 = scalar_lea.sflag [#allocation6], 1
    %3216 = vsyncpa %s3215, 1
    %3217 = vsyncpa [#allocation9], 1

</llo_original>
